<compile_context>
chip_gen: v7x
topology: tpu7x:2x2x1
jax: 0.10.0
libtpu: 0.0.40
codegen_flags: <defaults>
</compile_context>

<pallas_src>
import jax
import jax.numpy as jnp
from jax.experimental import pallas as pl
from jax.experimental.pallas import tpu as pltpu

BN_EPS = 1e-12          # the reference module builds every BatchNorm1d with eps=1e-12
NEG_INF = -1e30
LEAKY_SLOPE = 0.2       # GATConv default negative_slope
RELATIONS = ("mention", "reply", "quote")
POS_TABLE_ROWS = 16     # Embedding(11, 64) table padded to 16 rows (sublane-friendly)
BLK = 128               # lane-aligned column block width for the packed projections
OUT_LANES = 128         # lane-dense output width (wrapper slices back to H)


# ----------------------------- fused Pallas kernel ----------------------------- #

def _hetero_gnn_kernel(
    x_ref,          # [N, H]            node features (per-graph block)
    w_rel_ref,      # [L, H, 4*BLK]     per relation r: block of 128 cols [W_r^T | v_dst_r | 0],
                    #                   4th block holds the 3 v_src columns (lane-aligned)
    bias_rel_ref,   # [L, 3, H]
    adj_rel_ref,    # [3, N, N]         adj[r, i, j] = 1 iff edge j -> i (self-loops included)
    relbn_ref,      # [L, 2, H]         folded BN: row 0 = scale, row 1 = shift
    pid_ref,        # [N, 1] int32      period ids (values >= 16 give a zero embedding)
    postab_ref,     # [16, H]           padded position-embedding table
    posbn_ref,      # [2, H]
    w_self_ref,     # [L, H, 2*BLK]     block0 = [W^T | v_dst | 0], block1 col 0 = v_src
    bias_self_ref,  # [L, 1, H]
    adj_self_ref,   # [N, N]
    selfbn_ref,     # [L, 2, H]
    o_ref,          # [N, 128]          lane-dense output (first H lanes meaningful)
):
    n, h = x_ref.shape
    num_layers = w_rel_ref.shape[0]
    num_rel = adj_rel_ref.shape[0]
    pt = postab_ref.shape[0]

    def gat_aggregate(hid, e_dst, e_src_row, adj, bias):
        # hid [N,H], e_dst [N,1], e_src_row [1,N], adj [N,N] (0/1 mask), bias [1,H]
        logits = e_dst + e_src_row                                      # [N, N]
        logits = jnp.where(logits > 0.0, logits, LEAKY_SLOPE * logits)  # LeakyReLU(0.2)
        m = jnp.max(jnp.where(adj > 0.0, logits, NEG_INF),
                    axis=-1, keepdims=True)                             # masked row max (finite: self-loops)
        # exact masking via the 0/1 mask multiply; min() guards exp-overflow at masked positions
        p = jnp.exp(jnp.minimum(logits - m, 0.0)) * adj
        denom = jnp.maximum(jnp.sum(p, axis=-1, keepdims=True), 1e-30)
        alpha = p * pl.reciprocal(denom, approx=True)                   # EUP slot (free-ish)
        out = jnp.dot(alpha, hid, preferred_element_type=jnp.float32) + bias
        return jnp.maximum(out, 0.0)                                    # fused self.act (ReLU)

    x = x_ref[...]
    adjs = [adj_rel_ref[r] for r in range(num_rel)]     # load each [N,N] mask once

    # ---- phase 1: hetero relation GAT layers -------------------------------- #
    # TODO(synk): convert to lax.fori_loop if num_layers grows past ~3 (vreg live ranges).
    for l in range(num_layers):
        bias = bias_rel_ref[l]                # [3, H]
        bn = relbn_ref[l]                     # [2, H]
        # one wide, lane-dense projection: per-relation h, v_dst score and v_src score columns
        h_full = jnp.dot(x, w_rel_ref[l], preferred_element_type=jnp.float32)    # [N, 4*BLK]
        # all e_src values -> rows via one tiny aligned-slab transpose (no x relayout)
        e_src_rows = jnp.transpose(h_full[:, num_rel * BLK:(num_rel + 1) * BLK])  # [BLK, N]
        s = jnp.zeros_like(x)
        for r in range(num_rel):
            base = r * BLK                                               # 128-aligned block start
            s = s + gat_aggregate(h_full[:, base:base + h],              # [N, H]
                                  h_full[:, base + h:base + h + 1],      # [N, 1]  (e_dst)
                                  e_src_rows[r:r + 1, :],                # [1, N]  (e_src)
                                  adjs[r], bias[r:r + 1, :])
        # residual + eval-mode BatchNorm (folded scale/shift). Reference quirk: the PyTorch
        # module uses norms['quote'][l] for every layer; these packed norms represent that.
        x = (x + s) * bn[0:1, :] + bn[1:2, :]

    # ---- phase 2: position embedding (in-kernel one-hot gather) + posnorm ---- #
    pid = pid_ref[...]                                                  # [N, 1] int32
    cols = jax.lax.broadcasted_iota(jnp.int32, (n, pt), 1)              # [N, 16]
    onehot = (cols == pid).astype(jnp.float32)
    pos = jnp.dot(onehot, postab_ref[...], preferred_element_type=jnp.float32)   # [N, H]
    posbn = posbn_ref[...]
    x = (x + pos) * posbn[0:1, :] + posbn[1:2, :]

    # ---- phase 3: self-attention GAT layers over undirected 'is' edges ------- #
    adj_self = adj_self_ref[...]
    for l in range(num_layers):
        bn = selfbn_ref[l]                    # [2, H]
        h_full = jnp.dot(x, w_self_ref[l], preferred_element_type=jnp.float32)   # [N, 2*BLK]
        e_src_row = jnp.transpose(h_full[:, BLK:2 * BLK])[0:1, :]                 # [1, N]
        g = gat_aggregate(h_full[:, :h], h_full[:, h:h + 1], e_src_row,
                          adj_self, bias_self_ref[l])
        x = (x + g) * bn[0:1, :] + bn[1:2, :]

    # lane-dense [N, 128] store (unmasked vst); wrapper slices back to [:, :H]
    o_ref[...] = jnp.concatenate(
        [x, jnp.zeros((n, o_ref.shape[1] - h), jnp.float32)], axis=-1)


# ----------------------------- wrapper ----------------------------------------- #

def _const_spec(shape):
    nd = len(shape)
    return pl.BlockSpec(shape, lambda b, _nd=nd: (0,) * _nd)     # resident across grid steps


def _per_graph_spec(shape_rest):
    nd = len(shape_rest)
    return pl.BlockSpec((None,) + tuple(shape_rest),
                        lambda b, _nd=nd: (b,) + (0,) * _nd)     # leading batch dim squeezed


def hetero_dynamic_gnn_forward(packed, last_x, adj_rel, adj_is, period_id):
    """Single-launch fused forward for B independent graphs (grid over the batch).

    Returns (x_out [B,N,H], None) like the PyTorch module (per graph)."""
    b, n, h = last_x.shape
    # NOTE: period_id values >= POS_TABLE_ROWS silently map to a zero embedding (valid range 0..10).
    pid = period_id.astype(jnp.int32).reshape(b, n, 1)

    operands = (
        last_x, packed["w_rel"], packed["bias_rel"], adj_rel, packed["rel_bn"],
        pid, packed["pos_table"], packed["pos_bn"],
        packed["w_self"], packed["bias_self"], adj_is, packed["self_bn"],
    )
    in_specs = [
        _per_graph_spec((n, h)),                      # x
        _const_spec(packed["w_rel"].shape),           # w_rel
        _const_spec(packed["bias_rel"].shape),        # bias_rel
        _per_graph_spec((len(RELATIONS), n, n)),      # adj_rel
        _const_spec(packed["rel_bn"].shape),          # rel_bn
        _per_graph_spec((n, 1)),                      # pid
        _const_spec(packed["pos_table"].shape),       # pos_table
        _const_spec(packed["pos_bn"].shape),          # pos_bn
        _const_spec(packed["w_self"].shape),          # w_self
        _const_spec(packed["bias_self"].shape),       # bias_self
        _per_graph_spec((n, n)),                      # adj_is
        _const_spec(packed["self_bn"].shape),         # self_bn
    ]
    out = pl.pallas_call(
        _hetero_gnn_kernel,
        out_shape=jax.ShapeDtypeStruct((b, n, OUT_LANES), jnp.float32),
        grid_spec=pltpu.PrefetchScalarGridSpec(
            num_scalar_prefetch=0,
            grid=(b,),
            in_specs=in_specs,
            out_specs=_per_graph_spec((n, OUT_LANES)),
        ),
        compiler_params=pltpu.CompilerParams(
            dimension_semantics=("parallel",),          # graphs are independent: shard across TCs
            vmem_limit_bytes=32 * 1024 * 1024,
        ),
    )(*operands)
    return out[..., :h], None


# ----------------------------- parameter init / packing ------------------------ #

def _init_gat(key, h):
    k1, k2, k3, k4 = jax.random.split(key, 4)
    scale = 1.0 / jnp.sqrt(jnp.float32(h))
    return {
        "w": scale * jax.random.normal(k1, (h, h), jnp.float32),        # PyG Linear: [out, in]
        "att_src": scale * jax.random.normal(k2, (1, h), jnp.float32),
        "att_dst": scale * jax.random.normal(k3, (1, h), jnp.float32),
        "bias": 0.01 * jax.random.normal(k4, (1, h), jnp.float32),
    }


def _init_bn(key, h):
    k1, k2 = jax.random.split(key)
    return {
        "gamma": 1.0 + 0.05 * jax.random.normal(k1, (1, h), jnp.float32),
        "beta": 0.05 * jax.random.normal(k2, (1, h), jnp.float32),
        "mean": jnp.zeros((1, h), jnp.float32),   # running stats of a fresh BatchNorm1d
        "var": jnp.ones((1, h), jnp.float32),
    }


def init_params(key, hidden, num_layers):
    keys = iter(jax.random.split(key, 64))
    return {
        "convs": {r: [_init_gat(next(keys), hidden) for _ in range(num_layers)]
                  for r in RELATIONS},
        # the reference indexes self.norms[relation][i] with relation == 'quote' after the loop
        "norms": [_init_bn(next(keys), hidden) for _ in range(num_layers)],
        "pos_emb": jax.random.normal(next(keys), (11, 64), jnp.float32),
        "posnorm": _init_bn(next(keys), hidden),
        "self_attn": [_init_gat(next(keys), hidden) for _ in range(num_layers)],
        "selfnorms": [_init_bn(next(keys), hidden) for _ in range(num_layers)],
    }


def _fold_bn(bn):
    scale = bn["gamma"] * jax.lax.rsqrt(bn["var"] + BN_EPS)
    shift = bn["beta"] - bn["mean"] * scale
    return jnp.concatenate([scale, shift], axis=0)      # [2, H]


def pack_params(params, num_layers):
    """Stack / fold module parameters into the kernel's lane-aligned fused layouts."""
    h = params["posnorm"]["gamma"].shape[1]
    nrel = len(RELATIONS)

    def rel_block(wt, vdst):
        # 128-lane-aligned block: [W^T (h cols) | v_dst (1 col) | zero pad]
        return jnp.concatenate(
            [wt, vdst[:, None], jnp.zeros((h, BLK - h - 1), jnp.float32)], axis=1)

    w_rel, bias_rel = [], []
    for i in range(num_layers):
        blocks, vsrc_cols, biases = [], [], []
        for r in RELATIONS:
            p = params["convs"][r][i]
            wt = p["w"].T                                      # [in, out]
            blocks.append(rel_block(wt, wt @ p["att_dst"][0]))
            vsrc_cols.append((wt @ p["att_src"][0])[:, None])  # x @ v_src == <h, att_src>
            biases.append(p["bias"])
        vsrc_block = jnp.concatenate(
            vsrc_cols + [jnp.zeros((h, BLK - nrel), jnp.float32)], axis=1)   # [H, 128]
        w_rel.append(jnp.concatenate(blocks + [vsrc_block], axis=1))         # [H, 4*128]
        bias_rel.append(jnp.concatenate(biases, axis=0))                     # [3, H]

    w_self, bias_self = [], []
    for i in range(num_layers):
        p = params["self_attn"][i]
        wt = p["w"].T
        block0 = rel_block(wt, wt @ p["att_dst"][0])                          # [H, 128]
        block1 = jnp.concatenate(
            [(wt @ p["att_src"][0])[:, None], jnp.zeros((h, BLK - 1), jnp.float32)], axis=1)
        w_self.append(jnp.concatenate([block0, block1], axis=1))              # [H, 2*128]
        bias_self.append(p["bias"])

    pos_pad = POS_TABLE_ROWS - params["pos_emb"].shape[0]
    return {
        "w_rel": jnp.stack(w_rel),                                               # [L, H, 4*128]
        "bias_rel": jnp.stack(bias_rel),                                         # [L, 3, H]
        "rel_bn": jnp.stack([_fold_bn(bn) for bn in params["norms"]]),           # [L, 2, H]
        "pos_table": jnp.pad(params["pos_emb"], ((0, pos_pad), (0, 0))),         # [16, H]
        "pos_bn": _fold_bn(params["posnorm"]),                                   # [2, H]
        "w_self": jnp.stack(w_self),                                             # [L, H, 2*128]
        "bias_self": jnp.stack(bias_self),                                       # [L, 1, H]
        "self_bn": jnp.stack([_fold_bn(bn) for bn in params["selfnorms"]]),      # [L, 2, H]
    }


# ----------------------------- pure-JAX reference (for the self-check) --------- #

def reference_forward(params, last_x, adj_rel, adj_is, period_id, num_layers):
    def gat_relu(x, p, adj):
        hid = x @ p["w"].T
        e_dst = jnp.sum(hid * p["att_dst"], axis=-1, keepdims=True)
        e_src = jnp.sum(hid * p["att_src"], axis=-1, keepdims=True)
        logits = e_dst + e_src.T
        logits = jnp.where(logits > 0, logits, LEAKY_SLOPE * logits)
        alpha = jax.nn.softmax(jnp.where(adj > 0, logits, -jnp.inf), axis=-1)
        return jax.nn.relu(alpha @ hid + p["bias"])

    def bn(y, b):
        return (y - b["mean"]) * jax.lax.rsqrt(b["var"] + BN_EPS) * b["gamma"] + b["beta"]

    x = last_x
    for i in range(num_layers):
        s = jnp.zeros_like(x)
        for ri, r in enumerate(RELATIONS):
            s = s + gat_relu(x, params["convs"][r][i], adj_rel[ri])
        x = bn(x + s, params["norms"][i])
    x = bn(x + params["pos_emb"][period_id], params["posnorm"])
    for i in range(num_layers):
        x = bn(x + gat_relu(x, params["self_attn"][i], adj_is), params["selfnorms"][i])
    return x


# ----------------------------- demo --------------------------------------------- #

if __name__ == "__main__":
    B = 8           # number of independent graphs / time-steps (grid axis)
    N = 16          # nodes per graph
    H = 64          # gnn_hidden_channel (=64 to match Embedding(11, 64))
    L = 2           # gnn_num_layer

    root = jax.random.PRNGKey(0)
    k_params, k_x, k_pid, k_adj = jax.random.split(root, 4)

    params = init_params(k_params, H, L)
    packed = pack_params(params, L)
    last_x = jax.random.normal(k_x, (B, N, H), jnp.float32)
    period_id = jax.random.randint(k_pid, (B, N), 0, 11)

    # dense adjacency masks: A[i, j] = 1 iff edge j -> i ; GATConv adds self-loops
    adj_keys = jax.random.split(k_adj, 2)
    eye = jnp.eye(N, dtype=jnp.float32)
    a_rel = jax.random.bernoulli(adj_keys[0], 0.3, (B, len(RELATIONS), N, N)).astype(jnp.float32)
    adj_rel = jnp.minimum(a_rel + eye, 1.0)                                   # [B, 3, N, N]
    a_is = jax.random.bernoulli(adj_keys[1], 0.3, (B, N, N)).astype(jnp.float32)
    adj_is = jnp.minimum(jnp.maximum(a_is, jnp.swapaxes(a_is, -1, -2)) + eye, 1.0)  # undirected

    fwd = jax.jit(hetero_dynamic_gnn_forward)
    out, attn = fwd(packed, last_x, adj_rel, adj_is, period_id)
    out = jax.block_until_ready(out)

    assert out.shape == (B, N, H) and out.dtype == jnp.float32
    assert attn is None
    assert bool(jnp.all(jnp.isfinite(out)))

    # cross-check the fused kernel against an unfused pure-JAX reference
    # (tolerance covers pl.reciprocal(approx=True) and BN/att weight folding)
    ref = jax.vmap(lambda x, ar, ai, pid: reference_forward(params, x, ar, ai, pid, L))(
        last_x, adj_rel, adj_is, period_id)
    err = float(jnp.max(jnp.abs(out - ref)) / (1.0 + jnp.max(jnp.abs(ref))))
    assert err < 3e-2, f"mismatch vs reference: {err}"

    print("KERNEL_OK")
</pallas_src>

<mosaic_0001>
module attributes {stable_mosaic.version = 11 : i64} {
  func.func @_hetero_gnn_kernel(%arg0: i32, %arg1: memref<1x16x64xf32, #tpu.memory_space<vmem>>, %arg2: memref<2x64x512xf32, #tpu.memory_space<vmem>>, %arg3: memref<2x3x64xf32, #tpu.memory_space<vmem>>, %arg4: memref<1x3x16x16xf32, #tpu.memory_space<vmem>>, %arg5: memref<2x2x64xf32, #tpu.memory_space<vmem>>, %arg6: memref<1x16x1xi32, #tpu.memory_space<vmem>>, %arg7: memref<16x64xf32, #tpu.memory_space<vmem>>, %arg8: memref<2x64xf32, #tpu.memory_space<vmem>>, %arg9: memref<2x64x256xf32, #tpu.memory_space<vmem>>, %arg10: memref<2x1x64xf32, #tpu.memory_space<vmem>>, %arg11: memref<1x16x16xf32, #tpu.memory_space<vmem>>, %arg12: memref<2x2x64xf32, #tpu.memory_space<vmem>>, %arg13: memref<1x16x128xf32, #tpu.memory_space<vmem>>) attributes {dimension_semantics = [#tpu.dimension_semantics<parallel>], iteration_bounds = array<i64: 8>, scalar_prefetch = 0 : i64, scratch_operands = 0 : i64, tpu.core_type = #tpu.core_type<tc>, window_params = [{transform_indices = @transform_0, window_bounds = array<i64: 1, 16, 64>}, {pipeline_mode = #tpu.pipeline_mode<synchronous>, transform_indices = @transform_1, window_bounds = array<i64: 2, 64, 512>}, {pipeline_mode = #tpu.pipeline_mode<synchronous>, transform_indices = @transform_2, window_bounds = array<i64: 2, 3, 64>}, {transform_indices = @transform_3, window_bounds = array<i64: 1, 3, 16, 16>}, {pipeline_mode = #tpu.pipeline_mode<synchronous>, transform_indices = @transform_4, window_bounds = array<i64: 2, 2, 64>}, {transform_indices = @transform_5, window_bounds = array<i64: 1, 16, 1>}, {pipeline_mode = #tpu.pipeline_mode<synchronous>, transform_indices = @transform_6, window_bounds = array<i64: 16, 64>}, {pipeline_mode = #tpu.pipeline_mode<synchronous>, transform_indices = @transform_7, window_bounds = array<i64: 2, 64>}, {pipeline_mode = #tpu.pipeline_mode<synchronous>, transform_indices = @transform_8, window_bounds = array<i64: 2, 64, 256>}, {pipeline_mode = #tpu.pipeline_mode<synchronous>, transform_indices = @transform_9, window_bounds = array<i64: 2, 1, 64>}, {transform_indices = @transform_10, window_bounds = array<i64: 1, 16, 16>}, {pipeline_mode = #tpu.pipeline_mode<synchronous>, transform_indices = @transform_11, window_bounds = array<i64: 2, 2, 64>}, {transform_indices = @transform_12, window_bounds = array<i64: 1, 16, 128>}]} {
    %c0 = arith.constant 0 : index
    %c0_0 = arith.constant 0 : index
    %c0_1 = arith.constant 0 : index
    %0 = vector.load %arg1[%c0, %c0_0, %c0_1] : memref<1x16x64xf32, #tpu.memory_space<vmem>>, vector<1x16x64xf32>
    %1 = vector.shape_cast %0 : vector<1x16x64xf32> to vector<16x64xf32>
    %c0_2 = arith.constant 0 : index
    %c0_3 = arith.constant 0 : index
    %c0_4 = arith.constant 0 : index
    %c0_5 = arith.constant 0 : index
    %2 = vector.load %arg4[%c0_2, %c0_3, %c0_4, %c0_5] : memref<1x3x16x16xf32, #tpu.memory_space<vmem>>, vector<1x1x16x16xf32>
    %3 = vector.shape_cast %2 : vector<1x1x16x16xf32> to vector<16x16xf32>
    %c0_6 = arith.constant 0 : index
    %c1 = arith.constant 1 : index
    %c0_7 = arith.constant 0 : index
    %c0_8 = arith.constant 0 : index
    %4 = vector.load %arg4[%c0_6, %c1, %c0_7, %c0_8] : memref<1x3x16x16xf32, #tpu.memory_space<vmem>>, vector<1x1x16x16xf32>
    %5 = vector.shape_cast %4 : vector<1x1x16x16xf32> to vector<16x16xf32>
    %c0_9 = arith.constant 0 : index
    %c2 = arith.constant 2 : index
    %c0_10 = arith.constant 0 : index
    %c0_11 = arith.constant 0 : index
    %6 = vector.load %arg4[%c0_9, %c2, %c0_10, %c0_11] : memref<1x3x16x16xf32, #tpu.memory_space<vmem>>, vector<1x1x16x16xf32>
    %7 = vector.shape_cast %6 : vector<1x1x16x16xf32> to vector<16x16xf32>
    %c0_12 = arith.constant 0 : index
    %c0_13 = arith.constant 0 : index
    %c0_14 = arith.constant 0 : index
    %8 = vector.load %arg3[%c0_12, %c0_13, %c0_14] : memref<2x3x64xf32, #tpu.memory_space<vmem>>, vector<1x3x64xf32>
    %9 = vector.shape_cast %8 : vector<1x3x64xf32> to vector<3x64xf32>
    %c0_15 = arith.constant 0 : index
    %c0_16 = arith.constant 0 : index
    %c0_17 = arith.constant 0 : index
    %10 = vector.load %arg5[%c0_15, %c0_16, %c0_17] : memref<2x2x64xf32, #tpu.memory_space<vmem>>, vector<1x2x64xf32>
    %11 = vector.shape_cast %10 : vector<1x2x64xf32> to vector<2x64xf32>
    %c0_18 = arith.constant 0 : index
    %c0_19 = arith.constant 0 : index
    %c0_20 = arith.constant 0 : index
    %12 = vector.load %arg2[%c0_18, %c0_19, %c0_20] : memref<2x64x512xf32, #tpu.memory_space<vmem>>, vector<1x64x512xf32>
    %13 = vector.shape_cast %12 : vector<1x64x512xf32> to vector<64x512xf32>
    %cst = arith.constant dense<0.000000e+00> : vector<16x512xf32>
    %14 = tpu.matmul %1, %13, %cst {dimension_numbers = #tpu.dot_dimension_numbers<[1], [0], [0], [1], [0, 0, 1, 1], [], []>} : vector<16x64xf32>, vector<64x512xf32>, vector<16x512xf32> -> vector<16x512xf32>
    %15 = vector.extract_strided_slice %14 {offsets = [0, 384], sizes = [16, 128], strides = [1, 1]} : vector<16x512xf32> to vector<16x128xf32>
    %16 = tpu.transpose %15, [1, 0] : vector<16x128xf32> -> vector<128x16xf32>
    %cst_21 = arith.constant 0.000000e+00 : f32
    %17 = vector.broadcast %cst_21 : f32 to vector<16x64xf32>
    %18 = vector.extract_strided_slice %14 {offsets = [0, 0], sizes = [16, 64], strides = [1, 1]} : vector<16x512xf32> to vector<16x64xf32>
    %19 = vector.extract_strided_slice %14 {offsets = [0, 64], sizes = [16, 1], strides = [1, 1]} : vector<16x512xf32> to vector<16x1xf32>
    %20 = vector.extract_strided_slice %16 {offsets = [0, 0], sizes = [1, 16], strides = [1, 1]} : vector<128x16xf32> to vector<1x16xf32>
    %21 = vector.extract_strided_slice %9 {offsets = [0, 0], sizes = [1, 64], strides = [1, 1]} : vector<3x64xf32> to vector<1x64xf32>
    %22 = vector.broadcast %19 : vector<16x1xf32> to vector<16x16xf32>
    %23 = vector.broadcast %20 : vector<1x16xf32> to vector<16x16xf32>
    %24 = arith.addf %22, %23 : vector<16x16xf32>
    %cst_22 = arith.constant 0.000000e+00 : f32
    %25 = vector.broadcast %cst_22 : f32 to vector<16x16xf32>
    %26 = arith.cmpf ogt, %24, %25 : vector<16x16xf32>
    %cst_23 = arith.constant 2.000000e-01 : f32
    %27 = vector.broadcast %cst_23 : f32 to vector<16x16xf32>
    %28 = arith.mulf %27, %24 : vector<16x16xf32>
    %29 = arith.select %26, %24, %28 : vector<16x16xi1>, vector<16x16xf32>
    %cst_24 = arith.constant 0.000000e+00 : f32
    %30 = vector.broadcast %cst_24 : f32 to vector<16x16xf32>
    %31 = arith.cmpf ogt, %3, %30 : vector<16x16xf32>
    %cst_25 = arith.constant -1.000000e+30 : f32
    %32 = vector.broadcast %cst_25 : f32 to vector<16x16xf32>
    %33 = arith.select %31, %29, %32 : vector<16x16xi1>, vector<16x16xf32>
    %cst_26 = arith.constant dense<0xFF800000> : vector<16xf32>
    %34 = vector.multi_reduction <maximumf>, %33, %cst_26 [1] : vector<16x16xf32> to vector<16xf32>
    %35 = vector.shape_cast %34 : vector<16xf32> to vector<16x1xf32>
    %36 = vector.broadcast %35 : vector<16x1xf32> to vector<16x16xf32>
    %37 = arith.subf %29, %36 : vector<16x16xf32>
    %cst_27 = arith.constant 0.000000e+00 : f32
    %38 = vector.broadcast %cst_27 : f32 to vector<16x16xf32>
    %39 = arith.minimumf %37, %38 : vector<16x16xf32>
    %40 = math.exp %39 : vector<16x16xf32>
    %41 = arith.mulf %40, %3 : vector<16x16xf32>
    %cst_28 = arith.constant dense<0.000000e+00> : vector<16xf32>
    %42 = vector.multi_reduction <add>, %41, %cst_28 [1] : vector<16x16xf32> to vector<16xf32>
    %43 = vector.shape_cast %42 : vector<16xf32> to vector<16x1xf32>
    %cst_29 = arith.constant 1.000000e-30 : f32
    %44 = vector.broadcast %cst_29 : f32 to vector<16x1xf32>
    %45 = arith.maximumf %43, %44 : vector<16x1xf32>
    %46 = tpu.reciprocal %45 {approx = true} : vector<16x1xf32> -> vector<16x1xf32>
    %47 = vector.broadcast %46 : vector<16x1xf32> to vector<16x16xf32>
    %48 = arith.mulf %41, %47 : vector<16x16xf32>
    %cst_30 = arith.constant dense<0.000000e+00> : vector<16x64xf32>
    %49 = tpu.matmul %48, %18, %cst_30 {dimension_numbers = #tpu.dot_dimension_numbers<[1], [0], [0], [1], [0, 0, 1, 1], [], []>} : vector<16x16xf32>, vector<16x64xf32>, vector<16x64xf32> -> vector<16x64xf32>
    %50 = vector.broadcast %21 : vector<1x64xf32> to vector<16x64xf32>
    %51 = arith.addf %49, %50 : vector<16x64xf32>
    %cst_31 = arith.constant 0.000000e+00 : f32
    %52 = vector.broadcast %cst_31 : f32 to vector<16x64xf32>
    %53 = arith.maximumf %51, %52 : vector<16x64xf32>
    %54 = arith.addf %17, %53 : vector<16x64xf32>
    %55 = vector.extract_strided_slice %14 {offsets = [0, 128], sizes = [16, 64], strides = [1, 1]} : vector<16x512xf32> to vector<16x64xf32>
    %56 = vector.extract_strided_slice %14 {offsets = [0, 192], sizes = [16, 1], strides = [1, 1]} : vector<16x512xf32> to vector<16x1xf32>
    %57 = vector.extract_strided_slice %16 {offsets = [1, 0], sizes = [1, 16], strides = [1, 1]} : vector<128x16xf32> to vector<1x16xf32>
    %58 = vector.extract_strided_slice %9 {offsets = [1, 0], sizes = [1, 64], strides = [1, 1]} : vector<3x64xf32> to vector<1x64xf32>
    %59 = vector.broadcast %56 : vector<16x1xf32> to vector<16x16xf32>
    %60 = vector.broadcast %57 : vector<1x16xf32> to vector<16x16xf32>
    %61 = arith.addf %59, %60 : vector<16x16xf32>
    %cst_32 = arith.constant 0.000000e+00 : f32
    %62 = vector.broadcast %cst_32 : f32 to vector<16x16xf32>
    %63 = arith.cmpf ogt, %61, %62 : vector<16x16xf32>
    %cst_33 = arith.constant 2.000000e-01 : f32
    %64 = vector.broadcast %cst_33 : f32 to vector<16x16xf32>
    %65 = arith.mulf %64, %61 : vector<16x16xf32>
    %66 = arith.select %63, %61, %65 : vector<16x16xi1>, vector<16x16xf32>
    %cst_34 = arith.constant 0.000000e+00 : f32
    %67 = vector.broadcast %cst_34 : f32 to vector<16x16xf32>
    %68 = arith.cmpf ogt, %5, %67 : vector<16x16xf32>
    %cst_35 = arith.constant -1.000000e+30 : f32
    %69 = vector.broadcast %cst_35 : f32 to vector<16x16xf32>
    %70 = arith.select %68, %66, %69 : vector<16x16xi1>, vector<16x16xf32>
    %cst_36 = arith.constant dense<0xFF800000> : vector<16xf32>
    %71 = vector.multi_reduction <maximumf>, %70, %cst_36 [1] : vector<16x16xf32> to vector<16xf32>
    %72 = vector.shape_cast %71 : vector<16xf32> to vector<16x1xf32>
    %73 = vector.broadcast %72 : vector<16x1xf32> to vector<16x16xf32>
    %74 = arith.subf %66, %73 : vector<16x16xf32>
    %cst_37 = arith.constant 0.000000e+00 : f32
    %75 = vector.broadcast %cst_37 : f32 to vector<16x16xf32>
    %76 = arith.minimumf %74, %75 : vector<16x16xf32>
    %77 = math.exp %76 : vector<16x16xf32>
    %78 = arith.mulf %77, %5 : vector<16x16xf32>
    %cst_38 = arith.constant dense<0.000000e+00> : vector<16xf32>
    %79 = vector.multi_reduction <add>, %78, %cst_38 [1] : vector<16x16xf32> to vector<16xf32>
    %80 = vector.shape_cast %79 : vector<16xf32> to vector<16x1xf32>
    %cst_39 = arith.constant 1.000000e-30 : f32
    %81 = vector.broadcast %cst_39 : f32 to vector<16x1xf32>
    %82 = arith.maximumf %80, %81 : vector<16x1xf32>
    %83 = tpu.reciprocal %82 {approx = true} : vector<16x1xf32> -> vector<16x1xf32>
    %84 = vector.broadcast %83 : vector<16x1xf32> to vector<16x16xf32>
    %85 = arith.mulf %78, %84 : vector<16x16xf32>
    %cst_40 = arith.constant dense<0.000000e+00> : vector<16x64xf32>
    %86 = tpu.matmul %85, %55, %cst_40 {dimension_numbers = #tpu.dot_dimension_numbers<[1], [0], [0], [1], [0, 0, 1, 1], [], []>} : vector<16x16xf32>, vector<16x64xf32>, vector<16x64xf32> -> vector<16x64xf32>
    %87 = vector.broadcast %58 : vector<1x64xf32> to vector<16x64xf32>
    %88 = arith.addf %86, %87 : vector<16x64xf32>
    %cst_41 = arith.constant 0.000000e+00 : f32
    %89 = vector.broadcast %cst_41 : f32 to vector<16x64xf32>
    %90 = arith.maximumf %88, %89 : vector<16x64xf32>
    %91 = arith.addf %54, %90 : vector<16x64xf32>
    %92 = vector.extract_strided_slice %14 {offsets = [0, 256], sizes = [16, 64], strides = [1, 1]} : vector<16x512xf32> to vector<16x64xf32>
    %93 = vector.extract_strided_slice %14 {offsets = [0, 320], sizes = [16, 1], strides = [1, 1]} : vector<16x512xf32> to vector<16x1xf32>
    %94 = vector.extract_strided_slice %16 {offsets = [2, 0], sizes = [1, 16], strides = [1, 1]} : vector<128x16xf32> to vector<1x16xf32>
    %95 = vector.extract_strided_slice %9 {offsets = [2, 0], sizes = [1, 64], strides = [1, 1]} : vector<3x64xf32> to vector<1x64xf32>
    %96 = vector.broadcast %93 : vector<16x1xf32> to vector<16x16xf32>
    %97 = vector.broadcast %94 : vector<1x16xf32> to vector<16x16xf32>
    %98 = arith.addf %96, %97 : vector<16x16xf32>
    %cst_42 = arith.constant 0.000000e+00 : f32
    %99 = vector.broadcast %cst_42 : f32 to vector<16x16xf32>
    %100 = arith.cmpf ogt, %98, %99 : vector<16x16xf32>
    %cst_43 = arith.constant 2.000000e-01 : f32
    %101 = vector.broadcast %cst_43 : f32 to vector<16x16xf32>
    %102 = arith.mulf %101, %98 : vector<16x16xf32>
    %103 = arith.select %100, %98, %102 : vector<16x16xi1>, vector<16x16xf32>
    %cst_44 = arith.constant 0.000000e+00 : f32
    %104 = vector.broadcast %cst_44 : f32 to vector<16x16xf32>
    %105 = arith.cmpf ogt, %7, %104 : vector<16x16xf32>
    %cst_45 = arith.constant -1.000000e+30 : f32
    %106 = vector.broadcast %cst_45 : f32 to vector<16x16xf32>
    %107 = arith.select %105, %103, %106 : vector<16x16xi1>, vector<16x16xf32>
    %cst_46 = arith.constant dense<0xFF800000> : vector<16xf32>
    %108 = vector.multi_reduction <maximumf>, %107, %cst_46 [1] : vector<16x16xf32> to vector<16xf32>
    %109 = vector.shape_cast %108 : vector<16xf32> to vector<16x1xf32>
    %110 = vector.broadcast %109 : vector<16x1xf32> to vector<16x16xf32>
    %111 = arith.subf %103, %110 : vector<16x16xf32>
    %cst_47 = arith.constant 0.000000e+00 : f32
    %112 = vector.broadcast %cst_47 : f32 to vector<16x16xf32>
    %113 = arith.minimumf %111, %112 : vector<16x16xf32>
    %114 = math.exp %113 : vector<16x16xf32>
    %115 = arith.mulf %114, %7 : vector<16x16xf32>
    %cst_48 = arith.constant dense<0.000000e+00> : vector<16xf32>
    %116 = vector.multi_reduction <add>, %115, %cst_48 [1] : vector<16x16xf32> to vector<16xf32>
    %117 = vector.shape_cast %116 : vector<16xf32> to vector<16x1xf32>
    %cst_49 = arith.constant 1.000000e-30 : f32
    %118 = vector.broadcast %cst_49 : f32 to vector<16x1xf32>
    %119 = arith.maximumf %117, %118 : vector<16x1xf32>
    %120 = tpu.reciprocal %119 {approx = true} : vector<16x1xf32> -> vector<16x1xf32>
    %121 = vector.broadcast %120 : vector<16x1xf32> to vector<16x16xf32>
    %122 = arith.mulf %115, %121 : vector<16x16xf32>
    %cst_50 = arith.constant dense<0.000000e+00> : vector<16x64xf32>
    %123 = tpu.matmul %122, %92, %cst_50 {dimension_numbers = #tpu.dot_dimension_numbers<[1], [0], [0], [1], [0, 0, 1, 1], [], []>} : vector<16x16xf32>, vector<16x64xf32>, vector<16x64xf32> -> vector<16x64xf32>
    %124 = vector.broadcast %95 : vector<1x64xf32> to vector<16x64xf32>
    %125 = arith.addf %123, %124 : vector<16x64xf32>
    %cst_51 = arith.constant 0.000000e+00 : f32
    %126 = vector.broadcast %cst_51 : f32 to vector<16x64xf32>
    %127 = arith.maximumf %125, %126 : vector<16x64xf32>
    %128 = arith.addf %91, %127 : vector<16x64xf32>
    %129 = arith.addf %1, %128 : vector<16x64xf32>
    %130 = vector.extract_strided_slice %11 {offsets = [0, 0], sizes = [1, 64], strides = [1, 1]} : vector<2x64xf32> to vector<1x64xf32>
    %131 = vector.broadcast %130 : vector<1x64xf32> to vector<16x64xf32>
    %132 = arith.mulf %129, %131 : vector<16x64xf32>
    %133 = vector.extract_strided_slice %11 {offsets = [1, 0], sizes = [1, 64], strides = [1, 1]} : vector<2x64xf32> to vector<1x64xf32>
    %134 = vector.broadcast %133 : vector<1x64xf32> to vector<16x64xf32>
    %135 = arith.addf %132, %134 : vector<16x64xf32>
    %c1_52 = arith.constant 1 : index
    %c0_53 = arith.constant 0 : index
    %c0_54 = arith.constant 0 : index
    %136 = vector.load %arg3[%c1_52, %c0_53, %c0_54] : memref<2x3x64xf32, #tpu.memory_space<vmem>>, vector<1x3x64xf32>
    %137 = vector.shape_cast %136 : vector<1x3x64xf32> to vector<3x64xf32>
    %c1_55 = arith.constant 1 : index
    %c0_56 = arith.constant 0 : index
    %c0_57 = arith.constant 0 : index
    %138 = vector.load %arg5[%c1_55, %c0_56, %c0_57] : memref<2x2x64xf32, #tpu.memory_space<vmem>>, vector<1x2x64xf32>
    %139 = vector.shape_cast %138 : vector<1x2x64xf32> to vector<2x64xf32>
    %c1_58 = arith.constant 1 : index
    %c0_59 = arith.constant 0 : index
    %c0_60 = arith.constant 0 : index
    %140 = vector.load %arg2[%c1_58, %c0_59, %c0_60] : memref<2x64x512xf32, #tpu.memory_space<vmem>>, vector<1x64x512xf32>
    %141 = vector.shape_cast %140 : vector<1x64x512xf32> to vector<64x512xf32>
    %cst_61 = arith.constant dense<0.000000e+00> : vector<16x512xf32>
    %142 = tpu.matmul %135, %141, %cst_61 {dimension_numbers = #tpu.dot_dimension_numbers<[1], [0], [0], [1], [0, 0, 1, 1], [], []>} : vector<16x64xf32>, vector<64x512xf32>, vector<16x512xf32> -> vector<16x512xf32>
    %143 = vector.extract_strided_slice %142 {offsets = [0, 384], sizes = [16, 128], strides = [1, 1]} : vector<16x512xf32> to vector<16x128xf32>
    %144 = tpu.transpose %143, [1, 0] : vector<16x128xf32> -> vector<128x16xf32>
    %cst_62 = arith.constant 0.000000e+00 : f32
    %145 = vector.broadcast %cst_62 : f32 to vector<16x64xf32>
    %146 = vector.extract_strided_slice %142 {offsets = [0, 0], sizes = [16, 64], strides = [1, 1]} : vector<16x512xf32> to vector<16x64xf32>
    %147 = vector.extract_strided_slice %142 {offsets = [0, 64], sizes = [16, 1], strides = [1, 1]} : vector<16x512xf32> to vector<16x1xf32>
    %148 = vector.extract_strided_slice %144 {offsets = [0, 0], sizes = [1, 16], strides = [1, 1]} : vector<128x16xf32> to vector<1x16xf32>
    %149 = vector.extract_strided_slice %137 {offsets = [0, 0], sizes = [1, 64], strides = [1, 1]} : vector<3x64xf32> to vector<1x64xf32>
    %150 = vector.broadcast %147 : vector<16x1xf32> to vector<16x16xf32>
    %151 = vector.broadcast %148 : vector<1x16xf32> to vector<16x16xf32>
    %152 = arith.addf %150, %151 : vector<16x16xf32>
    %cst_63 = arith.constant 0.000000e+00 : f32
    %153 = vector.broadcast %cst_63 : f32 to vector<16x16xf32>
    %154 = arith.cmpf ogt, %152, %153 : vector<16x16xf32>
    %cst_64 = arith.constant 2.000000e-01 : f32
    %155 = vector.broadcast %cst_64 : f32 to vector<16x16xf32>
    %156 = arith.mulf %155, %152 : vector<16x16xf32>
    %157 = arith.select %154, %152, %156 : vector<16x16xi1>, vector<16x16xf32>
    %cst_65 = arith.constant 0.000000e+00 : f32
    %158 = vector.broadcast %cst_65 : f32 to vector<16x16xf32>
    %159 = arith.cmpf ogt, %3, %158 : vector<16x16xf32>
    %cst_66 = arith.constant -1.000000e+30 : f32
    %160 = vector.broadcast %cst_66 : f32 to vector<16x16xf32>
    %161 = arith.select %159, %157, %160 : vector<16x16xi1>, vector<16x16xf32>
    %cst_67 = arith.constant dense<0xFF800000> : vector<16xf32>
    %162 = vector.multi_reduction <maximumf>, %161, %cst_67 [1] : vector<16x16xf32> to vector<16xf32>
    %163 = vector.shape_cast %162 : vector<16xf32> to vector<16x1xf32>
    %164 = vector.broadcast %163 : vector<16x1xf32> to vector<16x16xf32>
    %165 = arith.subf %157, %164 : vector<16x16xf32>
    %cst_68 = arith.constant 0.000000e+00 : f32
    %166 = vector.broadcast %cst_68 : f32 to vector<16x16xf32>
    %167 = arith.minimumf %165, %166 : vector<16x16xf32>
    %168 = math.exp %167 : vector<16x16xf32>
    %169 = arith.mulf %168, %3 : vector<16x16xf32>
    %cst_69 = arith.constant dense<0.000000e+00> : vector<16xf32>
    %170 = vector.multi_reduction <add>, %169, %cst_69 [1] : vector<16x16xf32> to vector<16xf32>
    %171 = vector.shape_cast %170 : vector<16xf32> to vector<16x1xf32>
    %cst_70 = arith.constant 1.000000e-30 : f32
    %172 = vector.broadcast %cst_70 : f32 to vector<16x1xf32>
    %173 = arith.maximumf %171, %172 : vector<16x1xf32>
    %174 = tpu.reciprocal %173 {approx = true} : vector<16x1xf32> -> vector<16x1xf32>
    %175 = vector.broadcast %174 : vector<16x1xf32> to vector<16x16xf32>
    %176 = arith.mulf %169, %175 : vector<16x16xf32>
    %cst_71 = arith.constant dense<0.000000e+00> : vector<16x64xf32>
    %177 = tpu.matmul %176, %146, %cst_71 {dimension_numbers = #tpu.dot_dimension_numbers<[1], [0], [0], [1], [0, 0, 1, 1], [], []>} : vector<16x16xf32>, vector<16x64xf32>, vector<16x64xf32> -> vector<16x64xf32>
    %178 = vector.broadcast %149 : vector<1x64xf32> to vector<16x64xf32>
    %179 = arith.addf %177, %178 : vector<16x64xf32>
    %cst_72 = arith.constant 0.000000e+00 : f32
    %180 = vector.broadcast %cst_72 : f32 to vector<16x64xf32>
    %181 = arith.maximumf %179, %180 : vector<16x64xf32>
    %182 = arith.addf %145, %181 : vector<16x64xf32>
    %183 = vector.extract_strided_slice %142 {offsets = [0, 128], sizes = [16, 64], strides = [1, 1]} : vector<16x512xf32> to vector<16x64xf32>
    %184 = vector.extract_strided_slice %142 {offsets = [0, 192], sizes = [16, 1], strides = [1, 1]} : vector<16x512xf32> to vector<16x1xf32>
    %185 = vector.extract_strided_slice %144 {offsets = [1, 0], sizes = [1, 16], strides = [1, 1]} : vector<128x16xf32> to vector<1x16xf32>
    %186 = vector.extract_strided_slice %137 {offsets = [1, 0], sizes = [1, 64], strides = [1, 1]} : vector<3x64xf32> to vector<1x64xf32>
    %187 = vector.broadcast %184 : vector<16x1xf32> to vector<16x16xf32>
    %188 = vector.broadcast %185 : vector<1x16xf32> to vector<16x16xf32>
    %189 = arith.addf %187, %188 : vector<16x16xf32>
    %cst_73 = arith.constant 0.000000e+00 : f32
    %190 = vector.broadcast %cst_73 : f32 to vector<16x16xf32>
    %191 = arith.cmpf ogt, %189, %190 : vector<16x16xf32>
    %cst_74 = arith.constant 2.000000e-01 : f32
    %192 = vector.broadcast %cst_74 : f32 to vector<16x16xf32>
    %193 = arith.mulf %192, %189 : vector<16x16xf32>
    %194 = arith.select %191, %189, %193 : vector<16x16xi1>, vector<16x16xf32>
    %cst_75 = arith.constant 0.000000e+00 : f32
    %195 = vector.broadcast %cst_75 : f32 to vector<16x16xf32>
    %196 = arith.cmpf ogt, %5, %195 : vector<16x16xf32>
    %cst_76 = arith.constant -1.000000e+30 : f32
    %197 = vector.broadcast %cst_76 : f32 to vector<16x16xf32>
    %198 = arith.select %196, %194, %197 : vector<16x16xi1>, vector<16x16xf32>
    %cst_77 = arith.constant dense<0xFF800000> : vector<16xf32>
    %199 = vector.multi_reduction <maximumf>, %198, %cst_77 [1] : vector<16x16xf32> to vector<16xf32>
    %200 = vector.shape_cast %199 : vector<16xf32> to vector<16x1xf32>
    %201 = vector.broadcast %200 : vector<16x1xf32> to vector<16x16xf32>
    %202 = arith.subf %194, %201 : vector<16x16xf32>
    %cst_78 = arith.constant 0.000000e+00 : f32
    %203 = vector.broadcast %cst_78 : f32 to vector<16x16xf32>
    %204 = arith.minimumf %202, %203 : vector<16x16xf32>
    %205 = math.exp %204 : vector<16x16xf32>
    %206 = arith.mulf %205, %5 : vector<16x16xf32>
    %cst_79 = arith.constant dense<0.000000e+00> : vector<16xf32>
    %207 = vector.multi_reduction <add>, %206, %cst_79 [1] : vector<16x16xf32> to vector<16xf32>
    %208 = vector.shape_cast %207 : vector<16xf32> to vector<16x1xf32>
    %cst_80 = arith.constant 1.000000e-30 : f32
    %209 = vector.broadcast %cst_80 : f32 to vector<16x1xf32>
    %210 = arith.maximumf %208, %209 : vector<16x1xf32>
    %211 = tpu.reciprocal %210 {approx = true} : vector<16x1xf32> -> vector<16x1xf32>
    %212 = vector.broadcast %211 : vector<16x1xf32> to vector<16x16xf32>
    %213 = arith.mulf %206, %212 : vector<16x16xf32>
    %cst_81 = arith.constant dense<0.000000e+00> : vector<16x64xf32>
    %214 = tpu.matmul %213, %183, %cst_81 {dimension_numbers = #tpu.dot_dimension_numbers<[1], [0], [0], [1], [0, 0, 1, 1], [], []>} : vector<16x16xf32>, vector<16x64xf32>, vector<16x64xf32> -> vector<16x64xf32>
    %215 = vector.broadcast %186 : vector<1x64xf32> to vector<16x64xf32>
    %216 = arith.addf %214, %215 : vector<16x64xf32>
    %cst_82 = arith.constant 0.000000e+00 : f32
    %217 = vector.broadcast %cst_82 : f32 to vector<16x64xf32>
    %218 = arith.maximumf %216, %217 : vector<16x64xf32>
    %219 = arith.addf %182, %218 : vector<16x64xf32>
    %220 = vector.extract_strided_slice %142 {offsets = [0, 256], sizes = [16, 64], strides = [1, 1]} : vector<16x512xf32> to vector<16x64xf32>
    %221 = vector.extract_strided_slice %142 {offsets = [0, 320], sizes = [16, 1], strides = [1, 1]} : vector<16x512xf32> to vector<16x1xf32>
    %222 = vector.extract_strided_slice %144 {offsets = [2, 0], sizes = [1, 16], strides = [1, 1]} : vector<128x16xf32> to vector<1x16xf32>
    %223 = vector.extract_strided_slice %137 {offsets = [2, 0], sizes = [1, 64], strides = [1, 1]} : vector<3x64xf32> to vector<1x64xf32>
    %224 = vector.broadcast %221 : vector<16x1xf32> to vector<16x16xf32>
    %225 = vector.broadcast %222 : vector<1x16xf32> to vector<16x16xf32>
    %226 = arith.addf %224, %225 : vector<16x16xf32>
    %cst_83 = arith.constant 0.000000e+00 : f32
    %227 = vector.broadcast %cst_83 : f32 to vector<16x16xf32>
    %228 = arith.cmpf ogt, %226, %227 : vector<16x16xf32>
    %cst_84 = arith.constant 2.000000e-01 : f32
    %229 = vector.broadcast %cst_84 : f32 to vector<16x16xf32>
    %230 = arith.mulf %229, %226 : vector<16x16xf32>
    %231 = arith.select %228, %226, %230 : vector<16x16xi1>, vector<16x16xf32>
    %cst_85 = arith.constant 0.000000e+00 : f32
    %232 = vector.broadcast %cst_85 : f32 to vector<16x16xf32>
    %233 = arith.cmpf ogt, %7, %232 : vector<16x16xf32>
    %cst_86 = arith.constant -1.000000e+30 : f32
    %234 = vector.broadcast %cst_86 : f32 to vector<16x16xf32>
    %235 = arith.select %233, %231, %234 : vector<16x16xi1>, vector<16x16xf32>
    %cst_87 = arith.constant dense<0xFF800000> : vector<16xf32>
    %236 = vector.multi_reduction <maximumf>, %235, %cst_87 [1] : vector<16x16xf32> to vector<16xf32>
    %237 = vector.shape_cast %236 : vector<16xf32> to vector<16x1xf32>
    %238 = vector.broadcast %237 : vector<16x1xf32> to vector<16x16xf32>
    %239 = arith.subf %231, %238 : vector<16x16xf32>
    %cst_88 = arith.constant 0.000000e+00 : f32
    %240 = vector.broadcast %cst_88 : f32 to vector<16x16xf32>
    %241 = arith.minimumf %239, %240 : vector<16x16xf32>
    %242 = math.exp %241 : vector<16x16xf32>
    %243 = arith.mulf %242, %7 : vector<16x16xf32>
    %cst_89 = arith.constant dense<0.000000e+00> : vector<16xf32>
    %244 = vector.multi_reduction <add>, %243, %cst_89 [1] : vector<16x16xf32> to vector<16xf32>
    %245 = vector.shape_cast %244 : vector<16xf32> to vector<16x1xf32>
    %cst_90 = arith.constant 1.000000e-30 : f32
    %246 = vector.broadcast %cst_90 : f32 to vector<16x1xf32>
    %247 = arith.maximumf %245, %246 : vector<16x1xf32>
    %248 = tpu.reciprocal %247 {approx = true} : vector<16x1xf32> -> vector<16x1xf32>
    %249 = vector.broadcast %248 : vector<16x1xf32> to vector<16x16xf32>
    %250 = arith.mulf %243, %249 : vector<16x16xf32>
    %cst_91 = arith.constant dense<0.000000e+00> : vector<16x64xf32>
    %251 = tpu.matmul %250, %220, %cst_91 {dimension_numbers = #tpu.dot_dimension_numbers<[1], [0], [0], [1], [0, 0, 1, 1], [], []>} : vector<16x16xf32>, vector<16x64xf32>, vector<16x64xf32> -> vector<16x64xf32>
    %252 = vector.broadcast %223 : vector<1x64xf32> to vector<16x64xf32>
    %253 = arith.addf %251, %252 : vector<16x64xf32>
    %cst_92 = arith.constant 0.000000e+00 : f32
    %254 = vector.broadcast %cst_92 : f32 to vector<16x64xf32>
    %255 = arith.maximumf %253, %254 : vector<16x64xf32>
    %256 = arith.addf %219, %255 : vector<16x64xf32>
    %257 = arith.addf %135, %256 : vector<16x64xf32>
    %258 = vector.extract_strided_slice %139 {offsets = [0, 0], sizes = [1, 64], strides = [1, 1]} : vector<2x64xf32> to vector<1x64xf32>
    %259 = vector.broadcast %258 : vector<1x64xf32> to vector<16x64xf32>
    %260 = arith.mulf %257, %259 : vector<16x64xf32>
    %261 = vector.extract_strided_slice %139 {offsets = [1, 0], sizes = [1, 64], strides = [1, 1]} : vector<2x64xf32> to vector<1x64xf32>
    %262 = vector.broadcast %261 : vector<1x64xf32> to vector<16x64xf32>
    %263 = arith.addf %260, %262 : vector<16x64xf32>
    %c0_93 = arith.constant 0 : index
    %c0_94 = arith.constant 0 : index
    %c0_95 = arith.constant 0 : index
    %264 = vector.load %arg6[%c0_93, %c0_94, %c0_95] : memref<1x16x1xi32, #tpu.memory_space<vmem>>, vector<1x16x1xi32>
    %265 = vector.shape_cast %264 : vector<1x16x1xi32> to vector<16x1xi32>
    %266 = tpu.iota {dimensions = array<i32: 1>} : vector<16x16xi32>
    %267 = vector.broadcast %265 : vector<16x1xi32> to vector<16x16xi32>
    %268 = arith.cmpi eq, %266, %267 : vector<16x16xi32>
    %269 = arith.extui %268 : vector<16x16xi1> to vector<16x16xi32>
    %270 = arith.sitofp %269 : vector<16x16xi32> to vector<16x16xf32>
    %c0_96 = arith.constant 0 : index
    %c0_97 = arith.constant 0 : index
    %271 = vector.load %arg7[%c0_96, %c0_97] : memref<16x64xf32, #tpu.memory_space<vmem>>, vector<16x64xf32>
    %cst_98 = arith.constant dense<0.000000e+00> : vector<16x64xf32>
    %272 = tpu.matmul %270, %271, %cst_98 {dimension_numbers = #tpu.dot_dimension_numbers<[1], [0], [0], [1], [0, 0, 1, 1], [], []>} : vector<16x16xf32>, vector<16x64xf32>, vector<16x64xf32> -> vector<16x64xf32>
    %c0_99 = arith.constant 0 : index
    %c0_100 = arith.constant 0 : index
    %273 = vector.load %arg8[%c0_99, %c0_100] : memref<2x64xf32, #tpu.memory_space<vmem>>, vector<2x64xf32>
    %274 = arith.addf %263, %272 : vector<16x64xf32>
    %275 = vector.extract_strided_slice %273 {offsets = [0, 0], sizes = [1, 64], strides = [1, 1]} : vector<2x64xf32> to vector<1x64xf32>
    %276 = vector.broadcast %275 : vector<1x64xf32> to vector<16x64xf32>
    %277 = arith.mulf %274, %276 : vector<16x64xf32>
    %278 = vector.extract_strided_slice %273 {offsets = [1, 0], sizes = [1, 64], strides = [1, 1]} : vector<2x64xf32> to vector<1x64xf32>
    %279 = vector.broadcast %278 : vector<1x64xf32> to vector<16x64xf32>
    %280 = arith.addf %277, %279 : vector<16x64xf32>
    %c0_101 = arith.constant 0 : index
    %c0_102 = arith.constant 0 : index
    %c0_103 = arith.constant 0 : index
    %281 = vector.load %arg11[%c0_101, %c0_102, %c0_103] : memref<1x16x16xf32, #tpu.memory_space<vmem>>, vector<1x16x16xf32>
    %282 = vector.shape_cast %281 : vector<1x16x16xf32> to vector<16x16xf32>
    %c0_104 = arith.constant 0 : index
    %c0_105 = arith.constant 0 : index
    %c0_106 = arith.constant 0 : index
    %283 = vector.load %arg12[%c0_104, %c0_105, %c0_106] : memref<2x2x64xf32, #tpu.memory_space<vmem>>, vector<1x2x64xf32>
    %284 = vector.shape_cast %283 : vector<1x2x64xf32> to vector<2x64xf32>
    %c0_107 = arith.constant 0 : index
    %c0_108 = arith.constant 0 : index
    %c0_109 = arith.constant 0 : index
    %285 = vector.load %arg9[%c0_107, %c0_108, %c0_109] : memref<2x64x256xf32, #tpu.memory_space<vmem>>, vector<1x64x256xf32>
    %286 = vector.shape_cast %285 : vector<1x64x256xf32> to vector<64x256xf32>
    %cst_110 = arith.constant dense<0.000000e+00> : vector<16x256xf32>
    %287 = tpu.matmul %280, %286, %cst_110 {dimension_numbers = #tpu.dot_dimension_numbers<[1], [0], [0], [1], [0, 0, 1, 1], [], []>} : vector<16x64xf32>, vector<64x256xf32>, vector<16x256xf32> -> vector<16x256xf32>
    %288 = vector.extract_strided_slice %287 {offsets = [0, 128], sizes = [16, 128], strides = [1, 1]} : vector<16x256xf32> to vector<16x128xf32>
    %289 = tpu.transpose %288, [1, 0] : vector<16x128xf32> -> vector<128x16xf32>
    %290 = vector.extract_strided_slice %289 {offsets = [0, 0], sizes = [1, 16], strides = [1, 1]} : vector<128x16xf32> to vector<1x16xf32>
    %291 = vector.extract_strided_slice %287 {offsets = [0, 0], sizes = [16, 64], strides = [1, 1]} : vector<16x256xf32> to vector<16x64xf32>
    %292 = vector.extract_strided_slice %287 {offsets = [0, 64], sizes = [16, 1], strides = [1, 1]} : vector<16x256xf32> to vector<16x1xf32>
    %c0_111 = arith.constant 0 : index
    %c0_112 = arith.constant 0 : index
    %c0_113 = arith.constant 0 : index
    %293 = vector.load %arg10[%c0_111, %c0_112, %c0_113] : memref<2x1x64xf32, #tpu.memory_space<vmem>>, vector<1x1x64xf32>
    %294 = vector.shape_cast %293 : vector<1x1x64xf32> to vector<1x64xf32>
    %295 = vector.broadcast %292 : vector<16x1xf32> to vector<16x16xf32>
    %296 = vector.broadcast %290 : vector<1x16xf32> to vector<16x16xf32>
    %297 = arith.addf %295, %296 : vector<16x16xf32>
    %cst_114 = arith.constant 0.000000e+00 : f32
    %298 = vector.broadcast %cst_114 : f32 to vector<16x16xf32>
    %299 = arith.cmpf ogt, %297, %298 : vector<16x16xf32>
    %cst_115 = arith.constant 2.000000e-01 : f32
    %300 = vector.broadcast %cst_115 : f32 to vector<16x16xf32>
    %301 = arith.mulf %300, %297 : vector<16x16xf32>
    %302 = arith.select %299, %297, %301 : vector<16x16xi1>, vector<16x16xf32>
    %cst_116 = arith.constant 0.000000e+00 : f32
    %303 = vector.broadcast %cst_116 : f32 to vector<16x16xf32>
    %304 = arith.cmpf ogt, %282, %303 : vector<16x16xf32>
    %cst_117 = arith.constant -1.000000e+30 : f32
    %305 = vector.broadcast %cst_117 : f32 to vector<16x16xf32>
    %306 = arith.select %304, %302, %305 : vector<16x16xi1>, vector<16x16xf32>
    %cst_118 = arith.constant dense<0xFF800000> : vector<16xf32>
    %307 = vector.multi_reduction <maximumf>, %306, %cst_118 [1] : vector<16x16xf32> to vector<16xf32>
    %308 = vector.shape_cast %307 : vector<16xf32> to vector<16x1xf32>
    %309 = vector.broadcast %308 : vector<16x1xf32> to vector<16x16xf32>
    %310 = arith.subf %302, %309 : vector<16x16xf32>
    %cst_119 = arith.constant 0.000000e+00 : f32
    %311 = vector.broadcast %cst_119 : f32 to vector<16x16xf32>
    %312 = arith.minimumf %310, %311 : vector<16x16xf32>
    %313 = math.exp %312 : vector<16x16xf32>
    %314 = arith.mulf %313, %282 : vector<16x16xf32>
    %cst_120 = arith.constant dense<0.000000e+00> : vector<16xf32>
    %315 = vector.multi_reduction <add>, %314, %cst_120 [1] : vector<16x16xf32> to vector<16xf32>
    %316 = vector.shape_cast %315 : vector<16xf32> to vector<16x1xf32>
    %cst_121 = arith.constant 1.000000e-30 : f32
    %317 = vector.broadcast %cst_121 : f32 to vector<16x1xf32>
    %318 = arith.maximumf %316, %317 : vector<16x1xf32>
    %319 = tpu.reciprocal %318 {approx = true} : vector<16x1xf32> -> vector<16x1xf32>
    %320 = vector.broadcast %319 : vector<16x1xf32> to vector<16x16xf32>
    %321 = arith.mulf %314, %320 : vector<16x16xf32>
    %cst_122 = arith.constant dense<0.000000e+00> : vector<16x64xf32>
    %322 = tpu.matmul %321, %291, %cst_122 {dimension_numbers = #tpu.dot_dimension_numbers<[1], [0], [0], [1], [0, 0, 1, 1], [], []>} : vector<16x16xf32>, vector<16x64xf32>, vector<16x64xf32> -> vector<16x64xf32>
    %323 = vector.broadcast %294 : vector<1x64xf32> to vector<16x64xf32>
    %324 = arith.addf %322, %323 : vector<16x64xf32>
    %cst_123 = arith.constant 0.000000e+00 : f32
    %325 = vector.broadcast %cst_123 : f32 to vector<16x64xf32>
    %326 = arith.maximumf %324, %325 : vector<16x64xf32>
    %327 = arith.addf %280, %326 : vector<16x64xf32>
    %328 = vector.extract_strided_slice %284 {offsets = [0, 0], sizes = [1, 64], strides = [1, 1]} : vector<2x64xf32> to vector<1x64xf32>
    %329 = vector.broadcast %328 : vector<1x64xf32> to vector<16x64xf32>
    %330 = arith.mulf %327, %329 : vector<16x64xf32>
    %331 = vector.extract_strided_slice %284 {offsets = [1, 0], sizes = [1, 64], strides = [1, 1]} : vector<2x64xf32> to vector<1x64xf32>
    %332 = vector.broadcast %331 : vector<1x64xf32> to vector<16x64xf32>
    %333 = arith.addf %330, %332 : vector<16x64xf32>
    %c1_124 = arith.constant 1 : index
    %c0_125 = arith.constant 0 : index
    %c0_126 = arith.constant 0 : index
    %334 = vector.load %arg12[%c1_124, %c0_125, %c0_126] : memref<2x2x64xf32, #tpu.memory_space<vmem>>, vector<1x2x64xf32>
    %335 = vector.shape_cast %334 : vector<1x2x64xf32> to vector<2x64xf32>
    %c1_127 = arith.constant 1 : index
    %c0_128 = arith.constant 0 : index
    %c0_129 = arith.constant 0 : index
    %336 = vector.load %arg9[%c1_127, %c0_128, %c0_129] : memref<2x64x256xf32, #tpu.memory_space<vmem>>, vector<1x64x256xf32>
    %337 = vector.shape_cast %336 : vector<1x64x256xf32> to vector<64x256xf32>
    %cst_130 = arith.constant dense<0.000000e+00> : vector<16x256xf32>
    %338 = tpu.matmul %333, %337, %cst_130 {dimension_numbers = #tpu.dot_dimension_numbers<[1], [0], [0], [1], [0, 0, 1, 1], [], []>} : vector<16x64xf32>, vector<64x256xf32>, vector<16x256xf32> -> vector<16x256xf32>
    %339 = vector.extract_strided_slice %338 {offsets = [0, 128], sizes = [16, 128], strides = [1, 1]} : vector<16x256xf32> to vector<16x128xf32>
    %340 = tpu.transpose %339, [1, 0] : vector<16x128xf32> -> vector<128x16xf32>
    %341 = vector.extract_strided_slice %340 {offsets = [0, 0], sizes = [1, 16], strides = [1, 1]} : vector<128x16xf32> to vector<1x16xf32>
    %342 = vector.extract_strided_slice %338 {offsets = [0, 0], sizes = [16, 64], strides = [1, 1]} : vector<16x256xf32> to vector<16x64xf32>
    %343 = vector.extract_strided_slice %338 {offsets = [0, 64], sizes = [16, 1], strides = [1, 1]} : vector<16x256xf32> to vector<16x1xf32>
    %c1_131 = arith.constant 1 : index
    %c0_132 = arith.constant 0 : index
    %c0_133 = arith.constant 0 : index
    %344 = vector.load %arg10[%c1_131, %c0_132, %c0_133] : memref<2x1x64xf32, #tpu.memory_space<vmem>>, vector<1x1x64xf32>
    %345 = vector.shape_cast %344 : vector<1x1x64xf32> to vector<1x64xf32>
    %346 = vector.broadcast %343 : vector<16x1xf32> to vector<16x16xf32>
    %347 = vector.broadcast %341 : vector<1x16xf32> to vector<16x16xf32>
    %348 = arith.addf %346, %347 : vector<16x16xf32>
    %cst_134 = arith.constant 0.000000e+00 : f32
    %349 = vector.broadcast %cst_134 : f32 to vector<16x16xf32>
    %350 = arith.cmpf ogt, %348, %349 : vector<16x16xf32>
    %cst_135 = arith.constant 2.000000e-01 : f32
    %351 = vector.broadcast %cst_135 : f32 to vector<16x16xf32>
    %352 = arith.mulf %351, %348 : vector<16x16xf32>
    %353 = arith.select %350, %348, %352 : vector<16x16xi1>, vector<16x16xf32>
    %cst_136 = arith.constant 0.000000e+00 : f32
    %354 = vector.broadcast %cst_136 : f32 to vector<16x16xf32>
    %355 = arith.cmpf ogt, %282, %354 : vector<16x16xf32>
    %cst_137 = arith.constant -1.000000e+30 : f32
    %356 = vector.broadcast %cst_137 : f32 to vector<16x16xf32>
    %357 = arith.select %355, %353, %356 : vector<16x16xi1>, vector<16x16xf32>
    %cst_138 = arith.constant dense<0xFF800000> : vector<16xf32>
    %358 = vector.multi_reduction <maximumf>, %357, %cst_138 [1] : vector<16x16xf32> to vector<16xf32>
    %359 = vector.shape_cast %358 : vector<16xf32> to vector<16x1xf32>
    %360 = vector.broadcast %359 : vector<16x1xf32> to vector<16x16xf32>
    %361 = arith.subf %353, %360 : vector<16x16xf32>
    %cst_139 = arith.constant 0.000000e+00 : f32
    %362 = vector.broadcast %cst_139 : f32 to vector<16x16xf32>
    %363 = arith.minimumf %361, %362 : vector<16x16xf32>
    %364 = math.exp %363 : vector<16x16xf32>
    %365 = arith.mulf %364, %282 : vector<16x16xf32>
    %cst_140 = arith.constant dense<0.000000e+00> : vector<16xf32>
    %366 = vector.multi_reduction <add>, %365, %cst_140 [1] : vector<16x16xf32> to vector<16xf32>
    %367 = vector.shape_cast %366 : vector<16xf32> to vector<16x1xf32>
    %cst_141 = arith.constant 1.000000e-30 : f32
    %368 = vector.broadcast %cst_141 : f32 to vector<16x1xf32>
    %369 = arith.maximumf %367, %368 : vector<16x1xf32>
    %370 = tpu.reciprocal %369 {approx = true} : vector<16x1xf32> -> vector<16x1xf32>
    %371 = vector.broadcast %370 : vector<16x1xf32> to vector<16x16xf32>
    %372 = arith.mulf %365, %371 : vector<16x16xf32>
    %cst_142 = arith.constant dense<0.000000e+00> : vector<16x64xf32>
    %373 = tpu.matmul %372, %342, %cst_142 {dimension_numbers = #tpu.dot_dimension_numbers<[1], [0], [0], [1], [0, 0, 1, 1], [], []>} : vector<16x16xf32>, vector<16x64xf32>, vector<16x64xf32> -> vector<16x64xf32>
    %374 = vector.broadcast %345 : vector<1x64xf32> to vector<16x64xf32>
    %375 = arith.addf %373, %374 : vector<16x64xf32>
    %cst_143 = arith.constant 0.000000e+00 : f32
    %376 = vector.broadcast %cst_143 : f32 to vector<16x64xf32>
    %377 = arith.maximumf %375, %376 : vector<16x64xf32>
    %378 = arith.addf %333, %377 : vector<16x64xf32>
    %379 = vector.extract_strided_slice %335 {offsets = [0, 0], sizes = [1, 64], strides = [1, 1]} : vector<2x64xf32> to vector<1x64xf32>
    %380 = vector.broadcast %379 : vector<1x64xf32> to vector<16x64xf32>
    %381 = arith.mulf %378, %380 : vector<16x64xf32>
    %382 = vector.extract_strided_slice %335 {offsets = [1, 0], sizes = [1, 64], strides = [1, 1]} : vector<2x64xf32> to vector<1x64xf32>
    %383 = vector.broadcast %382 : vector<1x64xf32> to vector<16x64xf32>
    %384 = arith.addf %381, %383 : vector<16x64xf32>
    %cst_144 = arith.constant 0.000000e+00 : f32
    %385 = vector.broadcast %cst_144 : f32 to vector<16x64xf32>
    %386 = tpu.concatenate %384, %385 in 1 : vector<16x64xf32>, vector<16x64xf32> -> vector<16x128xf32>
    %c0_145 = arith.constant 0 : index
    %c0_146 = arith.constant 0 : index
    %c0_147 = arith.constant 0 : index
    %387 = vector.load %arg13[%c0_145, %c0_146, %c0_147] : memref<1x16x128xf32, #tpu.memory_space<vmem>>, vector<1x16x128xf32>
    %388 = vector.shape_cast %387 : vector<1x16x128xf32> to vector<16x128xf32>
    %389 = vector.shape_cast %386 : vector<16x128xf32> to vector<1x16x128xf32>
    tpu.vector_store %arg13[%c0_145, %c0_146, %c0_147], %389 {strides = array<i32>} : memref<1x16x128xf32, #tpu.memory_space<vmem>>, vector<1x16x128xf32>,
    return
  }
  func.func @transform_0(%arg0: i32) -> (i32, i32, i32) {
    %c0_i32 = arith.constant 0 : i32
    %c0_i32_0 = arith.constant 0 : i32
    %c0_i32_1 = arith.constant 0 : i32
    return %arg0, %c0_i32, %c0_i32_0 : i32, i32, i32
  }
  func.func @transform_1(%arg0: i32) -> (i32, i32, i32) {
    %c0_i32 = arith.constant 0 : i32
    %c0_i32_0 = arith.constant 0 : i32
    %c0_i32_1 = arith.constant 0 : i32
    %c0_i32_2 = arith.constant 0 : i32
    return %c0_i32, %c0_i32_0, %c0_i32_1 : i32, i32, i32
  }
  func.func @transform_2(%arg0: i32) -> (i32, i32, i32) {
    %c0_i32 = arith.constant 0 : i32
    %c0_i32_0 = arith.constant 0 : i32
    %c0_i32_1 = arith.constant 0 : i32
    %c0_i32_2 = arith.constant 0 : i32
    return %c0_i32, %c0_i32_0, %c0_i32_1 : i32, i32, i32
  }
  func.func @transform_3(%arg0: i32) -> (i32, i32, i32, i32) {
    %c0_i32 = arith.constant 0 : i32
    %c0_i32_0 = arith.constant 0 : i32
    %c0_i32_1 = arith.constant 0 : i32
    %c0_i32_2 = arith.constant 0 : i32
    return %arg0, %c0_i32, %c0_i32_0, %c0_i32_1 : i32, i32, i32, i32
  }
  func.func @transform_4(%arg0: i32) -> (i32, i32, i32) {
    %c0_i32 = arith.constant 0 : i32
    %c0_i32_0 = arith.constant 0 : i32
    %c0_i32_1 = arith.constant 0 : i32
    %c0_i32_2 = arith.constant 0 : i32
    return %c0_i32, %c0_i32_0, %c0_i32_1 : i32, i32, i32
  }
  func.func @transform_5(%arg0: i32) -> (i32, i32, i32) {
    %c0_i32 = arith.constant 0 : i32
    %c0_i32_0 = arith.constant 0 : i32
    %c0_i32_1 = arith.constant 0 : i32
    return %arg0, %c0_i32, %c0_i32_0 : i32, i32, i32
  }
  func.func @transform_6(%arg0: i32) -> (i32, i32) {
    %c0_i32 = arith.constant 0 : i32
    %c0_i32_0 = arith.constant 0 : i32
    %c0_i32_1 = arith.constant 0 : i32
    return %c0_i32, %c0_i32_0 : i32, i32
  }
  func.func @transform_7(%arg0: i32) -> (i32, i32) {
    %c0_i32 = arith.constant 0 : i32
    %c0_i32_0 = arith.constant 0 : i32
    %c0_i32_1 = arith.constant 0 : i32
    return %c0_i32, %c0_i32_0 : i32, i32
  }
  func.func @transform_8(%arg0: i32) -> (i32, i32, i32) {
    %c0_i32 = arith.constant 0 : i32
    %c0_i32_0 = arith.constant 0 : i32
    %c0_i32_1 = arith.constant 0 : i32
    %c0_i32_2 = arith.constant 0 : i32
    return %c0_i32, %c0_i32_0, %c0_i32_1 : i32, i32, i32
  }
  func.func @transform_9(%arg0: i32) -> (i32, i32, i32) {
    %c0_i32 = arith.constant 0 : i32
    %c0_i32_0 = arith.constant 0 : i32
    %c0_i32_1 = arith.constant 0 : i32
    %c0_i32_2 = arith.constant 0 : i32
    return %c0_i32, %c0_i32_0, %c0_i32_1 : i32, i32, i32
  }
  func.func @transform_10(%arg0: i32) -> (i32, i32, i32) {
    %c0_i32 = arith.constant 0 : i32
    %c0_i32_0 = arith.constant 0 : i32
    %c0_i32_1 = arith.constant 0 : i32
    return %arg0, %c0_i32, %c0_i32_0 : i32, i32, i32
  }
  func.func @transform_11(%arg0: i32) -> (i32, i32, i32) {
    %c0_i32 = arith.constant 0 : i32
    %c0_i32_0 = arith.constant 0 : i32
    %c0_i32_1 = arith.constant 0 : i32
    %c0_i32_2 = arith.constant 0 : i32
    return %c0_i32, %c0_i32_0, %c0_i32_1 : i32, i32, i32
  }
  func.func @transform_12(%arg0: i32) -> (i32, i32, i32) {
    %c0_i32 = arith.constant 0 : i32
    %c0_i32_0 = arith.constant 0 : i32
    %c0_i32_1 = arith.constant 0 : i32
    return %arg0, %c0_i32, %c0_i32_0 : i32, i32, i32
  }
}

</mosaic_0001>

<llo_original>
// kernel: hetero_dynamic_gnn_forward.1
$region0: #{hetero_dynamic_gnn_forward.1}
  #allocation0 [shape = 'u32[]', space=smem, size = 0x4, offset = 0x4, fixed_abs, tag = 'smem constant byte address 0x4 - core index']
  #allocation1 [shape = 'u32[144,128]{1,0:T(1,128)}', space=vmem, size = 0x12000, scoped, tag = 'internal scratch']
  %s0 = inlined_call_operand.vmem [shape: f32[8,16,64], index: 0, kind: input, shape index: {}]
  %s1 = inlined_call_operand.hbm [shape: f32[2,64,512], index: 1, kind: input, shape index: {}]
  %s2 = inlined_call_operand.vmem [shape: f32[2,3,64], index: 2, kind: input, shape index: {}]
  %s3 = inlined_call_operand.hbm [shape: f32[8,3,16,16], index: 3, kind: input, shape index: {}]
  %s4 = inlined_call_operand.vmem [shape: f32[2,2,64], index: 4, kind: input, shape index: {}]
  %s5 = inlined_call_operand.vmem [shape: s32[8,16,1], index: 5, kind: input, shape index: {}]
  %s6 = inlined_call_operand.vmem [shape: f32[16,64], index: 6, kind: input, shape index: {}]
  %s7 = inlined_call_operand.vmem [shape: f32[2,64], index: 7, kind: input, shape index: {}]
  %s8 = inlined_call_operand.hbm [shape: f32[2,64,256], index: 8, kind: input, shape index: {}]
  %s9 = inlined_call_operand.vmem [shape: f32[2,1,64], index: 9, kind: input, shape index: {}]
  %s10 = inlined_call_operand.hbm [shape: f32[8,16,16], index: 10, kind: input, shape index: {}]
  %s11 = inlined_call_operand.vmem [shape: f32[2,2,64], index: 11, kind: input, shape index: {}]
  %s12 = inlined_call_operand.hbm [shape: f32[8,16,128], index: 12, kind: output, shape index: {}]
  %s13 = sld [smem:[#allocation0]]
  $region97: #{hetero_dynamic_gnn_forward.1} parent=0
    _
  %s15 = ssub.s32 1, %s13
  %s16 = scalar_select 0, %s15, %s13
  $region1: #{hetero_dynamic_gnn_forward.1} parent=0
    #allocation2 [shape = 'u8[262144]{0}', space=vmem, size = 0x40000, scoped, tag = 'input window, operand 1, single buffered']
    #allocation3 [shape = 's32[2]{0}', space=sflag, size = 0x8, scoped, tag = 'scoped memory for hetero_dynamic_gnn_forward.1']
    #allocation4 [shape = 's32[2]{0}', space=sflag, size = 0x8, scoped, tag = 'scoped memory for hetero_dynamic_gnn_forward.1']
    #allocation5 [shape = 'u8[49152]{0}', space=vmem, size = 0xc000, scoped, tag = 'input window, operand 3']
    #allocation6 [shape = 's32[2]{0}', space=sflag, size = 0x8, scoped, tag = 'scoped memory for hetero_dynamic_gnn_forward.1']
    #allocation7 [shape = 'u8[131072]{0}', space=vmem, size = 0x20000, scoped, tag = 'input window, operand 8, single buffered']
    #allocation8 [shape = 'u8[16384]{0}', space=vmem, size = 0x4000, scoped, tag = 'input window, operand 10']
    #allocation9 [shape = 's32[2]{0}', space=sflag, size = 0x8, scoped, tag = 'scoped memory for hetero_dynamic_gnn_forward.1']
    #allocation10 [shape = 'u8[16384]{0}', space=vmem, size = 0x4000, scoped, tag = 'output window, operand 0']
    %17 = vsyncpa [#allocation3], 0
    %18 = vsyncpa [#allocation6], 0
    %s19 = scalar_lea.sflag [#allocation6], 1
    %20 = vsyncpa %s19, 0
    %21 = vsyncpa [#allocation9], 0
    %s22 = scalar_lea.sflag [#allocation9], 1
    %23 = vsyncpa %s22, 0
    %24 = vsyncpa [#allocation4], 0
    %s25 = scalar_lea.sflag [#allocation4], 1
    %26 = vsyncpa %s25, 0
    loop: start=0, step=1, limit=10
    $region2: #{hetero_dynamic_gnn_forward.1} parent=1 // loop_pre_header
      _
    $region3: #{hetero_dynamic_gnn_forward.1} parent=1 // loop_header
      %s28 = sphi 0, %s32
      %p29 = scmp.ge.s32.totalorder %s28, 10
      %s38 = sphi 0, %s40
      %s41 = sphi 0, %s38
      %s42 = sphi 0, %s41
      %s58 = sphi 0, %s42
      %s62 = sphi 0, %s62
      %s64 = sphi 0, %s62
      %s65 = sphi 0, %s64
      %s79 = sphi 0, %s65
      %s83 = sphi 0, %s83
      %s85 = sphi 0, %s83
      %s86 = sphi 0, %s85
      %s100 = sphi 0, %s86
      %s106 = sphi 0, %s108
      %s109 = sphi 0, %s106
      %s110 = sphi 0, %s109
      %s126 = sphi 0, %s110
      %s130 = sphi 0, %s130
      %s132 = sphi 0, %s130
      %s133 = sphi 0, %s132
      %s147 = sphi 0, %s133
      %s153 = sphi 0, %s155
      %s156 = sphi 0, %s153
      %s157 = sphi 0, %s156
      %s173 = sphi 0, %s157
      %s177 = sphi 0, %s177
      %s179 = sphi 0, %s177
      %s180 = sphi 0, %s179
      %s194 = sphi 0, %s180
      %s198 = sphi 0, %s198
      %s200 = sphi 0, %s198
      %s201 = sphi 0, %s200
      %s215 = sphi 0, %s201
      %s219 = sphi 0, %s219
      %s221 = sphi 0, %s219
      %s222 = sphi 0, %s221
      %s236 = sphi 0, %s222
      %s240 = sphi 0, %s240
      %s242 = sphi 0, %s240
      %s243 = sphi 0, %s242
      %s257 = sphi 0, %s243
      %s263 = sphi 0, %s265
      %s266 = sphi 0, %s263
      %s267 = sphi 0, %s266
      %s283 = sphi 0, %s267
      %s287 = sphi 0, %s287
      %s289 = sphi 0, %s287
      %s290 = sphi 0, %s289
      %s304 = sphi 0, %s290
      %s310 = sphi 0, %s312
      %s313 = sphi 0, %s310
      %s314 = sphi 0, %s313
      %s330 = sphi 0, %s314
    $region4: #{hetero_dynamic_gnn_forward.1} parent=1 // loop_header_branch
      %31 = sbr.rel (%p29) target = $region8
    $region5: #{hetero_dynamic_gnn_forward.1} parent=1 // loop_body
      %s33 = ssub.s32 %s28, 1
      %s34 = ssub.s32 %s28, 2
      %s35 = sadd.s32 %s28, 1
      %s36 = ssub.s32 %s28, %s35
      %p37 = scmp.eq.s32.totalorder %s36, 0
      %s39 = sadd.s32 %s38, 1
      %s40 = scalar_select %p37, %s38, %s39
      %p43 = pneg %p37
      %p44 = scmp.eq.s32.totalorder %s28, 7
      %p45 = por %p43, %p44
      %p46 = scmp.ne.s32.totalorder %s38, %s41
      %p47 = scmp.eq.s32.totalorder %s28, 0
      %p48 = por %p46, %p47
      %p49 = scmp.ne.s32.totalorder %s38, %s41
      %p50 = scmp.eq.s32.totalorder %s33, 7
      %p51 = por %p49, %p50
      %p52 = scmp.ne.s32.totalorder %s41, %s42
      %p53 = scmp.eq.s32.totalorder %s33, 0
      %p54 = por %p52, %p53
      %p55 = scmp.ne.s32.totalorder %s41, %s42
      %p56 = scmp.eq.s32.totalorder %s34, 7
      %p57 = por %p55, %p56
      %p59 = scmp.ne.s32.totalorder %s42, %s58
      %p60 = scmp.eq.s32.totalorder %s34, 0
      %p61 = por %p59, %p60
      %s63 = sadd.s32 %s62, 1
      %p66 = scmp.eq.s32.totalorder %s28, 7
      %p67 = scmp.ne.s32.totalorder %s62, %s64
      %p68 = scmp.eq.s32.totalorder %s28, 0
      %p69 = por %p67, %p68
      %p70 = scmp.ne.s32.totalorder %s62, %s64
      %p71 = scmp.eq.s32.totalorder %s33, 7
      %p72 = por %p70, %p71
      %p73 = scmp.ne.s32.totalorder %s64, %s65
      %p74 = scmp.eq.s32.totalorder %s33, 0
      %p75 = por %p73, %p74
      %p76 = scmp.ne.s32.totalorder %s64, %s65
      %p77 = scmp.eq.s32.totalorder %s34, 7
      %p78 = por %p76, %p77
      %p80 = scmp.ne.s32.totalorder %s65, %s79
      %p81 = scmp.eq.s32.totalorder %s34, 0
      %p82 = por %p80, %p81
      %s84 = sadd.s32 %s83, 1
      %p87 = scmp.eq.s32.totalorder %s28, 7
      %p88 = scmp.ne.s32.totalorder %s83, %s85
      %p89 = scmp.eq.s32.totalorder %s28, 0
      %p90 = por %p88, %p89
      %p91 = scmp.ne.s32.totalorder %s83, %s85
      %p92 = scmp.eq.s32.totalorder %s33, 7
      %p93 = por %p91, %p92
      %p94 = scmp.ne.s32.totalorder %s85, %s86
      %p95 = scmp.eq.s32.totalorder %s33, 0
      %p96 = por %p94, %p95
      %p97 = scmp.ne.s32.totalorder %s85, %s86
      %p98 = scmp.eq.s32.totalorder %s34, 7
      %p99 = por %p97, %p98
      %p101 = scmp.ne.s32.totalorder %s86, %s100
      %p102 = scmp.eq.s32.totalorder %s34, 0
      %p103 = por %p101, %p102
      %s104 = ssub.s32 %s28, %s35
      %p105 = scmp.eq.s32.totalorder %s104, 0
      %s107 = sadd.s32 %s106, 1
      %s108 = scalar_select %p105, %s106, %s107
      %p111 = pneg %p105
      %p112 = scmp.eq.s32.totalorder %s28, 7
      %p113 = por %p111, %p112
      %p114 = scmp.ne.s32.totalorder %s106, %s109
      %p115 = scmp.eq.s32.totalorder %s28, 0
      %p116 = por %p114, %p115
      %p117 = scmp.ne.s32.totalorder %s106, %s109
      %p118 = scmp.eq.s32.totalorder %s33, 7
      %p119 = por %p117, %p118
      %p120 = scmp.ne.s32.totalorder %s109, %s110
      %p121 = scmp.eq.s32.totalorder %s33, 0
      %p122 = por %p120, %p121
      %p123 = scmp.ne.s32.totalorder %s109, %s110
      %p124 = scmp.eq.s32.totalorder %s34, 7
      %p125 = por %p123, %p124
      %p127 = scmp.ne.s32.totalorder %s110, %s126
      %p128 = scmp.eq.s32.totalorder %s34, 0
      %p129 = por %p127, %p128
      %s131 = sadd.s32 %s130, 1
      %p134 = scmp.eq.s32.totalorder %s28, 7
      %p135 = scmp.ne.s32.totalorder %s130, %s132
      %p136 = scmp.eq.s32.totalorder %s28, 0
      %p137 = por %p135, %p136
      %p138 = scmp.ne.s32.totalorder %s130, %s132
      %p139 = scmp.eq.s32.totalorder %s33, 7
      %p140 = por %p138, %p139
      %p141 = scmp.ne.s32.totalorder %s132, %s133
      %p142 = scmp.eq.s32.totalorder %s33, 0
      %p143 = por %p141, %p142
      %p144 = scmp.ne.s32.totalorder %s132, %s133
      %p145 = scmp.eq.s32.totalorder %s34, 7
      %p146 = por %p144, %p145
      %p148 = scmp.ne.s32.totalorder %s133, %s147
      %p149 = scmp.eq.s32.totalorder %s34, 0
      %p150 = por %p148, %p149
      %s151 = ssub.s32 %s28, %s35
      %p152 = scmp.eq.s32.totalorder %s151, 0
      %s154 = sadd.s32 %s153, 1
      %s155 = scalar_select %p152, %s153, %s154
      %p158 = pneg %p152
      %p159 = scmp.eq.s32.totalorder %s28, 7
      %p160 = por %p158, %p159
      %p161 = scmp.ne.s32.totalorder %s153, %s156
      %p162 = scmp.eq.s32.totalorder %s28, 0
      %p163 = por %p161, %p162
      %p164 = scmp.ne.s32.totalorder %s153, %s156
      %p165 = scmp.eq.s32.totalorder %s33, 7
      %p166 = por %p164, %p165
      %p167 = scmp.ne.s32.totalorder %s156, %s157
      %p168 = scmp.eq.s32.totalorder %s33, 0
      %p169 = por %p167, %p168
      %p170 = scmp.ne.s32.totalorder %s156, %s157
      %p171 = scmp.eq.s32.totalorder %s34, 7
      %p172 = por %p170, %p171
      %p174 = scmp.ne.s32.totalorder %s157, %s173
      %p175 = scmp.eq.s32.totalorder %s34, 0
      %p176 = por %p174, %p175
      %s178 = sadd.s32 %s177, 1
      %p181 = scmp.eq.s32.totalorder %s28, 7
      %p182 = scmp.ne.s32.totalorder %s177, %s179
      %p183 = scmp.eq.s32.totalorder %s28, 0
      %p184 = por %p182, %p183
      %p185 = scmp.ne.s32.totalorder %s177, %s179
      %p186 = scmp.eq.s32.totalorder %s33, 7
      %p187 = por %p185, %p186
      %p188 = scmp.ne.s32.totalorder %s179, %s180
      %p189 = scmp.eq.s32.totalorder %s33, 0
      %p190 = por %p188, %p189
      %p191 = scmp.ne.s32.totalorder %s179, %s180
      %p192 = scmp.eq.s32.totalorder %s34, 7
      %p193 = por %p191, %p192
      %p195 = scmp.ne.s32.totalorder %s180, %s194
      %p196 = scmp.eq.s32.totalorder %s34, 0
      %p197 = por %p195, %p196
      %s199 = sadd.s32 %s198, 1
      %p202 = scmp.eq.s32.totalorder %s28, 7
      %p203 = scmp.ne.s32.totalorder %s198, %s200
      %p204 = scmp.eq.s32.totalorder %s28, 0
      %p205 = por %p203, %p204
      %p206 = scmp.ne.s32.totalorder %s198, %s200
      %p207 = scmp.eq.s32.totalorder %s33, 7
      %p208 = por %p206, %p207
      %p209 = scmp.ne.s32.totalorder %s200, %s201
      %p210 = scmp.eq.s32.totalorder %s33, 0
      %p211 = por %p209, %p210
      %p212 = scmp.ne.s32.totalorder %s200, %s201
      %p213 = scmp.eq.s32.totalorder %s34, 7
      %p214 = por %p212, %p213
      %p216 = scmp.ne.s32.totalorder %s201, %s215
      %p217 = scmp.eq.s32.totalorder %s34, 0
      %p218 = por %p216, %p217
      %s220 = sadd.s32 %s219, 1
      %p223 = scmp.eq.s32.totalorder %s28, 7
      %p224 = scmp.ne.s32.totalorder %s219, %s221
      %p225 = scmp.eq.s32.totalorder %s28, 0
      %p226 = por %p224, %p225
      %p227 = scmp.ne.s32.totalorder %s219, %s221
      %p228 = scmp.eq.s32.totalorder %s33, 7
      %p229 = por %p227, %p228
      %p230 = scmp.ne.s32.totalorder %s221, %s222
      %p231 = scmp.eq.s32.totalorder %s33, 0
      %p232 = por %p230, %p231
      %p233 = scmp.ne.s32.totalorder %s221, %s222
      %p234 = scmp.eq.s32.totalorder %s34, 7
      %p235 = por %p233, %p234
      %p237 = scmp.ne.s32.totalorder %s222, %s236
      %p238 = scmp.eq.s32.totalorder %s34, 0
      %p239 = por %p237, %p238
      %s241 = sadd.s32 %s240, 1
      %p244 = scmp.eq.s32.totalorder %s28, 7
      %p245 = scmp.ne.s32.totalorder %s240, %s242
      %p246 = scmp.eq.s32.totalorder %s28, 0
      %p247 = por %p245, %p246
      %p248 = scmp.ne.s32.totalorder %s240, %s242
      %p249 = scmp.eq.s32.totalorder %s33, 7
      %p250 = por %p248, %p249
      %p251 = scmp.ne.s32.totalorder %s242, %s243
      %p252 = scmp.eq.s32.totalorder %s33, 0
      %p253 = por %p251, %p252
      %p254 = scmp.ne.s32.totalorder %s242, %s243
      %p255 = scmp.eq.s32.totalorder %s34, 7
      %p256 = por %p254, %p255
      %p258 = scmp.ne.s32.totalorder %s243, %s257
      %p259 = scmp.eq.s32.totalorder %s34, 0
      %p260 = por %p258, %p259
      %s261 = ssub.s32 %s28, %s35
      %p262 = scmp.eq.s32.totalorder %s261, 0
      %s264 = sadd.s32 %s263, 1
      %s265 = scalar_select %p262, %s263, %s264
      %p268 = pneg %p262
      %p269 = scmp.eq.s32.totalorder %s28, 7
      %p270 = por %p268, %p269
      %p271 = scmp.ne.s32.totalorder %s263, %s266
      %p272 = scmp.eq.s32.totalorder %s28, 0
      %p273 = por %p271, %p272
      %p274 = scmp.ne.s32.totalorder %s263, %s266
      %p275 = scmp.eq.s32.totalorder %s33, 7
      %p276 = por %p274, %p275
      %p277 = scmp.ne.s32.totalorder %s266, %s267
      %p278 = scmp.eq.s32.totalorder %s33, 0
      %p279 = por %p277, %p278
      %p280 = scmp.ne.s32.totalorder %s266, %s267
      %p281 = scmp.eq.s32.totalorder %s34, 7
      %p282 = por %p280, %p281
      %p284 = scmp.ne.s32.totalorder %s267, %s283
      %p285 = scmp.eq.s32.totalorder %s34, 0
      %p286 = por %p284, %p285
      %s288 = sadd.s32 %s287, 1
      %p291 = scmp.eq.s32.totalorder %s28, 7
      %p292 = scmp.ne.s32.totalorder %s287, %s289
      %p293 = scmp.eq.s32.totalorder %s28, 0
      %p294 = por %p292, %p293
      %p295 = scmp.ne.s32.totalorder %s287, %s289
      %p296 = scmp.eq.s32.totalorder %s33, 7
      %p297 = por %p295, %p296
      %p298 = scmp.ne.s32.totalorder %s289, %s290
      %p299 = scmp.eq.s32.totalorder %s33, 0
      %p300 = por %p298, %p299
      %p301 = scmp.ne.s32.totalorder %s289, %s290
      %p302 = scmp.eq.s32.totalorder %s34, 7
      %p303 = por %p301, %p302
      %p305 = scmp.ne.s32.totalorder %s290, %s304
      %p306 = scmp.eq.s32.totalorder %s34, 0
      %p307 = por %p305, %p306
      %s308 = ssub.s32 %s28, %s35
      %p309 = scmp.eq.s32.totalorder %s308, 0
      %s311 = sadd.s32 %s310, 1
      %s312 = scalar_select %p309, %s310, %s311
      %p315 = pneg %p309
      %p316 = scmp.eq.s32.totalorder %s28, 7
      %p317 = por %p315, %p316
      %p318 = scmp.ne.s32.totalorder %s310, %s313
      %p319 = scmp.eq.s32.totalorder %s28, 0
      %p320 = por %p318, %p319
      %p321 = scmp.ne.s32.totalorder %s310, %s313
      %p322 = scmp.eq.s32.totalorder %s33, 7
      %p323 = por %p321, %p322
      %p324 = scmp.ne.s32.totalorder %s313, %s314
      %p325 = scmp.eq.s32.totalorder %s33, 0
      %p326 = por %p324, %p325
      %p327 = scmp.ne.s32.totalorder %s313, %s314
      %p328 = scmp.eq.s32.totalorder %s34, 7
      %p329 = por %p327, %p328
      %p331 = scmp.ne.s32.totalorder %s314, %s330
      %p332 = scmp.eq.s32.totalorder %s34, 0
      %p333 = por %p331, %p332
      %p334 = scmp.le.s32.totalorder 1, %s28
      %p335 = scmp.lt.s32.totalorder %s28, 9
      %p336 = pnand %p334, %p335
      %p337 = pneg %p336
      // Predicated region
      $region9: #{hetero_dynamic_gnn_forward.1} parent=5 // pred_check
        _
      $region10: #{hetero_dynamic_gnn_forward.1} parent=5 // pred_check_branch
        %339 = sbr.rel (%p336) target = $region12
      $region11: #{hetero_dynamic_gnn_forward.1} parent=5 // pred_region
        %s340 = ssub.s32 %s28, 1
        // Predicated region
        $region13: #{hetero_dynamic_gnn_forward.1} parent=11 // pred_check
          %p341 = pneg %p75
        $region14: #{hetero_dynamic_gnn_forward.1} parent=11 // pred_check_branch
          %343 = sbr.rel (%p341) target = $region16
        $region15: #{hetero_dynamic_gnn_forward.1} parent=11 // pred_region
          %s345 = ssub.s32 8192, 8192
          %346 = vsyncadd [#allocation3], %s345
          %s347 = sshll.u32 [#allocation2], 4
          %s348 = int_to_ptr.vmem [resolvable:$true] %s347
          %353 = dma.hbm_to_vmem [thread:$0]  %s1, 8192, %s348, [#allocation3], 512, 512, 32
        $region16: #{hetero_dynamic_gnn_forward.1} parent=11 // pred_fallthru
          _
        // Predicated region
        $region17: #{hetero_dynamic_gnn_forward.1} parent=11 // pred_check
          %p354 = pneg %p96
        $region18: #{hetero_dynamic_gnn_forward.1} parent=11 // pred_check_branch
          %356 = sbr.rel (%p354) target = $region20
        $region19: #{hetero_dynamic_gnn_forward.1} parent=11 // pred_region
          _
        $region20: #{hetero_dynamic_gnn_forward.1} parent=11 // pred_fallthru
          _
        // Predicated region
        $region21: #{hetero_dynamic_gnn_forward.1} parent=11 // pred_check
          %p357 = pneg %p143
        $region22: #{hetero_dynamic_gnn_forward.1} parent=11 // pred_check_branch
          %359 = sbr.rel (%p357) target = $region24
        $region23: #{hetero_dynamic_gnn_forward.1} parent=11 // pred_region
          _
        $region24: #{hetero_dynamic_gnn_forward.1} parent=11 // pred_fallthru
          _
        // Predicated region
        $region25: #{hetero_dynamic_gnn_forward.1} parent=11 // pred_check
          %p360 = pneg %p190
        $region26: #{hetero_dynamic_gnn_forward.1} parent=11 // pred_check_branch
          %362 = sbr.rel (%p360) target = $region28
        $region27: #{hetero_dynamic_gnn_forward.1} parent=11 // pred_region
          _
        $region28: #{hetero_dynamic_gnn_forward.1} parent=11 // pred_fallthru
          _
        // Predicated region
        $region29: #{hetero_dynamic_gnn_forward.1} parent=11 // pred_check
          %p363 = pneg %p211
        $region30: #{hetero_dynamic_gnn_forward.1} parent=11 // pred_check_branch
          %365 = sbr.rel (%p363) target = $region32
        $region31: #{hetero_dynamic_gnn_forward.1} parent=11 // pred_region
          _
        $region32: #{hetero_dynamic_gnn_forward.1} parent=11 // pred_fallthru
          _
        // Predicated region
        $region33: #{hetero_dynamic_gnn_forward.1} parent=11 // pred_check
          %p366 = pneg %p232
        $region34: #{hetero_dynamic_gnn_forward.1} parent=11 // pred_check_branch
          %368 = sbr.rel (%p366) target = $region36
        $region35: #{hetero_dynamic_gnn_forward.1} parent=11 // pred_region
          %s370 = ssub.s32 4096, 4096
          %371 = vsyncadd [#allocation6], %s370
          %s372 = sshll.u32 [#allocation7], 4
          %s373 = int_to_ptr.vmem [resolvable:$true] %s372
          %378 = dma.hbm_to_vmem [thread:$0]  %s8, 4096, %s373, [#allocation6], 256, 256, 16
        $region36: #{hetero_dynamic_gnn_forward.1} parent=11 // pred_fallthru
          _
        // Predicated region
        $region37: #{hetero_dynamic_gnn_forward.1} parent=11 // pred_check
          %p379 = pneg %p253
        $region38: #{hetero_dynamic_gnn_forward.1} parent=11 // pred_check_branch
          %381 = sbr.rel (%p379) target = $region40
        $region39: #{hetero_dynamic_gnn_forward.1} parent=11 // pred_region
          _
        $region40: #{hetero_dynamic_gnn_forward.1} parent=11 // pred_fallthru
          _
        // Predicated region
        $region41: #{hetero_dynamic_gnn_forward.1} parent=11 // pred_check
          %p382 = pneg %p300
        $region42: #{hetero_dynamic_gnn_forward.1} parent=11 // pred_check_branch
          %384 = sbr.rel (%p382) target = $region44
        $region43: #{hetero_dynamic_gnn_forward.1} parent=11 // pred_region
          _
        $region44: #{hetero_dynamic_gnn_forward.1} parent=11 // pred_fallthru
          _
      $region12: #{hetero_dynamic_gnn_forward.1} parent=5 // pred_fallthru
        _
      %p385 = scmp.lt.s32.totalorder %s28, 8
      // Predicated region
      $region45: #{hetero_dynamic_gnn_forward.1} parent=5 // pred_check
        %p386 = pneg %p385
      $region46: #{hetero_dynamic_gnn_forward.1} parent=5 // pred_check_branch
        %388 = sbr.rel (%p386) target = $region48
      $region47: #{hetero_dynamic_gnn_forward.1} parent=5 // pred_region
        // Predicated region
        $region49: #{hetero_dynamic_gnn_forward.1} parent=47 // pred_check
          %p389 = pneg %p48
        $region50: #{hetero_dynamic_gnn_forward.1} parent=47 // pred_check_branch
          %391 = sbr.rel (%p389) target = $region52
        $region51: #{hetero_dynamic_gnn_forward.1} parent=47 // pred_region
          %p392 = scmp.lt.s32.totalorder %s28, 7
          %s393 = scalar_select %p392, %s28, 7
          %s394 = smul.addr %s393, 2
          %s395 = smul.addr %s394, 8
          %s396 = scalar_lea.vmem %s0, %s395
        $region52: #{hetero_dynamic_gnn_forward.1} parent=47 // pred_fallthru
          _
        // Predicated region
        $region53: #{hetero_dynamic_gnn_forward.1} parent=47 // pred_check
          %p397 = pneg %p116
        $region54: #{hetero_dynamic_gnn_forward.1} parent=47 // pred_check_branch
          %399 = sbr.rel (%p397) target = $region56
        $region55: #{hetero_dynamic_gnn_forward.1} parent=47 // pred_region
          %s400 = sand.u32 %s28, 1
          %s401 = scalar_lea.sflag [#allocation6], %s400
          %s402 = sand.u32 %s106, 1
          %s403 = smul.addr %s402, 48
          %s404 = scalar_lea.vmem [#allocation5], %s403
          %s406 = ssub.s32 768, 768
          %407 = vsyncadd %s401, %s406
          %s408 = smul.addr %s28, 6
          %s409 = smul.addr %s408, 128
          %s410 = scalar_lea.hbm %s3, %s409
          %s411 = sshll.u32 %s404, 4
          %s412 = int_to_ptr.vmem [resolvable:$true] %s411
          %417 = dma.hbm_to_vmem [thread:$0]  %s410, 768, %s412, %s401, 128, 128, 8
        $region56: #{hetero_dynamic_gnn_forward.1} parent=47 // pred_fallthru
          _
        // Predicated region
        $region57: #{hetero_dynamic_gnn_forward.1} parent=47 // pred_check
          %p418 = pneg %p163
        $region58: #{hetero_dynamic_gnn_forward.1} parent=47 // pred_check_branch
          %420 = sbr.rel (%p418) target = $region60
        $region59: #{hetero_dynamic_gnn_forward.1} parent=47 // pred_region
          %p421 = scmp.lt.s32.totalorder %s28, 7
          %s422 = scalar_select %p421, %s28, 7
          %s423 = smul.addr %s422, 2
          %s424 = smul.addr %s423, 8
          %s425 = scalar_lea.vmem %s5, %s424
        $region60: #{hetero_dynamic_gnn_forward.1} parent=47 // pred_fallthru
          _
        // Predicated region
        $region61: #{hetero_dynamic_gnn_forward.1} parent=47 // pred_check
          %p426 = pneg %p273
        $region62: #{hetero_dynamic_gnn_forward.1} parent=47 // pred_check_branch
          %428 = sbr.rel (%p426) target = $region64
        $region63: #{hetero_dynamic_gnn_forward.1} parent=47 // pred_region
          %s429 = sand.u32 %s263, 1
          %s430 = scalar_lea.sflag [#allocation9], %s429
          %s431 = sand.u32 %s263, 1
          %s432 = smul.addr %s431, 16
          %s433 = scalar_lea.vmem [#allocation8], %s432
          %s435 = ssub.s32 256, 256
          %436 = vsyncadd %s430, %s435
          %s437 = smul.addr %s28, 2
          %s438 = smul.addr %s437, 128
          %s439 = scalar_lea.hbm %s10, %s438
          %s440 = sshll.u32 %s433, 4
          %s441 = int_to_ptr.vmem [resolvable:$true] %s440
          %446 = dma.hbm_to_vmem [thread:$0]  %s439, 256, %s441, %s430, 128, 128, 8
        $region64: #{hetero_dynamic_gnn_forward.1} parent=47 // pred_fallthru
          _
      $region48: #{hetero_dynamic_gnn_forward.1} parent=5 // pred_fallthru
        _
      %p447 = scmp.le.s32.totalorder 1, %s28
      %p448 = scmp.lt.s32.totalorder %s28, 9
      %p449 = pnand %p447, %p448
      %p450 = pneg %p449
      // Predicated region
      $region65: #{hetero_dynamic_gnn_forward.1} parent=5 // pred_check
        _
      $region66: #{hetero_dynamic_gnn_forward.1} parent=5 // pred_check_branch
        %452 = sbr.rel (%p449) target = $region68
      $region67: #{hetero_dynamic_gnn_forward.1} parent=5 // pred_region
        %s453 = ssub.s32 %s28, 1
        // Predicated region
        $region69: #{hetero_dynamic_gnn_forward.1} parent=67 // pred_check
          %p454 = pneg %p75
        $region70: #{hetero_dynamic_gnn_forward.1} parent=67 // pred_check_branch
          %456 = sbr.rel (%p454) target = $region72
        $region71: #{hetero_dynamic_gnn_forward.1} parent=67 // pred_region
          %457 = dma.done [#allocation3], 8192
        $region72: #{hetero_dynamic_gnn_forward.1} parent=67 // pred_fallthru
          _
        %s458 = sand.u32 %s33, 1
        %s459 = scalar_lea.sflag [#allocation6], %s458
        %s460 = sand.u32 %s109, 1
        %s461 = smul.addr %s460, 48
        %s462 = scalar_lea.vmem [#allocation5], %s461
        // Predicated region
        $region73: #{hetero_dynamic_gnn_forward.1} parent=67 // pred_check
          %p463 = pneg %p122
        $region74: #{hetero_dynamic_gnn_forward.1} parent=67 // pred_check_branch
          %465 = sbr.rel (%p463) target = $region76
        $region75: #{hetero_dynamic_gnn_forward.1} parent=67 // pred_region
          %466 = dma.done %s459, 768
        $region76: #{hetero_dynamic_gnn_forward.1} parent=67 // pred_fallthru
          _
        // Predicated region
        $region77: #{hetero_dynamic_gnn_forward.1} parent=67 // pred_check
          %p467 = pneg %p232
        $region78: #{hetero_dynamic_gnn_forward.1} parent=67 // pred_check_branch
          %469 = sbr.rel (%p467) target = $region80
        $region79: #{hetero_dynamic_gnn_forward.1} parent=67 // pred_region
          %470 = dma.done [#allocation6], 4096
        $region80: #{hetero_dynamic_gnn_forward.1} parent=67 // pred_fallthru
          _
        %s471 = sand.u32 %s266, 1
        %s472 = scalar_lea.sflag [#allocation9], %s471
        %s473 = sand.u32 %s266, 1
        %s474 = smul.addr %s473, 16
        %s475 = scalar_lea.vmem [#allocation8], %s474
        // Predicated region
        $region81: #{hetero_dynamic_gnn_forward.1} parent=67 // pred_check
          %p476 = pneg %p279
        $region82: #{hetero_dynamic_gnn_forward.1} parent=67 // pred_check_branch
          %478 = sbr.rel (%p476) target = $region84
        $region83: #{hetero_dynamic_gnn_forward.1} parent=67 // pred_region
          %479 = dma.done %s472, 256
        $region84: #{hetero_dynamic_gnn_forward.1} parent=67 // pred_fallthru
          _
        %p480 = scmp.lt.s32.totalorder %s33, 7
        %s481 = scalar_select %p480, %s33, 7
        %s482 = smul.addr %s481, 2
        %s483 = smul.addr %s482, 8
        %s484 = scalar_lea.vmem %s0, %s483
        %p485 = pneg %p54
        %p486 = pneg %p51
        %p487 = pneg %p75
        %p488 = pneg %p72
        %p489 = pneg %p96
        %p490 = pneg %p93
        %s491 = sand.u32 %s33, 1
        %s492 = scalar_lea.sflag [#allocation6], %s491
        %s493 = sand.u32 %s109, 1
        %s494 = smul.addr %s493, 48
        %s495 = scalar_lea.vmem [#allocation5], %s494
        %p496 = pneg %p122
        %p497 = pneg %p119
        %p498 = pneg %p143
        %p499 = pneg %p140
        %p500 = scmp.lt.s32.totalorder %s33, 7
        %s501 = scalar_select %p500, %s33, 7
        %s502 = smul.addr %s501, 2
        %s503 = smul.addr %s502, 8
        %s504 = scalar_lea.vmem %s5, %s503
        %p505 = pneg %p169
        %p506 = pneg %p166
        %p507 = pneg %p190
        %p508 = pneg %p187
        %p509 = pneg %p211
        %p510 = pneg %p208
        %p511 = pneg %p232
        %p512 = pneg %p229
        %p513 = pneg %p253
        %p514 = pneg %p250
        %s515 = sand.u32 %s266, 1
        %s516 = scalar_lea.sflag [#allocation9], %s515
        %s517 = sand.u32 %s266, 1
        %s518 = smul.addr %s517, 16
        %s519 = scalar_lea.vmem [#allocation8], %s518
        %p520 = pneg %p279
        %p521 = pneg %p276
        %p522 = pneg %p300
        %p523 = pneg %p297
        %p524 = pneg %p326
        %p525 = pneg %p323
        %s526 = sand.u32 %s313, 1
        %s527 = scalar_lea.sflag [#allocation4], %s526
        %s528 = sand.u32 %s313, 1
        %s529 = smul.addr %s528, 16
        %s530 = scalar_lea.vmem [#allocation10], %s529
        %p531 = scmp.lt.s32.totalorder %s33, 7
        %s532 = scalar_select %p531, %s33, 7
        %s533 = smul.addr %s532, 2
        %s534 = smul.addr %s533, 8
        %s535 = scalar_lea.vmem %s0, %s534
        %p536 = scmp.lt.s32.totalorder %s33, 7
        %s537 = scalar_select %p536, %s33, 7
        %s538 = smul.addr %s537, 2
        %s539 = smul.addr %s538, 8
        %s540 = scalar_lea.vmem %s5, %s539
        %v541 = vld [vmem:[%s535] sm:$0xff]
        %v542 = vld [vmem:[%s535 + $0x8] sm:$0xff]
        %v543 = vld [vmem:[%s462] sm:$0xff]
        %v544 = vld [vmem:[%s462 + $0x8] sm:$0xff]
        %s545 = scalar_lea.vmem %s462, 16 [#allocation5]
        %v546 = vld [vmem:[%s545] sm:$0xff]
        %v547 = vld [vmem:[%s545 + $0x8] sm:$0xff]
        %s548 = scalar_lea.vmem %s462, 32 [#allocation5]
        %v549 = vld [vmem:[%s548] sm:$0xff]
        %v550 = vld [vmem:[%s548 + $0x8] sm:$0xff]
        %v551 = vld [vmem:[%s2] sm:$0x7]
        %v552 = vld [vmem:[%s4] sm:$0x3]
        %v553 = vld [vmem:[#allocation2] sm:$0xff]
        %v554 = vld [vmem:[#allocation2 + $0x8] sm:$0xff]
        %v555 = vld [vmem:[#allocation2 + $0x10] sm:$0xff]
        %v556 = vld [vmem:[#allocation2 + $0x18] sm:$0xff]
        %v557 = vld [vmem:[#allocation2 + $0x20] sm:$0xff]
        %v558 = vld [vmem:[#allocation2 + $0x28] sm:$0xff]
        %v559 = vld [vmem:[#allocation2 + $0x30] sm:$0xff]
        %v560 = vld [vmem:[#allocation2 + $0x38] sm:$0xff]
        %v561 = vld [vmem:[#allocation2 + $0x40] sm:$0xff]
        %v562 = vld [vmem:[#allocation2 + $0x48] sm:$0xff]
        %v563 = vld [vmem:[#allocation2 + $0x50] sm:$0xff]
        %v564 = vld [vmem:[#allocation2 + $0x58] sm:$0xff]
        %v565 = vld [vmem:[#allocation2 + $0x60] sm:$0xff]
        %v566 = vld [vmem:[#allocation2 + $0x68] sm:$0xff]
        %v567 = vld [vmem:[#allocation2 + $0x70] sm:$0xff]
        %v568 = vld [vmem:[#allocation2 + $0x78] sm:$0xff]
        %v569 = vld [vmem:[#allocation2 + $0x80] sm:$0xff]
        %v570 = vld [vmem:[#allocation2 + $0x88] sm:$0xff]
        %v571 = vld [vmem:[#allocation2 + $0x90] sm:$0xff]
        %v572 = vld [vmem:[#allocation2 + $0x98] sm:$0xff]
        %v573 = vld [vmem:[#allocation2 + $0xa0] sm:$0xff]
        %v574 = vld [vmem:[#allocation2 + $0xa8] sm:$0xff]
        %v575 = vld [vmem:[#allocation2 + $0xb0] sm:$0xff]
        %v576 = vld [vmem:[#allocation2 + $0xb8] sm:$0xff]
        %v577 = vld [vmem:[#allocation2 + $0xc0] sm:$0xff]
        %v578 = vld [vmem:[#allocation2 + $0xc8] sm:$0xff]
        %v579 = vld [vmem:[#allocation2 + $0xd0] sm:$0xff]
        %v580 = vld [vmem:[#allocation2 + $0xd8] sm:$0xff]
        %v581 = vld [vmem:[#allocation2 + $0xe0] sm:$0xff]
        %v582 = vld [vmem:[#allocation2 + $0xe8] sm:$0xff]
        %v583 = vld [vmem:[#allocation2 + $0xf0] sm:$0xff]
        %v584 = vld [vmem:[#allocation2 + $0xf8] sm:$0xff]
        %vm585 = vcmask 523264
        %v587 = vsel %vm585, %v541, 0
        %v590 = vsel %vm585, %v542, 0
        %592 = vmatprep.subr.mxu0 %v554
        %593 = vmatpush1.msra.mxu0 %v553
        %594 = vmatprep.subr.mxu0 %v558
        %595 = vmatpush1.msra.mxu0 %v557
        %596 = vmatprep.subr.mxu0 %v562
        %597 = vmatpush1.msra.mxu0 %v561
        %598 = vmatprep.subr.mxu0 %v566
        %599 = vmatpush1.msra.mxu0 %v565
        %600 = vmatprep.subr.mxu0 %v570
        %601 = vmatpush1.msra.mxu0 %v569
        %602 = vmatprep.subr.mxu0 %v574
        %603 = vmatpush1.msra.mxu0 %v573
        %604 = vmatprep.subr.mxu0 %v578
        %605 = vmatpush1.msra.mxu0 %v577
        %606 = vmatprep.subr.mxu0 %v582
        %607 = vmatpush1.msra.mxu0 %v581
        %608 = vmatprep.subr.mxu0 0.0
        %609 = vmatpush1.msra.mxu0 0.0
        %610 = vmatprep.subr.mxu0 0.0
        %611 = vmatpush1.msra.mxu0 0.0
        %612 = vmatprep.subr.mxu0 0.0
        %613 = vmatpush1.msra.mxu0 0.0
        %614 = vmatprep.subr.mxu0 0.0
        %615 = vmatpush1.msra.mxu0 0.0
        %616 = vmatprep.subr.mxu0 0.0
        %617 = vmatpush1.msra.mxu0 0.0
        %618 = vmatprep.subr.mxu0 0.0
        %619 = vmatpush1.msra.mxu0 0.0
        %620 = vmatprep.subr.mxu0 0.0
        %621 = vmatpush1.msra.mxu0 0.0
        %622 = vmatprep.subr.mxu0 0.0
        %623 = vmatpush1.msra.mxu0 0.0
        %624 = vmatprep.subr.mxu0 0.0
        %625 = vmatpush1.msra.mxu0 0.0
        %626 = vmatprep.subr.mxu0 0.0
        %627 = vmatpush1.msra.mxu0 0.0
        %628 = vmatprep.subr.mxu0 0.0
        %629 = vmatpush1.msra.mxu0 0.0
        %630 = vmatprep.subr.mxu0 0.0
        %631 = vmatpush1.msra.mxu0 0.0
        %632 = vmatprep.subr.mxu0 0.0
        %633 = vmatpush1.msra.mxu0 0.0
        %634 = vmatprep.subr.mxu0 0.0
        %635 = vmatpush1.msra.mxu0 0.0
        %636 = vmatprep.subr.mxu0 0.0
        %637 = vmatpush1.msra.mxu0 0.0
        %638 = vmatprep.subr.mxu0 0.0
        %639 = vmatpush1.msra.mxu0 0.0
        %640 = vmatprep.subr.mxu0 0.0
        %641 = vmatpush1.msra.mxu0 0.0
        %642 = vmatprep.subr.mxu0 0.0
        %643 = vmatpush1.msra.mxu0 0.0
        %644 = vmatprep.subr.mxu0 0.0
        %645 = vmatpush1.msra.mxu0 0.0
        %646 = vmatprep.subr.mxu0 0.0
        %647 = vmatpush1.msra.mxu0 0.0
        %648 = vmatprep.subr.mxu0 0.0
        %649 = vmatpush1.msra.mxu0 0.0
        %650 = vmatprep.subr.mxu0 0.0
        %651 = vmatpush1.msra.mxu0 0.0
        %652 = vmatprep.subr.mxu0 0.0
        %653 = vmatpush1.msra.mxu0 0.0
        %654 = vmatprep.subr.mxu0 0.0
        %655 = vmatpush1.msra.mxu0 0.0
        %656 = vmatprep.mubr.f32.mxu0 0.0
        %657 = vmatmul.mubr.f32.gmra.mrb[0].mxu0 %v587
        %v658 = vpop.f32.mrb[0].mxu0
        %v659 = vadd.f32 0.0, %v658
        %v660 = vpop.f32.mrb[0].mxu0
        %v661 = vadd.f32 0.0, %v660
        %662 = vmatprep.mubr.f32.mxu0 0.0
        %663 = vmatmul.mubr.f32.gmra.mrb[0].mxu0 %v590
        %v664 = vpop.f32.mrb[0].mxu0
        %v665 = vadd.f32 0.0, %v664
        %v666 = vpop.f32.mrb[0].mxu0
        %v667 = vadd.f32 0.0, %v666
        %668 = vdwg.mxu0
        %669 = vmatprep.subr.mxu0 %v556
        %670 = vmatpush1.msra.mxu0 %v555
        %671 = vmatprep.subr.mxu0 %v560
        %672 = vmatpush1.msra.mxu0 %v559
        %673 = vmatprep.subr.mxu0 %v564
        %674 = vmatpush1.msra.mxu0 %v563
        %675 = vmatprep.subr.mxu0 %v568
        %676 = vmatpush1.msra.mxu0 %v567
        %677 = vmatprep.subr.mxu0 %v572
        %678 = vmatpush1.msra.mxu0 %v571
        %679 = vmatprep.subr.mxu0 %v576
        %680 = vmatpush1.msra.mxu0 %v575
        %681 = vmatprep.subr.mxu0 %v580
        %682 = vmatpush1.msra.mxu0 %v579
        %683 = vmatprep.subr.mxu0 %v584
        %684 = vmatpush1.msra.mxu0 %v583
        %685 = vmatprep.subr.mxu0 0.0
        %686 = vmatpush1.msra.mxu0 0.0
        %687 = vmatprep.subr.mxu0 0.0
        %688 = vmatpush1.msra.mxu0 0.0
        %689 = vmatprep.subr.mxu0 0.0
        %690 = vmatpush1.msra.mxu0 0.0
        %691 = vmatprep.subr.mxu0 0.0
        %692 = vmatpush1.msra.mxu0 0.0
        %693 = vmatprep.subr.mxu0 0.0
        %694 = vmatpush1.msra.mxu0 0.0
        %695 = vmatprep.subr.mxu0 0.0
        %696 = vmatpush1.msra.mxu0 0.0
        %697 = vmatprep.subr.mxu0 0.0
        %698 = vmatpush1.msra.mxu0 0.0
        %699 = vmatprep.subr.mxu0 0.0
        %700 = vmatpush1.msra.mxu0 0.0
        %701 = vmatprep.subr.mxu0 0.0
        %702 = vmatpush1.msra.mxu0 0.0
        %703 = vmatprep.subr.mxu0 0.0
        %704 = vmatpush1.msra.mxu0 0.0
        %705 = vmatprep.subr.mxu0 0.0
        %706 = vmatpush1.msra.mxu0 0.0
        %707 = vmatprep.subr.mxu0 0.0
        %708 = vmatpush1.msra.mxu0 0.0
        %709 = vmatprep.subr.mxu0 0.0
        %710 = vmatpush1.msra.mxu0 0.0
        %711 = vmatprep.subr.mxu0 0.0
        %712 = vmatpush1.msra.mxu0 0.0
        %713 = vmatprep.subr.mxu0 0.0
        %714 = vmatpush1.msra.mxu0 0.0
        %715 = vmatprep.subr.mxu0 0.0
        %716 = vmatpush1.msra.mxu0 0.0
        %717 = vmatprep.subr.mxu0 0.0
        %718 = vmatpush1.msra.mxu0 0.0
        %719 = vmatprep.subr.mxu0 0.0
        %720 = vmatpush1.msra.mxu0 0.0
        %721 = vmatprep.subr.mxu0 0.0
        %722 = vmatpush1.msra.mxu0 0.0
        %723 = vmatprep.subr.mxu0 0.0
        %724 = vmatpush1.msra.mxu0 0.0
        %725 = vmatprep.subr.mxu0 0.0
        %726 = vmatpush1.msra.mxu0 0.0
        %727 = vmatprep.subr.mxu0 0.0
        %728 = vmatpush1.msra.mxu0 0.0
        %729 = vmatprep.subr.mxu0 0.0
        %730 = vmatpush1.msra.mxu0 0.0
        %731 = vmatprep.subr.mxu0 0.0
        %732 = vmatpush1.msra.mxu0 0.0
        %733 = vmatprep.mubr.f32.mxu0 0.0
        %734 = vmatmul.mubr.f32.gmra.mrb[0].mxu0 %v587
        %v735 = vpop.f32.mrb[0].mxu0
        %v736 = vadd.f32 0.0, %v735
        %v737 = vpop.f32.mrb[0].mxu0
        %v738 = vadd.f32 0.0, %v737
        %739 = vmatprep.mubr.f32.mxu0 0.0
        %740 = vmatmul.mubr.f32.gmra.mrb[0].mxu0 %v590
        %v741 = vpop.f32.mrb[0].mxu0
        %v742 = vadd.f32 0.0, %v741
        %v743 = vpop.f32.mrb[0].mxu0
        %v744 = vadd.f32 0.0, %v743
        %745 = vdwg.mxu0
        %746 = vxpose.xlu0.b32.start [1/16] %v738, 128
        %747 = vxpose.xlu0.b32.cont [2/16] %v744, 128
        %748 = vxpose.xlu0.b32.cont [3/16] 0.0, 128
        %749 = vxpose.xlu0.b32.cont [4/16] 0.0, 128
        %750 = vxpose.xlu0.b32.cont [5/16] 0.0, 128
        %751 = vxpose.xlu0.b32.cont [6/16] 0.0, 128
        %752 = vxpose.xlu0.b32.cont [7/16] 0.0, 128
        %753 = vxpose.xlu0.b32.cont [8/16] 0.0, 128
        %754 = vxpose.xlu0.b32.cont [9/16] 0.0, 128
        %755 = vxpose.xlu0.b32.cont [10/16] 0.0, 128
        %756 = vxpose.xlu0.b32.cont [11/16] 0.0, 128
        %757 = vxpose.xlu0.b32.cont [12/16] 0.0, 128
        %758 = vxpose.xlu0.b32.cont [13/16] 0.0, 128
        %759 = vxpose.xlu0.b32.cont [14/16] 0.0, 128
        %760 = vxpose.xlu0.b32.cont [15/16] 0.0, 128
        %761 = vxpose.xlu0.b32.end [16/16] 0.0, 128
        %v762 = vpop.trf.xlu0
        %v763 = vpop.trf.xlu0
        %v764 = vpop.trf.xlu0
        %v765 = vpop.trf.xlu0
        %v766 = vpop.trf.xlu0
        %v767 = vpop.trf.xlu0
        %v768 = vpop.trf.xlu0
        %v769 = vpop.trf.xlu0
        %v770 = vpop.trf.xlu0
        %v771 = vpop.trf.xlu0
        %v772 = vpop.trf.xlu0
        %v773 = vpop.trf.xlu0
        %v774 = vpop.trf.xlu0
        %v775 = vpop.trf.xlu0
        %v776 = vpop.trf.xlu0
        %v777 = vpop.trf.xlu0
        %779 = vset.pattern.permute.xlu0 64
        %780 = vperm.xlu0 %779, %v659
        %v781 = vpop.permute.xlu0 %780
        %784 = vset.pattern.permute.xlu0 64
        %785 = vperm.xlu0 %784, %v665
        %v786 = vpop.permute.xlu0 %785
        %v788 = vlaneseq
        %v789 = vshrl.u32 %v788, 7
        %v790 = vsub.s32 0, %v789
        %v791 = vrot.slane %v762, %v790
        %v792 = vadd.f32 %v781, %v791
        %v793 = vadd.f32 %v786, %v791
        %vm794 = vcmp.gt.f32.partialorder %v792, 0.0
        %vm795 = vcmp.gt.f32.partialorder %v793, 0.0
        %v796 = vmul.f32 %v792, 0.2
        %v797 = vmul.f32 %v793, 0.2
        %v798 = vsel %vm794, %v792, %v796
        %v799 = vsel %vm795, %v793, %v797
        %vm800 = vcmp.gt.f32.partialorder %v543, 0.0
        %vm801 = vcmp.gt.f32.partialorder %v544, 0.0
        %v802 = vsel %vm800, %v798, -1e+30
        %v803 = vsel %vm801, %v799, -1e+30
        %vm804 = vcmask 130048
        %v805 = vsel %vm804, %v802, -inf
        %806 = vmax.xlane.f32.xlu0 %v805
        %v807 = vpop.xlane.xlu0 %806
        %v808 = vsel %vm804, %v803, -inf
        %809 = vmax.xlane.f32.xlu0 %v808
        %v810 = vpop.xlane.xlu0 %809
        %v811 = vsub.f32 %v798, %v807
        %v812 = vsub.f32 %v799, %v810
        %v813 = vmin.f32 %v811, 0.0
        %v814 = vmin.f32 %v812, 0.0
        %v815 = vmul.f32 %v813, 1.442695
        %v816 = vpow.pop %v815
        %v817 = vmul.f32 %v814, 1.442695
        %v818 = vpow.pop %v817
        %v819 = vmul.f32 %v816, %v543
        %v820 = vmul.f32 %v818, %v544
        %v821 = vsel %vm804, %v819, 0.0
        %822 = vadd.xlane.f32.xlu0 %v821
        %v823 = vpop.xlane.xlu0 %822
        %v824 = vsel %vm804, %v820, 0.0
        %825 = vadd.xlane.f32.xlu0 %v824
        %v826 = vpop.xlane.xlu0 %825
        %v827 = vmax.f32 %v823, 1e-30
        %v828 = vmax.f32 %v826, 1e-30
        %v829 = vrcp.pop %v827
        %v830 = vrcp.pop %v828
        %v831 = vmul.f32 %v819, %v829
        %v832 = vmul.f32 %v820, %v830
        %v833 = vlaneseq
        %v834 = vshrl.u32 %v833, 7
        %v835 = vsub.s32 0, %v834
        %v836 = vrot.slane %v551, %v835
        %v838 = vsel %vm804, %v831, 0
        %v841 = vsel %vm804, %v832, 0
        %843 = vmatprep.subr.mxu0 0.0
        %844 = vmatpush1.msra.mxu0 %v659
        %845 = vmatprep.subr.mxu0 0.0
        %846 = vmatpush1.msra.mxu0 %v665
        %847 = vmatprep.subr.mxu0 0.0
        %848 = vmatpush1.msra.mxu0 0.0
        %849 = vmatprep.subr.mxu0 0.0
        %850 = vmatpush1.msra.mxu0 0.0
        %851 = vmatprep.subr.mxu0 0.0
        %852 = vmatpush1.msra.mxu0 0.0
        %853 = vmatprep.subr.mxu0 0.0
        %854 = vmatpush1.msra.mxu0 0.0
        %855 = vmatprep.subr.mxu0 0.0
        %856 = vmatpush1.msra.mxu0 0.0
        %857 = vmatprep.subr.mxu0 0.0
        %858 = vmatpush1.msra.mxu0 0.0
        %859 = vmatprep.subr.mxu0 0.0
        %860 = vmatpush1.msra.mxu0 0.0
        %861 = vmatprep.subr.mxu0 0.0
        %862 = vmatpush1.msra.mxu0 0.0
        %863 = vmatprep.subr.mxu0 0.0
        %864 = vmatpush1.msra.mxu0 0.0
        %865 = vmatprep.subr.mxu0 0.0
        %866 = vmatpush1.msra.mxu0 0.0
        %867 = vmatprep.subr.mxu0 0.0
        %868 = vmatpush1.msra.mxu0 0.0
        %869 = vmatprep.subr.mxu0 0.0
        %870 = vmatpush1.msra.mxu0 0.0
        %871 = vmatprep.subr.mxu0 0.0
        %872 = vmatpush1.msra.mxu0 0.0
        %873 = vmatprep.subr.mxu0 0.0
        %874 = vmatpush1.msra.mxu0 0.0
        %875 = vmatprep.subr.mxu0 0.0
        %876 = vmatpush1.msra.mxu0 0.0
        %877 = vmatprep.subr.mxu0 0.0
        %878 = vmatpush1.msra.mxu0 0.0
        %879 = vmatprep.subr.mxu0 0.0
        %880 = vmatpush1.msra.mxu0 0.0
        %881 = vmatprep.subr.mxu0 0.0
        %882 = vmatpush1.msra.mxu0 0.0
        %883 = vmatprep.subr.mxu0 0.0
        %884 = vmatpush1.msra.mxu0 0.0
        %885 = vmatprep.subr.mxu0 0.0
        %886 = vmatpush1.msra.mxu0 0.0
        %887 = vmatprep.subr.mxu0 0.0
        %888 = vmatpush1.msra.mxu0 0.0
        %889 = vmatprep.subr.mxu0 0.0
        %890 = vmatpush1.msra.mxu0 0.0
        %891 = vmatprep.subr.mxu0 0.0
        %892 = vmatpush1.msra.mxu0 0.0
        %893 = vmatprep.subr.mxu0 0.0
        %894 = vmatpush1.msra.mxu0 0.0
        %895 = vmatprep.subr.mxu0 0.0
        %896 = vmatpush1.msra.mxu0 0.0
        %897 = vmatprep.subr.mxu0 0.0
        %898 = vmatpush1.msra.mxu0 0.0
        %899 = vmatprep.subr.mxu0 0.0
        %900 = vmatpush1.msra.mxu0 0.0
        %901 = vmatprep.subr.mxu0 0.0
        %902 = vmatpush1.msra.mxu0 0.0
        %903 = vmatprep.subr.mxu0 0.0
        %904 = vmatpush1.msra.mxu0 0.0
        %905 = vmatprep.subr.mxu0 0.0
        %906 = vmatpush1.msra.mxu0 0.0
        %907 = vmatprep.mubr.f32.mxu0 0.0
        %908 = vmatmul.mubr.f32.gmra.mrb[0].mxu0 %v838
        %v909 = vpop.f32.mrb[0].mxu0
        %v910 = vadd.f32 %v836, %v909
        %v911 = vpop.f32.mrb[0].mxu0
        %912 = vmatprep.mubr.f32.mxu0 0.0
        %913 = vmatmul.mubr.f32.gmra.mrb[0].mxu0 %v841
        %v914 = vpop.f32.mrb[0].mxu0
        %v915 = vadd.f32 %v836, %v914
        %v916 = vpop.f32.mrb[0].mxu0
        %917 = vdwg.mxu0
        %v918 = vmax.f32 %v910, 0.0
        %v919 = vmax.f32 %v915, 0.0
        %v920 = vadd.f32 %v918, 0.0
        %v921 = vadd.f32 %v919, 0.0
        %923 = vset.pattern.permute.xlu0 64
        %924 = vperm.xlu0 %923, %v661
        %v925 = vpop.permute.xlu0 %924
        %928 = vset.pattern.permute.xlu0 64
        %929 = vperm.xlu0 %928, %v667
        %v930 = vpop.permute.xlu0 %929
        %v932 = vlaneseq
        %v933 = vshrl.u32 %v932, 7
        %v934 = vsub.s32 1, %v933
        %v935 = vrot.slane %v762, %v934
        %v936 = vadd.f32 %v925, %v935
        %v937 = vadd.f32 %v930, %v935
        %vm938 = vcmp.gt.f32.partialorder %v936, 0.0
        %vm939 = vcmp.gt.f32.partialorder %v937, 0.0
        %v940 = vmul.f32 %v936, 0.2
        %v941 = vmul.f32 %v937, 0.2
        %v942 = vsel %vm938, %v936, %v940
        %v943 = vsel %vm939, %v937, %v941
        %vm944 = vcmp.gt.f32.partialorder %v546, 0.0
        %vm945 = vcmp.gt.f32.partialorder %v547, 0.0
        %v946 = vsel %vm944, %v942, -1e+30
        %v947 = vsel %vm945, %v943, -1e+30
        %v948 = vsel %vm804, %v946, -inf
        %949 = vmax.xlane.f32.xlu0 %v948
        %v950 = vpop.xlane.xlu0 %949
        %v951 = vsel %vm804, %v947, -inf
        %952 = vmax.xlane.f32.xlu0 %v951
        %v953 = vpop.xlane.xlu0 %952
        %v954 = vsub.f32 %v942, %v950
        %v955 = vsub.f32 %v943, %v953
        %v956 = vmin.f32 %v954, 0.0
        %v957 = vmin.f32 %v955, 0.0
        %v958 = vmul.f32 %v956, 1.442695
        %v959 = vpow.pop %v958
        %v960 = vmul.f32 %v957, 1.442695
        %v961 = vpow.pop %v960
        %v962 = vmul.f32 %v959, %v546
        %v963 = vmul.f32 %v961, %v547
        %v964 = vsel %vm804, %v962, 0.0
        %965 = vadd.xlane.f32.xlu0 %v964
        %v966 = vpop.xlane.xlu0 %965
        %v967 = vsel %vm804, %v963, 0.0
        %968 = vadd.xlane.f32.xlu0 %v967
        %v969 = vpop.xlane.xlu0 %968
        %v970 = vmax.f32 %v966, 1e-30
        %v971 = vmax.f32 %v969, 1e-30
        %v972 = vrcp.pop %v970
        %v973 = vrcp.pop %v971
        %v974 = vmul.f32 %v962, %v972
        %v975 = vmul.f32 %v963, %v973
        %v976 = vlaneseq
        %v977 = vshrl.u32 %v976, 7
        %v978 = vsub.s32 1, %v977
        %v979 = vrot.slane %v551, %v978
        %v981 = vsel %vm804, %v974, 0
        %v984 = vsel %vm804, %v975, 0
        %986 = vmatprep.subr.mxu0 0.0
        %987 = vmatpush1.msra.mxu0 %v661
        %988 = vmatprep.subr.mxu0 0.0
        %989 = vmatpush1.msra.mxu0 %v667
        %990 = vmatprep.subr.mxu0 0.0
        %991 = vmatpush1.msra.mxu0 0.0
        %992 = vmatprep.subr.mxu0 0.0
        %993 = vmatpush1.msra.mxu0 0.0
        %994 = vmatprep.subr.mxu0 0.0
        %995 = vmatpush1.msra.mxu0 0.0
        %996 = vmatprep.subr.mxu0 0.0
        %997 = vmatpush1.msra.mxu0 0.0
        %998 = vmatprep.subr.mxu0 0.0
        %999 = vmatpush1.msra.mxu0 0.0
        %1000 = vmatprep.subr.mxu0 0.0
        %1001 = vmatpush1.msra.mxu0 0.0
        %1002 = vmatprep.subr.mxu0 0.0
        %1003 = vmatpush1.msra.mxu0 0.0
        %1004 = vmatprep.subr.mxu0 0.0
        %1005 = vmatpush1.msra.mxu0 0.0
        %1006 = vmatprep.subr.mxu0 0.0
        %1007 = vmatpush1.msra.mxu0 0.0
        %1008 = vmatprep.subr.mxu0 0.0
        %1009 = vmatpush1.msra.mxu0 0.0
        %1010 = vmatprep.subr.mxu0 0.0
        %1011 = vmatpush1.msra.mxu0 0.0
        %1012 = vmatprep.subr.mxu0 0.0
        %1013 = vmatpush1.msra.mxu0 0.0
        %1014 = vmatprep.subr.mxu0 0.0
        %1015 = vmatpush1.msra.mxu0 0.0
        %1016 = vmatprep.subr.mxu0 0.0
        %1017 = vmatpush1.msra.mxu0 0.0
        %1018 = vmatprep.subr.mxu0 0.0
        %1019 = vmatpush1.msra.mxu0 0.0
        %1020 = vmatprep.subr.mxu0 0.0
        %1021 = vmatpush1.msra.mxu0 0.0
        %1022 = vmatprep.subr.mxu0 0.0
        %1023 = vmatpush1.msra.mxu0 0.0
        %1024 = vmatprep.subr.mxu0 0.0
        %1025 = vmatpush1.msra.mxu0 0.0
        %1026 = vmatprep.subr.mxu0 0.0
        %1027 = vmatpush1.msra.mxu0 0.0
        %1028 = vmatprep.subr.mxu0 0.0
        %1029 = vmatpush1.msra.mxu0 0.0
        %1030 = vmatprep.subr.mxu0 0.0
        %1031 = vmatpush1.msra.mxu0 0.0
        %1032 = vmatprep.subr.mxu0 0.0
        %1033 = vmatpush1.msra.mxu0 0.0
        %1034 = vmatprep.subr.mxu0 0.0
        %1035 = vmatpush1.msra.mxu0 0.0
        %1036 = vmatprep.subr.mxu0 0.0
        %1037 = vmatpush1.msra.mxu0 0.0
        %1038 = vmatprep.subr.mxu0 0.0
        %1039 = vmatpush1.msra.mxu0 0.0
        %1040 = vmatprep.subr.mxu0 0.0
        %1041 = vmatpush1.msra.mxu0 0.0
        %1042 = vmatprep.subr.mxu0 0.0
        %1043 = vmatpush1.msra.mxu0 0.0
        %1044 = vmatprep.subr.mxu0 0.0
        %1045 = vmatpush1.msra.mxu0 0.0
        %1046 = vmatprep.subr.mxu0 0.0
        %1047 = vmatpush1.msra.mxu0 0.0
        %1048 = vmatprep.subr.mxu0 0.0
        %1049 = vmatpush1.msra.mxu0 0.0
        %1050 = vmatprep.mubr.f32.mxu0 0.0
        %1051 = vmatmul.mubr.f32.gmra.mrb[0].mxu0 %v981
        %v1052 = vpop.f32.mrb[0].mxu0
        %v1053 = vadd.f32 %v979, %v1052
        %v1054 = vpop.f32.mrb[0].mxu0
        %1055 = vmatprep.mubr.f32.mxu0 0.0
        %1056 = vmatmul.mubr.f32.gmra.mrb[0].mxu0 %v984
        %v1057 = vpop.f32.mrb[0].mxu0
        %v1058 = vadd.f32 %v979, %v1057
        %v1059 = vpop.f32.mrb[0].mxu0
        %1060 = vdwg.mxu0
        %v1061 = vmax.f32 %v1053, 0.0
        %v1062 = vmax.f32 %v1058, 0.0
        %v1063 = vadd.f32 %v920, %v1061
        %v1064 = vadd.f32 %v921, %v1062
        %1066 = vset.pattern.permute.xlu0 64
        %1067 = vperm.xlu0 %1066, %v736
        %v1068 = vpop.permute.xlu0 %1067
        %1071 = vset.pattern.permute.xlu0 64
        %1072 = vperm.xlu0 %1071, %v742
        %v1073 = vpop.permute.xlu0 %1072
        %v1075 = vlaneseq
        %v1076 = vshrl.u32 %v1075, 7
        %v1077 = vsub.s32 2, %v1076
        %v1078 = vrot.slane %v762, %v1077
        %v1079 = vadd.f32 %v1068, %v1078
        %v1080 = vadd.f32 %v1073, %v1078
        %vm1081 = vcmp.gt.f32.partialorder %v1079, 0.0
        %vm1082 = vcmp.gt.f32.partialorder %v1080, 0.0
        %v1083 = vmul.f32 %v1079, 0.2
        %v1084 = vmul.f32 %v1080, 0.2
        %v1085 = vsel %vm1081, %v1079, %v1083
        %v1086 = vsel %vm1082, %v1080, %v1084
        %vm1087 = vcmp.gt.f32.partialorder %v549, 0.0
        %vm1088 = vcmp.gt.f32.partialorder %v550, 0.0
        %v1089 = vsel %vm1087, %v1085, -1e+30
        %v1090 = vsel %vm1088, %v1086, -1e+30
        %v1091 = vsel %vm804, %v1089, -inf
        %1092 = vmax.xlane.f32.xlu0 %v1091
        %v1093 = vpop.xlane.xlu0 %1092
        %v1094 = vsel %vm804, %v1090, -inf
        %1095 = vmax.xlane.f32.xlu0 %v1094
        %v1096 = vpop.xlane.xlu0 %1095
        %v1097 = vsub.f32 %v1085, %v1093
        %v1098 = vsub.f32 %v1086, %v1096
        %v1099 = vmin.f32 %v1097, 0.0
        %v1100 = vmin.f32 %v1098, 0.0
        %v1101 = vmul.f32 %v1099, 1.442695
        %v1102 = vpow.pop %v1101
        %v1103 = vmul.f32 %v1100, 1.442695
        %v1104 = vpow.pop %v1103
        %v1105 = vmul.f32 %v1102, %v549
        %v1106 = vmul.f32 %v1104, %v550
        %v1107 = vsel %vm804, %v1105, 0.0
        %1108 = vadd.xlane.f32.xlu0 %v1107
        %v1109 = vpop.xlane.xlu0 %1108
        %v1110 = vsel %vm804, %v1106, 0.0
        %1111 = vadd.xlane.f32.xlu0 %v1110
        %v1112 = vpop.xlane.xlu0 %1111
        %v1113 = vmax.f32 %v1109, 1e-30
        %v1114 = vmax.f32 %v1112, 1e-30
        %v1115 = vrcp.pop %v1113
        %v1116 = vrcp.pop %v1114
        %v1117 = vmul.f32 %v1105, %v1115
        %v1118 = vmul.f32 %v1106, %v1116
        %v1119 = vlaneseq
        %v1120 = vshrl.u32 %v1119, 7
        %v1121 = vsub.s32 2, %v1120
        %v1122 = vrot.slane %v551, %v1121
        %v1124 = vsel %vm804, %v1117, 0
        %v1127 = vsel %vm804, %v1118, 0
        %1129 = vmatprep.subr.mxu0 0.0
        %1130 = vmatpush1.msra.mxu0 %v736
        %1131 = vmatprep.subr.mxu0 0.0
        %1132 = vmatpush1.msra.mxu0 %v742
        %1133 = vmatprep.subr.mxu0 0.0
        %1134 = vmatpush1.msra.mxu0 0.0
        %1135 = vmatprep.subr.mxu0 0.0
        %1136 = vmatpush1.msra.mxu0 0.0
        %1137 = vmatprep.subr.mxu0 0.0
        %1138 = vmatpush1.msra.mxu0 0.0
        %1139 = vmatprep.subr.mxu0 0.0
        %1140 = vmatpush1.msra.mxu0 0.0
        %1141 = vmatprep.subr.mxu0 0.0
        %1142 = vmatpush1.msra.mxu0 0.0
        %1143 = vmatprep.subr.mxu0 0.0
        %1144 = vmatpush1.msra.mxu0 0.0
        %1145 = vmatprep.subr.mxu0 0.0
        %1146 = vmatpush1.msra.mxu0 0.0
        %1147 = vmatprep.subr.mxu0 0.0
        %1148 = vmatpush1.msra.mxu0 0.0
        %1149 = vmatprep.subr.mxu0 0.0
        %1150 = vmatpush1.msra.mxu0 0.0
        %1151 = vmatprep.subr.mxu0 0.0
        %1152 = vmatpush1.msra.mxu0 0.0
        %1153 = vmatprep.subr.mxu0 0.0
        %1154 = vmatpush1.msra.mxu0 0.0
        %1155 = vmatprep.subr.mxu0 0.0
        %1156 = vmatpush1.msra.mxu0 0.0
        %1157 = vmatprep.subr.mxu0 0.0
        %1158 = vmatpush1.msra.mxu0 0.0
        %1159 = vmatprep.subr.mxu0 0.0
        %1160 = vmatpush1.msra.mxu0 0.0
        %1161 = vmatprep.subr.mxu0 0.0
        %1162 = vmatpush1.msra.mxu0 0.0
        %1163 = vmatprep.subr.mxu0 0.0
        %1164 = vmatpush1.msra.mxu0 0.0
        %1165 = vmatprep.subr.mxu0 0.0
        %1166 = vmatpush1.msra.mxu0 0.0
        %1167 = vmatprep.subr.mxu0 0.0
        %1168 = vmatpush1.msra.mxu0 0.0
        %1169 = vmatprep.subr.mxu0 0.0
        %1170 = vmatpush1.msra.mxu0 0.0
        %1171 = vmatprep.subr.mxu0 0.0
        %1172 = vmatpush1.msra.mxu0 0.0
        %1173 = vmatprep.subr.mxu0 0.0
        %1174 = vmatpush1.msra.mxu0 0.0
        %1175 = vmatprep.subr.mxu0 0.0
        %1176 = vmatpush1.msra.mxu0 0.0
        %1177 = vmatprep.subr.mxu0 0.0
        %1178 = vmatpush1.msra.mxu0 0.0
        %1179 = vmatprep.subr.mxu0 0.0
        %1180 = vmatpush1.msra.mxu0 0.0
        %1181 = vmatprep.subr.mxu0 0.0
        %1182 = vmatpush1.msra.mxu0 0.0
        %1183 = vmatprep.subr.mxu0 0.0
        %1184 = vmatpush1.msra.mxu0 0.0
        %1185 = vmatprep.subr.mxu0 0.0
        %1186 = vmatpush1.msra.mxu0 0.0
        %1187 = vmatprep.subr.mxu0 0.0
        %1188 = vmatpush1.msra.mxu0 0.0
        %1189 = vmatprep.subr.mxu0 0.0
        %1190 = vmatpush1.msra.mxu0 0.0
        %1191 = vmatprep.subr.mxu0 0.0
        %1192 = vmatpush1.msra.mxu0 0.0
        %1193 = vmatprep.mubr.f32.mxu0 0.0
        %1194 = vmatmul.mubr.f32.gmra.mrb[0].mxu0 %v1124
        %v1195 = vpop.f32.mrb[0].mxu0
        %v1196 = vadd.f32 %v1122, %v1195
        %v1197 = vpop.f32.mrb[0].mxu0
        %1198 = vmatprep.mubr.f32.mxu0 0.0
        %1199 = vmatmul.mubr.f32.gmra.mrb[0].mxu0 %v1127
        %v1200 = vpop.f32.mrb[0].mxu0
        %v1201 = vadd.f32 %v1122, %v1200
        %v1202 = vpop.f32.mrb[0].mxu0
        %1203 = vdwg.mxu0
        %v1204 = vmax.f32 %v1196, 0.0
        %v1205 = vmax.f32 %v1201, 0.0
        %v1206 = vadd.f32 %v1063, %v1204
        %v1207 = vadd.f32 %v1064, %v1205
        %v1208 = vadd.f32 %v541, %v1206
        %v1209 = vadd.f32 %v542, %v1207
        %v1210 = vlaneseq
        %v1211 = vshrl.u32 %v1210, 7
        %v1212 = vsub.s32 0, %v1211
        %v1213 = vrot.slane %v552, %v1212
        %v1214 = vmul.f32 %v1208, %v1213
        %v1215 = vmul.f32 %v1209, %v1213
        %v1216 = vlaneseq
        %v1217 = vshrl.u32 %v1216, 7
        %v1218 = vsub.s32 1, %v1217
        %v1219 = vrot.slane %v552, %v1218
        %v1220 = vadd.f32 %v1214, %v1219
        %v1221 = vadd.f32 %v1215, %v1219
        %s1222 = scalar_lea.vmem %s2, 4
        %v1223 = vld [vmem:[%s1222] sm:$0x7]
        %s1224 = scalar_lea.vmem %s4, 2
        %v1225 = vld [vmem:[%s1224] sm:$0x3]
        %s1226 = scalar_lea.vmem [#allocation2], 256
        %v1227 = vld [vmem:[%s1226] sm:$0xff]
        %v1228 = vld [vmem:[%s1226 + $0x8] sm:$0xff]
        %v1229 = vld [vmem:[%s1226 + $0x10] sm:$0xff]
        %v1230 = vld [vmem:[%s1226 + $0x18] sm:$0xff]
        %v1231 = vld [vmem:[%s1226 + $0x20] sm:$0xff]
        %v1232 = vld [vmem:[%s1226 + $0x28] sm:$0xff]
        %v1233 = vld [vmem:[%s1226 + $0x30] sm:$0xff]
        %v1234 = vld [vmem:[%s1226 + $0x38] sm:$0xff]
        %v1235 = vld [vmem:[%s1226 + $0x40] sm:$0xff]
        %v1236 = vld [vmem:[%s1226 + $0x48] sm:$0xff]
        %v1237 = vld [vmem:[%s1226 + $0x50] sm:$0xff]
        %v1238 = vld [vmem:[%s1226 + $0x58] sm:$0xff]
        %v1239 = vld [vmem:[%s1226 + $0x60] sm:$0xff]
        %v1240 = vld [vmem:[%s1226 + $0x68] sm:$0xff]
        %v1241 = vld [vmem:[%s1226 + $0x70] sm:$0xff]
        %v1242 = vld [vmem:[%s1226 + $0x78] sm:$0xff]
        %v1243 = vld [vmem:[%s1226 + $0x80] sm:$0xff]
        %v1244 = vld [vmem:[%s1226 + $0x88] sm:$0xff]
        %v1245 = vld [vmem:[%s1226 + $0x90] sm:$0xff]
        %v1246 = vld [vmem:[%s1226 + $0x98] sm:$0xff]
        %v1247 = vld [vmem:[%s1226 + $0xa0] sm:$0xff]
        %v1248 = vld [vmem:[%s1226 + $0xa8] sm:$0xff]
        %v1249 = vld [vmem:[%s1226 + $0xb0] sm:$0xff]
        %v1250 = vld [vmem:[%s1226 + $0xb8] sm:$0xff]
        %v1251 = vld [vmem:[%s1226 + $0xc0] sm:$0xff]
        %v1252 = vld [vmem:[%s1226 + $0xc8] sm:$0xff]
        %v1253 = vld [vmem:[%s1226 + $0xd0] sm:$0xff]
        %v1254 = vld [vmem:[%s1226 + $0xd8] sm:$0xff]
        %v1255 = vld [vmem:[%s1226 + $0xe0] sm:$0xff]
        %v1256 = vld [vmem:[%s1226 + $0xe8] sm:$0xff]
        %v1257 = vld [vmem:[%s1226 + $0xf0] sm:$0xff]
        %v1258 = vld [vmem:[%s1226 + $0xf8] sm:$0xff]
        %v1260 = vsel %vm585, %v1220, 0
        %v1263 = vsel %vm585, %v1221, 0
        %1265 = vmatprep.subr.mxu0 %v1228
        %1266 = vmatpush1.msra.mxu0 %v1227
        %1267 = vmatprep.subr.mxu0 %v1232
        %1268 = vmatpush1.msra.mxu0 %v1231
        %1269 = vmatprep.subr.mxu0 %v1236
        %1270 = vmatpush1.msra.mxu0 %v1235
        %1271 = vmatprep.subr.mxu0 %v1240
        %1272 = vmatpush1.msra.mxu0 %v1239
        %1273 = vmatprep.subr.mxu0 %v1244
        %1274 = vmatpush1.msra.mxu0 %v1243
        %1275 = vmatprep.subr.mxu0 %v1248
        %1276 = vmatpush1.msra.mxu0 %v1247
        %1277 = vmatprep.subr.mxu0 %v1252
        %1278 = vmatpush1.msra.mxu0 %v1251
        %1279 = vmatprep.subr.mxu0 %v1256
        %1280 = vmatpush1.msra.mxu0 %v1255
        %1281 = vmatprep.subr.mxu0 0.0
        %1282 = vmatpush1.msra.mxu0 0.0
        %1283 = vmatprep.subr.mxu0 0.0
        %1284 = vmatpush1.msra.mxu0 0.0
        %1285 = vmatprep.subr.mxu0 0.0
        %1286 = vmatpush1.msra.mxu0 0.0
        %1287 = vmatprep.subr.mxu0 0.0
        %1288 = vmatpush1.msra.mxu0 0.0
        %1289 = vmatprep.subr.mxu0 0.0
        %1290 = vmatpush1.msra.mxu0 0.0
        %1291 = vmatprep.subr.mxu0 0.0
        %1292 = vmatpush1.msra.mxu0 0.0
        %1293 = vmatprep.subr.mxu0 0.0
        %1294 = vmatpush1.msra.mxu0 0.0
        %1295 = vmatprep.subr.mxu0 0.0
        %1296 = vmatpush1.msra.mxu0 0.0
        %1297 = vmatprep.subr.mxu0 0.0
        %1298 = vmatpush1.msra.mxu0 0.0
        %1299 = vmatprep.subr.mxu0 0.0
        %1300 = vmatpush1.msra.mxu0 0.0
        %1301 = vmatprep.subr.mxu0 0.0
        %1302 = vmatpush1.msra.mxu0 0.0
        %1303 = vmatprep.subr.mxu0 0.0
        %1304 = vmatpush1.msra.mxu0 0.0
        %1305 = vmatprep.subr.mxu0 0.0
        %1306 = vmatpush1.msra.mxu0 0.0
        %1307 = vmatprep.subr.mxu0 0.0
        %1308 = vmatpush1.msra.mxu0 0.0
        %1309 = vmatprep.subr.mxu0 0.0
        %1310 = vmatpush1.msra.mxu0 0.0
        %1311 = vmatprep.subr.mxu0 0.0
        %1312 = vmatpush1.msra.mxu0 0.0
        %1313 = vmatprep.subr.mxu0 0.0
        %1314 = vmatpush1.msra.mxu0 0.0
        %1315 = vmatprep.subr.mxu0 0.0
        %1316 = vmatpush1.msra.mxu0 0.0
        %1317 = vmatprep.subr.mxu0 0.0
        %1318 = vmatpush1.msra.mxu0 0.0
        %1319 = vmatprep.subr.mxu0 0.0
        %1320 = vmatpush1.msra.mxu0 0.0
        %1321 = vmatprep.subr.mxu0 0.0
        %1322 = vmatpush1.msra.mxu0 0.0
        %1323 = vmatprep.subr.mxu0 0.0
        %1324 = vmatpush1.msra.mxu0 0.0
        %1325 = vmatprep.subr.mxu0 0.0
        %1326 = vmatpush1.msra.mxu0 0.0
        %1327 = vmatprep.subr.mxu0 0.0
        %1328 = vmatpush1.msra.mxu0 0.0
        %1329 = vmatprep.mubr.f32.mxu0 0.0
        %1330 = vmatmul.mubr.f32.gmra.mrb[0].mxu0 %v1260
        %v1331 = vpop.f32.mrb[0].mxu0
        %v1332 = vadd.f32 0.0, %v1331
        %v1333 = vpop.f32.mrb[0].mxu0
        %v1334 = vadd.f32 0.0, %v1333
        %1335 = vmatprep.mubr.f32.mxu0 0.0
        %1336 = vmatmul.mubr.f32.gmra.mrb[0].mxu0 %v1263
        %v1337 = vpop.f32.mrb[0].mxu0
        %v1338 = vadd.f32 0.0, %v1337
        %v1339 = vpop.f32.mrb[0].mxu0
        %v1340 = vadd.f32 0.0, %v1339
        %1341 = vdwg.mxu0
        %1342 = vmatprep.subr.mxu0 %v1230
        %1343 = vmatpush1.msra.mxu0 %v1229
        %1344 = vmatprep.subr.mxu0 %v1234
        %1345 = vmatpush1.msra.mxu0 %v1233
        %1346 = vmatprep.subr.mxu0 %v1238
        %1347 = vmatpush1.msra.mxu0 %v1237
        %1348 = vmatprep.subr.mxu0 %v1242
        %1349 = vmatpush1.msra.mxu0 %v1241
        %1350 = vmatprep.subr.mxu0 %v1246
        %1351 = vmatpush1.msra.mxu0 %v1245
        %1352 = vmatprep.subr.mxu0 %v1250
        %1353 = vmatpush1.msra.mxu0 %v1249
        %1354 = vmatprep.subr.mxu0 %v1254
        %1355 = vmatpush1.msra.mxu0 %v1253
        %1356 = vmatprep.subr.mxu0 %v1258
        %1357 = vmatpush1.msra.mxu0 %v1257
        %1358 = vmatprep.subr.mxu0 0.0
        %1359 = vmatpush1.msra.mxu0 0.0
        %1360 = vmatprep.subr.mxu0 0.0
        %1361 = vmatpush1.msra.mxu0 0.0
        %1362 = vmatprep.subr.mxu0 0.0
        %1363 = vmatpush1.msra.mxu0 0.0
        %1364 = vmatprep.subr.mxu0 0.0
        %1365 = vmatpush1.msra.mxu0 0.0
        %1366 = vmatprep.subr.mxu0 0.0
        %1367 = vmatpush1.msra.mxu0 0.0
        %1368 = vmatprep.subr.mxu0 0.0
        %1369 = vmatpush1.msra.mxu0 0.0
        %1370 = vmatprep.subr.mxu0 0.0
        %1371 = vmatpush1.msra.mxu0 0.0
        %1372 = vmatprep.subr.mxu0 0.0
        %1373 = vmatpush1.msra.mxu0 0.0
        %1374 = vmatprep.subr.mxu0 0.0
        %1375 = vmatpush1.msra.mxu0 0.0
        %1376 = vmatprep.subr.mxu0 0.0
        %1377 = vmatpush1.msra.mxu0 0.0
        %1378 = vmatprep.subr.mxu0 0.0
        %1379 = vmatpush1.msra.mxu0 0.0
        %1380 = vmatprep.subr.mxu0 0.0
        %1381 = vmatpush1.msra.mxu0 0.0
        %1382 = vmatprep.subr.mxu0 0.0
        %1383 = vmatpush1.msra.mxu0 0.0
        %1384 = vmatprep.subr.mxu0 0.0
        %1385 = vmatpush1.msra.mxu0 0.0
        %1386 = vmatprep.subr.mxu0 0.0
        %1387 = vmatpush1.msra.mxu0 0.0
        %1388 = vmatprep.subr.mxu0 0.0
        %1389 = vmatpush1.msra.mxu0 0.0
        %1390 = vmatprep.subr.mxu0 0.0
        %1391 = vmatpush1.msra.mxu0 0.0
        %1392 = vmatprep.subr.mxu0 0.0
        %1393 = vmatpush1.msra.mxu0 0.0
        %1394 = vmatprep.subr.mxu0 0.0
        %1395 = vmatpush1.msra.mxu0 0.0
        %1396 = vmatprep.subr.mxu0 0.0
        %1397 = vmatpush1.msra.mxu0 0.0
        %1398 = vmatprep.subr.mxu0 0.0
        %1399 = vmatpush1.msra.mxu0 0.0
        %1400 = vmatprep.subr.mxu0 0.0
        %1401 = vmatpush1.msra.mxu0 0.0
        %1402 = vmatprep.subr.mxu0 0.0
        %1403 = vmatpush1.msra.mxu0 0.0
        %1404 = vmatprep.subr.mxu0 0.0
        %1405 = vmatpush1.msra.mxu0 0.0
        %1406 = vmatprep.mubr.f32.mxu0 0.0
        %1407 = vmatmul.mubr.f32.gmra.mrb[0].mxu0 %v1260
        %v1408 = vpop.f32.mrb[0].mxu0
        %v1409 = vadd.f32 0.0, %v1408
        %v1410 = vpop.f32.mrb[0].mxu0
        %v1411 = vadd.f32 0.0, %v1410
        %1412 = vmatprep.mubr.f32.mxu0 0.0
        %1413 = vmatmul.mubr.f32.gmra.mrb[0].mxu0 %v1263
        %v1414 = vpop.f32.mrb[0].mxu0
        %v1415 = vadd.f32 0.0, %v1414
        %v1416 = vpop.f32.mrb[0].mxu0
        %v1417 = vadd.f32 0.0, %v1416
        %1418 = vdwg.mxu0
        %1419 = vxpose.xlu0.b32.start [1/16] %v1411, 128
        %1420 = vxpose.xlu0.b32.cont [2/16] %v1417, 128
        %1421 = vxpose.xlu0.b32.cont [3/16] 0.0, 128
        %1422 = vxpose.xlu0.b32.cont [4/16] 0.0, 128
        %1423 = vxpose.xlu0.b32.cont [5/16] 0.0, 128
        %1424 = vxpose.xlu0.b32.cont [6/16] 0.0, 128
        %1425 = vxpose.xlu0.b32.cont [7/16] 0.0, 128
        %1426 = vxpose.xlu0.b32.cont [8/16] 0.0, 128
        %1427 = vxpose.xlu0.b32.cont [9/16] 0.0, 128
        %1428 = vxpose.xlu0.b32.cont [10/16] 0.0, 128
        %1429 = vxpose.xlu0.b32.cont [11/16] 0.0, 128
        %1430 = vxpose.xlu0.b32.cont [12/16] 0.0, 128
        %1431 = vxpose.xlu0.b32.cont [13/16] 0.0, 128
        %1432 = vxpose.xlu0.b32.cont [14/16] 0.0, 128
        %1433 = vxpose.xlu0.b32.cont [15/16] 0.0, 128
        %1434 = vxpose.xlu0.b32.end [16/16] 0.0, 128
        %v1435 = vpop.trf.xlu0
        %v1436 = vpop.trf.xlu0
        %v1437 = vpop.trf.xlu0
        %v1438 = vpop.trf.xlu0
        %v1439 = vpop.trf.xlu0
        %v1440 = vpop.trf.xlu0
        %v1441 = vpop.trf.xlu0
        %v1442 = vpop.trf.xlu0
        %v1443 = vpop.trf.xlu0
        %v1444 = vpop.trf.xlu0
        %v1445 = vpop.trf.xlu0
        %v1446 = vpop.trf.xlu0
        %v1447 = vpop.trf.xlu0
        %v1448 = vpop.trf.xlu0
        %v1449 = vpop.trf.xlu0
        %v1450 = vpop.trf.xlu0
        %1452 = vset.pattern.permute.xlu0 64
        %1453 = vperm.xlu0 %1452, %v1332
        %v1454 = vpop.permute.xlu0 %1453
        %1457 = vset.pattern.permute.xlu0 64
        %1458 = vperm.xlu0 %1457, %v1338
        %v1459 = vpop.permute.xlu0 %1458
        %v1461 = vlaneseq
        %v1462 = vshrl.u32 %v1461, 7
        %v1463 = vsub.s32 0, %v1462
        %v1464 = vrot.slane %v1435, %v1463
        %v1465 = vadd.f32 %v1454, %v1464
        %v1466 = vadd.f32 %v1459, %v1464
        %vm1467 = vcmp.gt.f32.partialorder %v1465, 0.0
        %vm1468 = vcmp.gt.f32.partialorder %v1466, 0.0
        %v1469 = vmul.f32 %v1465, 0.2
        %v1470 = vmul.f32 %v1466, 0.2
        %v1471 = vsel %vm1467, %v1465, %v1469
        %v1472 = vsel %vm1468, %v1466, %v1470
        %v1473 = vsel %vm800, %v1471, -1e+30
        %v1474 = vsel %vm801, %v1472, -1e+30
        %v1475 = vsel %vm804, %v1473, -inf
        %1476 = vmax.xlane.f32.xlu0 %v1475
        %v1477 = vpop.xlane.xlu0 %1476
        %v1478 = vsel %vm804, %v1474, -inf
        %1479 = vmax.xlane.f32.xlu0 %v1478
        %v1480 = vpop.xlane.xlu0 %1479
        %v1481 = vsub.f32 %v1471, %v1477
        %v1482 = vsub.f32 %v1472, %v1480
        %v1483 = vmin.f32 %v1481, 0.0
        %v1484 = vmin.f32 %v1482, 0.0
        %v1485 = vmul.f32 %v1483, 1.442695
        %v1486 = vpow.pop %v1485
        %v1487 = vmul.f32 %v1484, 1.442695
        %v1488 = vpow.pop %v1487
        %v1489 = vmul.f32 %v1486, %v543
        %v1490 = vmul.f32 %v1488, %v544
        %v1491 = vsel %vm804, %v1489, 0.0
        %1492 = vadd.xlane.f32.xlu0 %v1491
        %v1493 = vpop.xlane.xlu0 %1492
        %v1494 = vsel %vm804, %v1490, 0.0
        %1495 = vadd.xlane.f32.xlu0 %v1494
        %v1496 = vpop.xlane.xlu0 %1495
        %v1497 = vmax.f32 %v1493, 1e-30
        %v1498 = vmax.f32 %v1496, 1e-30
        %v1499 = vrcp.pop %v1497
        %v1500 = vrcp.pop %v1498
        %v1501 = vmul.f32 %v1489, %v1499
        %v1502 = vmul.f32 %v1490, %v1500
        %v1503 = vlaneseq
        %v1504 = vshrl.u32 %v1503, 7
        %v1505 = vsub.s32 0, %v1504
        %v1506 = vrot.slane %v1223, %v1505
        %v1508 = vsel %vm804, %v1501, 0
        %v1511 = vsel %vm804, %v1502, 0
        %1513 = vmatprep.subr.mxu0 0.0
        %1514 = vmatpush1.msra.mxu0 %v1332
        %1515 = vmatprep.subr.mxu0 0.0
        %1516 = vmatpush1.msra.mxu0 %v1338
        %1517 = vmatprep.subr.mxu0 0.0
        %1518 = vmatpush1.msra.mxu0 0.0
        %1519 = vmatprep.subr.mxu0 0.0
        %1520 = vmatpush1.msra.mxu0 0.0
        %1521 = vmatprep.subr.mxu0 0.0
        %1522 = vmatpush1.msra.mxu0 0.0
        %1523 = vmatprep.subr.mxu0 0.0
        %1524 = vmatpush1.msra.mxu0 0.0
        %1525 = vmatprep.subr.mxu0 0.0
        %1526 = vmatpush1.msra.mxu0 0.0
        %1527 = vmatprep.subr.mxu0 0.0
        %1528 = vmatpush1.msra.mxu0 0.0
        %1529 = vmatprep.subr.mxu0 0.0
        %1530 = vmatpush1.msra.mxu0 0.0
        %1531 = vmatprep.subr.mxu0 0.0
        %1532 = vmatpush1.msra.mxu0 0.0
        %1533 = vmatprep.subr.mxu0 0.0
        %1534 = vmatpush1.msra.mxu0 0.0
        %1535 = vmatprep.subr.mxu0 0.0
        %1536 = vmatpush1.msra.mxu0 0.0
        %1537 = vmatprep.subr.mxu0 0.0
        %1538 = vmatpush1.msra.mxu0 0.0
        %1539 = vmatprep.subr.mxu0 0.0
        %1540 = vmatpush1.msra.mxu0 0.0
        %1541 = vmatprep.subr.mxu0 0.0
        %1542 = vmatpush1.msra.mxu0 0.0
        %1543 = vmatprep.subr.mxu0 0.0
        %1544 = vmatpush1.msra.mxu0 0.0
        %1545 = vmatprep.subr.mxu0 0.0
        %1546 = vmatpush1.msra.mxu0 0.0
        %1547 = vmatprep.subr.mxu0 0.0
        %1548 = vmatpush1.msra.mxu0 0.0
        %1549 = vmatprep.subr.mxu0 0.0
        %1550 = vmatpush1.msra.mxu0 0.0
        %1551 = vmatprep.subr.mxu0 0.0
        %1552 = vmatpush1.msra.mxu0 0.0
        %1553 = vmatprep.subr.mxu0 0.0
        %1554 = vmatpush1.msra.mxu0 0.0
        %1555 = vmatprep.subr.mxu0 0.0
        %1556 = vmatpush1.msra.mxu0 0.0
        %1557 = vmatprep.subr.mxu0 0.0
        %1558 = vmatpush1.msra.mxu0 0.0
        %1559 = vmatprep.subr.mxu0 0.0
        %1560 = vmatpush1.msra.mxu0 0.0
        %1561 = vmatprep.subr.mxu0 0.0
        %1562 = vmatpush1.msra.mxu0 0.0
        %1563 = vmatprep.subr.mxu0 0.0
        %1564 = vmatpush1.msra.mxu0 0.0
        %1565 = vmatprep.subr.mxu0 0.0
        %1566 = vmatpush1.msra.mxu0 0.0
        %1567 = vmatprep.subr.mxu0 0.0
        %1568 = vmatpush1.msra.mxu0 0.0
        %1569 = vmatprep.subr.mxu0 0.0
        %1570 = vmatpush1.msra.mxu0 0.0
        %1571 = vmatprep.subr.mxu0 0.0
        %1572 = vmatpush1.msra.mxu0 0.0
        %1573 = vmatprep.subr.mxu0 0.0
        %1574 = vmatpush1.msra.mxu0 0.0
        %1575 = vmatprep.subr.mxu0 0.0
        %1576 = vmatpush1.msra.mxu0 0.0
        %1577 = vmatprep.mubr.f32.mxu0 0.0
        %1578 = vmatmul.mubr.f32.gmra.mrb[0].mxu0 %v1508
        %v1579 = vpop.f32.mrb[0].mxu0
        %v1580 = vadd.f32 %v1506, %v1579
        %v1581 = vpop.f32.mrb[0].mxu0
        %1582 = vmatprep.mubr.f32.mxu0 0.0
        %1583 = vmatmul.mubr.f32.gmra.mrb[0].mxu0 %v1511
        %v1584 = vpop.f32.mrb[0].mxu0
        %v1585 = vadd.f32 %v1506, %v1584
        %v1586 = vpop.f32.mrb[0].mxu0
        %1587 = vdwg.mxu0
        %v1588 = vmax.f32 %v1580, 0.0
        %v1589 = vmax.f32 %v1585, 0.0
        %v1590 = vadd.f32 %v1588, 0.0
        %v1591 = vadd.f32 %v1589, 0.0
        %1593 = vset.pattern.permute.xlu0 64
        %1594 = vperm.xlu0 %1593, %v1334
        %v1595 = vpop.permute.xlu0 %1594
        %1598 = vset.pattern.permute.xlu0 64
        %1599 = vperm.xlu0 %1598, %v1340
        %v1600 = vpop.permute.xlu0 %1599
        %v1602 = vlaneseq
        %v1603 = vshrl.u32 %v1602, 7
        %v1604 = vsub.s32 1, %v1603
        %v1605 = vrot.slane %v1435, %v1604
        %v1606 = vadd.f32 %v1595, %v1605
        %v1607 = vadd.f32 %v1600, %v1605
        %vm1608 = vcmp.gt.f32.partialorder %v1606, 0.0
        %vm1609 = vcmp.gt.f32.partialorder %v1607, 0.0
        %v1610 = vmul.f32 %v1606, 0.2
        %v1611 = vmul.f32 %v1607, 0.2
        %v1612 = vsel %vm1608, %v1606, %v1610
        %v1613 = vsel %vm1609, %v1607, %v1611
        %v1614 = vsel %vm944, %v1612, -1e+30
        %v1615 = vsel %vm945, %v1613, -1e+30
        %v1616 = vsel %vm804, %v1614, -inf
        %1617 = vmax.xlane.f32.xlu0 %v1616
        %v1618 = vpop.xlane.xlu0 %1617
        %v1619 = vsel %vm804, %v1615, -inf
        %1620 = vmax.xlane.f32.xlu0 %v1619
        %v1621 = vpop.xlane.xlu0 %1620
        %v1622 = vsub.f32 %v1612, %v1618
        %v1623 = vsub.f32 %v1613, %v1621
        %v1624 = vmin.f32 %v1622, 0.0
        %v1625 = vmin.f32 %v1623, 0.0
        %v1626 = vmul.f32 %v1624, 1.442695
        %v1627 = vpow.pop %v1626
        %v1628 = vmul.f32 %v1625, 1.442695
        %v1629 = vpow.pop %v1628
        %v1630 = vmul.f32 %v1627, %v546
        %v1631 = vmul.f32 %v1629, %v547
        %v1632 = vsel %vm804, %v1630, 0.0
        %1633 = vadd.xlane.f32.xlu0 %v1632
        %v1634 = vpop.xlane.xlu0 %1633
        %v1635 = vsel %vm804, %v1631, 0.0
        %1636 = vadd.xlane.f32.xlu0 %v1635
        %v1637 = vpop.xlane.xlu0 %1636
        %v1638 = vmax.f32 %v1634, 1e-30
        %v1639 = vmax.f32 %v1637, 1e-30
        %v1640 = vrcp.pop %v1638
        %v1641 = vrcp.pop %v1639
        %v1642 = vmul.f32 %v1630, %v1640
        %v1643 = vmul.f32 %v1631, %v1641
        %v1644 = vlaneseq
        %v1645 = vshrl.u32 %v1644, 7
        %v1646 = vsub.s32 1, %v1645
        %v1647 = vrot.slane %v1223, %v1646
        %v1649 = vsel %vm804, %v1642, 0
        %v1652 = vsel %vm804, %v1643, 0
        %1654 = vmatprep.subr.mxu0 0.0
        %1655 = vmatpush1.msra.mxu0 %v1334
        %1656 = vmatprep.subr.mxu0 0.0
        %1657 = vmatpush1.msra.mxu0 %v1340
        %1658 = vmatprep.subr.mxu0 0.0
        %1659 = vmatpush1.msra.mxu0 0.0
        %1660 = vmatprep.subr.mxu0 0.0
        %1661 = vmatpush1.msra.mxu0 0.0
        %1662 = vmatprep.subr.mxu0 0.0
        %1663 = vmatpush1.msra.mxu0 0.0
        %1664 = vmatprep.subr.mxu0 0.0
        %1665 = vmatpush1.msra.mxu0 0.0
        %1666 = vmatprep.subr.mxu0 0.0
        %1667 = vmatpush1.msra.mxu0 0.0
        %1668 = vmatprep.subr.mxu0 0.0
        %1669 = vmatpush1.msra.mxu0 0.0
        %1670 = vmatprep.subr.mxu0 0.0
        %1671 = vmatpush1.msra.mxu0 0.0
        %1672 = vmatprep.subr.mxu0 0.0
        %1673 = vmatpush1.msra.mxu0 0.0
        %1674 = vmatprep.subr.mxu0 0.0
        %1675 = vmatpush1.msra.mxu0 0.0
        %1676 = vmatprep.subr.mxu0 0.0
        %1677 = vmatpush1.msra.mxu0 0.0
        %1678 = vmatprep.subr.mxu0 0.0
        %1679 = vmatpush1.msra.mxu0 0.0
        %1680 = vmatprep.subr.mxu0 0.0
        %1681 = vmatpush1.msra.mxu0 0.0
        %1682 = vmatprep.subr.mxu0 0.0
        %1683 = vmatpush1.msra.mxu0 0.0
        %1684 = vmatprep.subr.mxu0 0.0
        %1685 = vmatpush1.msra.mxu0 0.0
        %1686 = vmatprep.subr.mxu0 0.0
        %1687 = vmatpush1.msra.mxu0 0.0
        %1688 = vmatprep.subr.mxu0 0.0
        %1689 = vmatpush1.msra.mxu0 0.0
        %1690 = vmatprep.subr.mxu0 0.0
        %1691 = vmatpush1.msra.mxu0 0.0
        %1692 = vmatprep.subr.mxu0 0.0
        %1693 = vmatpush1.msra.mxu0 0.0
        %1694 = vmatprep.subr.mxu0 0.0
        %1695 = vmatpush1.msra.mxu0 0.0
        %1696 = vmatprep.subr.mxu0 0.0
        %1697 = vmatpush1.msra.mxu0 0.0
        %1698 = vmatprep.subr.mxu0 0.0
        %1699 = vmatpush1.msra.mxu0 0.0
        %1700 = vmatprep.subr.mxu0 0.0
        %1701 = vmatpush1.msra.mxu0 0.0
        %1702 = vmatprep.subr.mxu0 0.0
        %1703 = vmatpush1.msra.mxu0 0.0
        %1704 = vmatprep.subr.mxu0 0.0
        %1705 = vmatpush1.msra.mxu0 0.0
        %1706 = vmatprep.subr.mxu0 0.0
        %1707 = vmatpush1.msra.mxu0 0.0
        %1708 = vmatprep.subr.mxu0 0.0
        %1709 = vmatpush1.msra.mxu0 0.0
        %1710 = vmatprep.subr.mxu0 0.0
        %1711 = vmatpush1.msra.mxu0 0.0
        %1712 = vmatprep.subr.mxu0 0.0
        %1713 = vmatpush1.msra.mxu0 0.0
        %1714 = vmatprep.subr.mxu0 0.0
        %1715 = vmatpush1.msra.mxu0 0.0
        %1716 = vmatprep.subr.mxu0 0.0
        %1717 = vmatpush1.msra.mxu0 0.0
        %1718 = vmatprep.mubr.f32.mxu0 0.0
        %1719 = vmatmul.mubr.f32.gmra.mrb[0].mxu0 %v1649
        %v1720 = vpop.f32.mrb[0].mxu0
        %v1721 = vadd.f32 %v1647, %v1720
        %v1722 = vpop.f32.mrb[0].mxu0
        %1723 = vmatprep.mubr.f32.mxu0 0.0
        %1724 = vmatmul.mubr.f32.gmra.mrb[0].mxu0 %v1652
        %v1725 = vpop.f32.mrb[0].mxu0
        %v1726 = vadd.f32 %v1647, %v1725
        %v1727 = vpop.f32.mrb[0].mxu0
        %1728 = vdwg.mxu0
        %v1729 = vmax.f32 %v1721, 0.0
        %v1730 = vmax.f32 %v1726, 0.0
        %v1731 = vadd.f32 %v1590, %v1729
        %v1732 = vadd.f32 %v1591, %v1730
        %1734 = vset.pattern.permute.xlu0 64
        %1735 = vperm.xlu0 %1734, %v1409
        %v1736 = vpop.permute.xlu0 %1735
        %1739 = vset.pattern.permute.xlu0 64
        %1740 = vperm.xlu0 %1739, %v1415
        %v1741 = vpop.permute.xlu0 %1740
        %v1743 = vlaneseq
        %v1744 = vshrl.u32 %v1743, 7
        %v1745 = vsub.s32 2, %v1744
        %v1746 = vrot.slane %v1435, %v1745
        %v1747 = vadd.f32 %v1736, %v1746
        %v1748 = vadd.f32 %v1741, %v1746
        %vm1749 = vcmp.gt.f32.partialorder %v1747, 0.0
        %vm1750 = vcmp.gt.f32.partialorder %v1748, 0.0
        %v1751 = vmul.f32 %v1747, 0.2
        %v1752 = vmul.f32 %v1748, 0.2
        %v1753 = vsel %vm1749, %v1747, %v1751
        %v1754 = vsel %vm1750, %v1748, %v1752
        %v1755 = vsel %vm1087, %v1753, -1e+30
        %v1756 = vsel %vm1088, %v1754, -1e+30
        %v1757 = vsel %vm804, %v1755, -inf
        %1758 = vmax.xlane.f32.xlu0 %v1757
        %v1759 = vpop.xlane.xlu0 %1758
        %v1760 = vsel %vm804, %v1756, -inf
        %1761 = vmax.xlane.f32.xlu0 %v1760
        %v1762 = vpop.xlane.xlu0 %1761
        %v1763 = vsub.f32 %v1753, %v1759
        %v1764 = vsub.f32 %v1754, %v1762
        %v1765 = vmin.f32 %v1763, 0.0
        %v1766 = vmin.f32 %v1764, 0.0
        %v1767 = vmul.f32 %v1765, 1.442695
        %v1768 = vpow.pop %v1767
        %v1769 = vmul.f32 %v1766, 1.442695
        %v1770 = vpow.pop %v1769
        %v1771 = vmul.f32 %v1768, %v549
        %v1772 = vmul.f32 %v1770, %v550
        %v1773 = vsel %vm804, %v1771, 0.0
        %1774 = vadd.xlane.f32.xlu0 %v1773
        %v1775 = vpop.xlane.xlu0 %1774
        %v1776 = vsel %vm804, %v1772, 0.0
        %1777 = vadd.xlane.f32.xlu0 %v1776
        %v1778 = vpop.xlane.xlu0 %1777
        %v1779 = vmax.f32 %v1775, 1e-30
        %v1780 = vmax.f32 %v1778, 1e-30
        %v1781 = vrcp.pop %v1779
        %v1782 = vrcp.pop %v1780
        %v1783 = vmul.f32 %v1771, %v1781
        %v1784 = vmul.f32 %v1772, %v1782
        %v1785 = vlaneseq
        %v1786 = vshrl.u32 %v1785, 7
        %v1787 = vsub.s32 2, %v1786
        %v1788 = vrot.slane %v1223, %v1787
        %v1790 = vsel %vm804, %v1783, 0
        %v1793 = vsel %vm804, %v1784, 0
        %1795 = vmatprep.subr.mxu0 0.0
        %1796 = vmatpush1.msra.mxu0 %v1409
        %1797 = vmatprep.subr.mxu0 0.0
        %1798 = vmatpush1.msra.mxu0 %v1415
        %1799 = vmatprep.subr.mxu0 0.0
        %1800 = vmatpush1.msra.mxu0 0.0
        %1801 = vmatprep.subr.mxu0 0.0
        %1802 = vmatpush1.msra.mxu0 0.0
        %1803 = vmatprep.subr.mxu0 0.0
        %1804 = vmatpush1.msra.mxu0 0.0
        %1805 = vmatprep.subr.mxu0 0.0
        %1806 = vmatpush1.msra.mxu0 0.0
        %1807 = vmatprep.subr.mxu0 0.0
        %1808 = vmatpush1.msra.mxu0 0.0
        %1809 = vmatprep.subr.mxu0 0.0
        %1810 = vmatpush1.msra.mxu0 0.0
        %1811 = vmatprep.subr.mxu0 0.0
        %1812 = vmatpush1.msra.mxu0 0.0
        %1813 = vmatprep.subr.mxu0 0.0
        %1814 = vmatpush1.msra.mxu0 0.0
        %1815 = vmatprep.subr.mxu0 0.0
        %1816 = vmatpush1.msra.mxu0 0.0
        %1817 = vmatprep.subr.mxu0 0.0
        %1818 = vmatpush1.msra.mxu0 0.0
        %1819 = vmatprep.subr.mxu0 0.0
        %1820 = vmatpush1.msra.mxu0 0.0
        %1821 = vmatprep.subr.mxu0 0.0
        %1822 = vmatpush1.msra.mxu0 0.0
        %1823 = vmatprep.subr.mxu0 0.0
        %1824 = vmatpush1.msra.mxu0 0.0
        %1825 = vmatprep.subr.mxu0 0.0
        %1826 = vmatpush1.msra.mxu0 0.0
        %1827 = vmatprep.subr.mxu0 0.0
        %1828 = vmatpush1.msra.mxu0 0.0
        %1829 = vmatprep.subr.mxu0 0.0
        %1830 = vmatpush1.msra.mxu0 0.0
        %1831 = vmatprep.subr.mxu0 0.0
        %1832 = vmatpush1.msra.mxu0 0.0
        %1833 = vmatprep.subr.mxu0 0.0
        %1834 = vmatpush1.msra.mxu0 0.0
        %1835 = vmatprep.subr.mxu0 0.0
        %1836 = vmatpush1.msra.mxu0 0.0
        %1837 = vmatprep.subr.mxu0 0.0
        %1838 = vmatpush1.msra.mxu0 0.0
        %1839 = vmatprep.subr.mxu0 0.0
        %1840 = vmatpush1.msra.mxu0 0.0
        %1841 = vmatprep.subr.mxu0 0.0
        %1842 = vmatpush1.msra.mxu0 0.0
        %1843 = vmatprep.subr.mxu0 0.0
        %1844 = vmatpush1.msra.mxu0 0.0
        %1845 = vmatprep.subr.mxu0 0.0
        %1846 = vmatpush1.msra.mxu0 0.0
        %1847 = vmatprep.subr.mxu0 0.0
        %1848 = vmatpush1.msra.mxu0 0.0
        %1849 = vmatprep.subr.mxu0 0.0
        %1850 = vmatpush1.msra.mxu0 0.0
        %1851 = vmatprep.subr.mxu0 0.0
        %1852 = vmatpush1.msra.mxu0 0.0
        %1853 = vmatprep.subr.mxu0 0.0
        %1854 = vmatpush1.msra.mxu0 0.0
        %1855 = vmatprep.subr.mxu0 0.0
        %1856 = vmatpush1.msra.mxu0 0.0
        %1857 = vmatprep.subr.mxu0 0.0
        %1858 = vmatpush1.msra.mxu0 0.0
        %1859 = vmatprep.mubr.f32.mxu0 0.0
        %1860 = vmatmul.mubr.f32.gmra.mrb[0].mxu0 %v1790
        %v1861 = vpop.f32.mrb[0].mxu0
        %v1862 = vadd.f32 %v1788, %v1861
        %v1863 = vpop.f32.mrb[0].mxu0
        %1864 = vmatprep.mubr.f32.mxu0 0.0
        %1865 = vmatmul.mubr.f32.gmra.mrb[0].mxu0 %v1793
        %v1866 = vpop.f32.mrb[0].mxu0
        %v1867 = vadd.f32 %v1788, %v1866
        %v1868 = vpop.f32.mrb[0].mxu0
        %1869 = vdwg.mxu0
        %v1870 = vmax.f32 %v1862, 0.0
        %v1871 = vmax.f32 %v1867, 0.0
        %v1872 = vadd.f32 %v1731, %v1870
        %v1873 = vadd.f32 %v1732, %v1871
        %v1874 = vadd.f32 %v1220, %v1872
        %v1875 = vadd.f32 %v1221, %v1873
        %v1876 = vlaneseq
        %v1877 = vshrl.u32 %v1876, 7
        %v1878 = vsub.s32 0, %v1877
        %v1879 = vrot.slane %v1225, %v1878
        %v1880 = vmul.f32 %v1874, %v1879
        %v1881 = vmul.f32 %v1875, %v1879
        %v1882 = vlaneseq
        %v1883 = vshrl.u32 %v1882, 7
        %v1884 = vsub.s32 1, %v1883
        %v1885 = vrot.slane %v1225, %v1884
        %v1886 = vadd.f32 %v1880, %v1885
        %v1887 = vadd.f32 %v1881, %v1885
        %v1888 = vld [vmem:[%s540] sm:$0xff]
        %v1889 = vld [vmem:[%s540 + $0x8] sm:$0xff]
        %v1890 = vlaneseq
        %v1891 = vand.u32 %v1890, 127
        %1892 = vset.pattern.permute.xlu0 0
        %1893 = vperm.xlu0 %1892, %v1888
        %v1894 = vpop.permute.xlu0 %1893
        %1895 = vset.pattern.permute.xlu0 0
        %1896 = vperm.xlu0 %1895, %v1889
        %v1897 = vpop.permute.xlu0 %1896
        %vm1898 = vcmp.eq.s32.totalorder %v1891, %v1894
        %vm1899 = vcmp.eq.s32.totalorder %v1891, %v1897
        %v1900 = vsel %vm1898, 1, 0
        %v1901 = vsel %vm1899, 1, 0
        %v1902 = vcvt.s32.f32 %v1900
        %v1903 = vcvt.s32.f32 %v1901
        %v1904 = vld [vmem:[%s6] sm:$0xff]
        %v1905 = vld [vmem:[%s6 + $0x8] sm:$0xff]
        %v1907 = vsel %vm804, %v1902, 0
        %v1910 = vsel %vm804, %v1903, 0
        %1912 = vmatprep.subr.mxu0 0.0
        %1913 = vmatpush1.msra.mxu0 %v1904
        %1914 = vmatprep.subr.mxu0 0.0
        %1915 = vmatpush1.msra.mxu0 %v1905
        %1916 = vmatprep.subr.mxu0 0.0
        %1917 = vmatpush1.msra.mxu0 0.0
        %1918 = vmatprep.subr.mxu0 0.0
        %1919 = vmatpush1.msra.mxu0 0.0
        %1920 = vmatprep.subr.mxu0 0.0
        %1921 = vmatpush1.msra.mxu0 0.0
        %1922 = vmatprep.subr.mxu0 0.0
        %1923 = vmatpush1.msra.mxu0 0.0
        %1924 = vmatprep.subr.mxu0 0.0
        %1925 = vmatpush1.msra.mxu0 0.0
        %1926 = vmatprep.subr.mxu0 0.0
        %1927 = vmatpush1.msra.mxu0 0.0
        %1928 = vmatprep.subr.mxu0 0.0
        %1929 = vmatpush1.msra.mxu0 0.0
        %1930 = vmatprep.subr.mxu0 0.0
        %1931 = vmatpush1.msra.mxu0 0.0
        %1932 = vmatprep.subr.mxu0 0.0
        %1933 = vmatpush1.msra.mxu0 0.0
        %1934 = vmatprep.subr.mxu0 0.0
        %1935 = vmatpush1.msra.mxu0 0.0
        %1936 = vmatprep.subr.mxu0 0.0
        %1937 = vmatpush1.msra.mxu0 0.0
        %1938 = vmatprep.subr.mxu0 0.0
        %1939 = vmatpush1.msra.mxu0 0.0
        %1940 = vmatprep.subr.mxu0 0.0
        %1941 = vmatpush1.msra.mxu0 0.0
        %1942 = vmatprep.subr.mxu0 0.0
        %1943 = vmatpush1.msra.mxu0 0.0
        %1944 = vmatprep.subr.mxu0 0.0
        %1945 = vmatpush1.msra.mxu0 0.0
        %1946 = vmatprep.subr.mxu0 0.0
        %1947 = vmatpush1.msra.mxu0 0.0
        %1948 = vmatprep.subr.mxu0 0.0
        %1949 = vmatpush1.msra.mxu0 0.0
        %1950 = vmatprep.subr.mxu0 0.0
        %1951 = vmatpush1.msra.mxu0 0.0
        %1952 = vmatprep.subr.mxu0 0.0
        %1953 = vmatpush1.msra.mxu0 0.0
        %1954 = vmatprep.subr.mxu0 0.0
        %1955 = vmatpush1.msra.mxu0 0.0
        %1956 = vmatprep.subr.mxu0 0.0
        %1957 = vmatpush1.msra.mxu0 0.0
        %1958 = vmatprep.subr.mxu0 0.0
        %1959 = vmatpush1.msra.mxu0 0.0
        %1960 = vmatprep.subr.mxu0 0.0
        %1961 = vmatpush1.msra.mxu0 0.0
        %1962 = vmatprep.subr.mxu0 0.0
        %1963 = vmatpush1.msra.mxu0 0.0
        %1964 = vmatprep.subr.mxu0 0.0
        %1965 = vmatpush1.msra.mxu0 0.0
        %1966 = vmatprep.subr.mxu0 0.0
        %1967 = vmatpush1.msra.mxu0 0.0
        %1968 = vmatprep.subr.mxu0 0.0
        %1969 = vmatpush1.msra.mxu0 0.0
        %1970 = vmatprep.subr.mxu0 0.0
        %1971 = vmatpush1.msra.mxu0 0.0
        %1972 = vmatprep.subr.mxu0 0.0
        %1973 = vmatpush1.msra.mxu0 0.0
        %1974 = vmatprep.subr.mxu0 0.0
        %1975 = vmatpush1.msra.mxu0 0.0
        %1976 = vmatprep.mubr.f32.mxu0 0.0
        %1977 = vmatmul.mubr.f32.gmra.mrb[0].mxu0 %v1907
        %v1978 = vpop.f32.mrb[0].mxu0
        %v1979 = vadd.f32 0.0, %v1978
        %v1980 = vpop.f32.mrb[0].mxu0
        %1981 = vmatprep.mubr.f32.mxu0 0.0
        %1982 = vmatmul.mubr.f32.gmra.mrb[0].mxu0 %v1910
        %v1983 = vpop.f32.mrb[0].mxu0
        %v1984 = vadd.f32 0.0, %v1983
        %v1985 = vpop.f32.mrb[0].mxu0
        %1986 = vdwg.mxu0
        %v1987 = vld [vmem:[%s7] sm:$0x3]
        %v1988 = vadd.f32 %v1886, %v1979
        %v1989 = vadd.f32 %v1887, %v1984
        %v1990 = vlaneseq
        %v1991 = vshrl.u32 %v1990, 7
        %v1992 = vsub.s32 0, %v1991
        %v1993 = vrot.slane %v1987, %v1992
        %v1994 = vmul.f32 %v1988, %v1993
        %v1995 = vmul.f32 %v1989, %v1993
        %v1996 = vlaneseq
        %v1997 = vshrl.u32 %v1996, 7
        %v1998 = vsub.s32 1, %v1997
        %v1999 = vrot.slane %v1987, %v1998
        %v2000 = vadd.f32 %v1994, %v1999
        %v2001 = vadd.f32 %v1995, %v1999
        %v2002 = vld [vmem:[%s475] sm:$0xff]
        %v2003 = vld [vmem:[%s475 + $0x8] sm:$0xff]
        %v2004 = vld [vmem:[%s11] sm:$0x3]
        %v2005 = vld [vmem:[#allocation7] sm:$0xff]
        %v2006 = vld [vmem:[#allocation7 + $0x8] sm:$0xff]
        %v2007 = vld [vmem:[#allocation7 + $0x10] sm:$0xff]
        %v2008 = vld [vmem:[#allocation7 + $0x18] sm:$0xff]
        %v2009 = vld [vmem:[#allocation7 + $0x20] sm:$0xff]
        %v2010 = vld [vmem:[#allocation7 + $0x28] sm:$0xff]
        %v2011 = vld [vmem:[#allocation7 + $0x30] sm:$0xff]
        %v2012 = vld [vmem:[#allocation7 + $0x38] sm:$0xff]
        %v2013 = vld [vmem:[#allocation7 + $0x40] sm:$0xff]
        %v2014 = vld [vmem:[#allocation7 + $0x48] sm:$0xff]
        %v2015 = vld [vmem:[#allocation7 + $0x50] sm:$0xff]
        %v2016 = vld [vmem:[#allocation7 + $0x58] sm:$0xff]
        %v2017 = vld [vmem:[#allocation7 + $0x60] sm:$0xff]
        %v2018 = vld [vmem:[#allocation7 + $0x68] sm:$0xff]
        %v2019 = vld [vmem:[#allocation7 + $0x70] sm:$0xff]
        %v2020 = vld [vmem:[#allocation7 + $0x78] sm:$0xff]
        %v2022 = vsel %vm585, %v2000, 0
        %v2025 = vsel %vm585, %v2001, 0
        %2027 = vmatprep.subr.mxu0 %v2006
        %2028 = vmatpush1.msra.mxu0 %v2005
        %2029 = vmatprep.subr.mxu0 %v2008
        %2030 = vmatpush1.msra.mxu0 %v2007
        %2031 = vmatprep.subr.mxu0 %v2010
        %2032 = vmatpush1.msra.mxu0 %v2009
        %2033 = vmatprep.subr.mxu0 %v2012
        %2034 = vmatpush1.msra.mxu0 %v2011
        %2035 = vmatprep.subr.mxu0 %v2014
        %2036 = vmatpush1.msra.mxu0 %v2013
        %2037 = vmatprep.subr.mxu0 %v2016
        %2038 = vmatpush1.msra.mxu0 %v2015
        %2039 = vmatprep.subr.mxu0 %v2018
        %2040 = vmatpush1.msra.mxu0 %v2017
        %2041 = vmatprep.subr.mxu0 %v2020
        %2042 = vmatpush1.msra.mxu0 %v2019
        %2043 = vmatprep.subr.mxu0 0.0
        %2044 = vmatpush1.msra.mxu0 0.0
        %2045 = vmatprep.subr.mxu0 0.0
        %2046 = vmatpush1.msra.mxu0 0.0
        %2047 = vmatprep.subr.mxu0 0.0
        %2048 = vmatpush1.msra.mxu0 0.0
        %2049 = vmatprep.subr.mxu0 0.0
        %2050 = vmatpush1.msra.mxu0 0.0
        %2051 = vmatprep.subr.mxu0 0.0
        %2052 = vmatpush1.msra.mxu0 0.0
        %2053 = vmatprep.subr.mxu0 0.0
        %2054 = vmatpush1.msra.mxu0 0.0
        %2055 = vmatprep.subr.mxu0 0.0
        %2056 = vmatpush1.msra.mxu0 0.0
        %2057 = vmatprep.subr.mxu0 0.0
        %2058 = vmatpush1.msra.mxu0 0.0
        %2059 = vmatprep.subr.mxu0 0.0
        %2060 = vmatpush1.msra.mxu0 0.0
        %2061 = vmatprep.subr.mxu0 0.0
        %2062 = vmatpush1.msra.mxu0 0.0
        %2063 = vmatprep.subr.mxu0 0.0
        %2064 = vmatpush1.msra.mxu0 0.0
        %2065 = vmatprep.subr.mxu0 0.0
        %2066 = vmatpush1.msra.mxu0 0.0
        %2067 = vmatprep.subr.mxu0 0.0
        %2068 = vmatpush1.msra.mxu0 0.0
        %2069 = vmatprep.subr.mxu0 0.0
        %2070 = vmatpush1.msra.mxu0 0.0
        %2071 = vmatprep.subr.mxu0 0.0
        %2072 = vmatpush1.msra.mxu0 0.0
        %2073 = vmatprep.subr.mxu0 0.0
        %2074 = vmatpush1.msra.mxu0 0.0
        %2075 = vmatprep.subr.mxu0 0.0
        %2076 = vmatpush1.msra.mxu0 0.0
        %2077 = vmatprep.subr.mxu0 0.0
        %2078 = vmatpush1.msra.mxu0 0.0
        %2079 = vmatprep.subr.mxu0 0.0
        %2080 = vmatpush1.msra.mxu0 0.0
        %2081 = vmatprep.subr.mxu0 0.0
        %2082 = vmatpush1.msra.mxu0 0.0
        %2083 = vmatprep.subr.mxu0 0.0
        %2084 = vmatpush1.msra.mxu0 0.0
        %2085 = vmatprep.subr.mxu0 0.0
        %2086 = vmatpush1.msra.mxu0 0.0
        %2087 = vmatprep.subr.mxu0 0.0
        %2088 = vmatpush1.msra.mxu0 0.0
        %2089 = vmatprep.subr.mxu0 0.0
        %2090 = vmatpush1.msra.mxu0 0.0
        %2091 = vmatprep.mubr.f32.mxu0 0.0
        %2092 = vmatmul.mubr.f32.gmra.mrb[0].mxu0 %v2022
        %v2093 = vpop.f32.mrb[0].mxu0
        %v2094 = vadd.f32 0.0, %v2093
        %v2095 = vpop.f32.mrb[0].mxu0
        %v2096 = vadd.f32 0.0, %v2095
        %2097 = vmatprep.mubr.f32.mxu0 0.0
        %2098 = vmatmul.mubr.f32.gmra.mrb[0].mxu0 %v2025
        %v2099 = vpop.f32.mrb[0].mxu0
        %v2100 = vadd.f32 0.0, %v2099
        %v2101 = vpop.f32.mrb[0].mxu0
        %v2102 = vadd.f32 0.0, %v2101
        %2103 = vdwg.mxu0
        %2104 = vxpose.xlu0.b32.start [1/16] %v2096, 128
        %2105 = vxpose.xlu0.b32.cont [2/16] %v2102, 128
        %2106 = vxpose.xlu0.b32.cont [3/16] 0.0, 128
        %2107 = vxpose.xlu0.b32.cont [4/16] 0.0, 128
        %2108 = vxpose.xlu0.b32.cont [5/16] 0.0, 128
        %2109 = vxpose.xlu0.b32.cont [6/16] 0.0, 128
        %2110 = vxpose.xlu0.b32.cont [7/16] 0.0, 128
        %2111 = vxpose.xlu0.b32.cont [8/16] 0.0, 128
        %2112 = vxpose.xlu0.b32.cont [9/16] 0.0, 128
        %2113 = vxpose.xlu0.b32.cont [10/16] 0.0, 128
        %2114 = vxpose.xlu0.b32.cont [11/16] 0.0, 128
        %2115 = vxpose.xlu0.b32.cont [12/16] 0.0, 128
        %2116 = vxpose.xlu0.b32.cont [13/16] 0.0, 128
        %2117 = vxpose.xlu0.b32.cont [14/16] 0.0, 128
        %2118 = vxpose.xlu0.b32.cont [15/16] 0.0, 128
        %2119 = vxpose.xlu0.b32.end [16/16] 0.0, 128
        %v2120 = vpop.trf.xlu0
        %v2121 = vpop.trf.xlu0
        %v2122 = vpop.trf.xlu0
        %v2123 = vpop.trf.xlu0
        %v2124 = vpop.trf.xlu0
        %v2125 = vpop.trf.xlu0
        %v2126 = vpop.trf.xlu0
        %v2127 = vpop.trf.xlu0
        %v2128 = vpop.trf.xlu0
        %v2129 = vpop.trf.xlu0
        %v2130 = vpop.trf.xlu0
        %v2131 = vpop.trf.xlu0
        %v2132 = vpop.trf.xlu0
        %v2133 = vpop.trf.xlu0
        %v2134 = vpop.trf.xlu0
        %v2135 = vpop.trf.xlu0
        %v2136 = vld [vmem:[%s9] sm:$0x1]
        %2138 = vset.pattern.permute.xlu0 64
        %2139 = vperm.xlu0 %2138, %v2094
        %v2140 = vpop.permute.xlu0 %2139
        %2143 = vset.pattern.permute.xlu0 64
        %2144 = vperm.xlu0 %2143, %v2100
        %v2145 = vpop.permute.xlu0 %2144
        %v2147 = vlaneseq
        %v2148 = vshrl.u32 %v2147, 7
        %v2149 = vsub.s32 0, %v2148
        %v2150 = vrot.slane %v2120, %v2149
        %v2151 = vadd.f32 %v2140, %v2150
        %v2152 = vadd.f32 %v2145, %v2150
        %vm2153 = vcmp.gt.f32.partialorder %v2151, 0.0
        %vm2154 = vcmp.gt.f32.partialorder %v2152, 0.0
        %v2155 = vmul.f32 %v2151, 0.2
        %v2156 = vmul.f32 %v2152, 0.2
        %v2157 = vsel %vm2153, %v2151, %v2155
        %v2158 = vsel %vm2154, %v2152, %v2156
        %vm2159 = vcmp.gt.f32.partialorder %v2002, 0.0
        %vm2160 = vcmp.gt.f32.partialorder %v2003, 0.0
        %v2161 = vsel %vm2159, %v2157, -1e+30
        %v2162 = vsel %vm2160, %v2158, -1e+30
        %v2163 = vsel %vm804, %v2161, -inf
        %2164 = vmax.xlane.f32.xlu0 %v2163
        %v2165 = vpop.xlane.xlu0 %2164
        %v2166 = vsel %vm804, %v2162, -inf
        %2167 = vmax.xlane.f32.xlu0 %v2166
        %v2168 = vpop.xlane.xlu0 %2167
        %v2169 = vsub.f32 %v2157, %v2165
        %v2170 = vsub.f32 %v2158, %v2168
        %v2171 = vmin.f32 %v2169, 0.0
        %v2172 = vmin.f32 %v2170, 0.0
        %v2173 = vmul.f32 %v2171, 1.442695
        %v2174 = vpow.pop %v2173
        %v2175 = vmul.f32 %v2172, 1.442695
        %v2176 = vpow.pop %v2175
        %v2177 = vmul.f32 %v2174, %v2002
        %v2178 = vmul.f32 %v2176, %v2003
        %v2179 = vsel %vm804, %v2177, 0.0
        %2180 = vadd.xlane.f32.xlu0 %v2179
        %v2181 = vpop.xlane.xlu0 %2180
        %v2182 = vsel %vm804, %v2178, 0.0
        %2183 = vadd.xlane.f32.xlu0 %v2182
        %v2184 = vpop.xlane.xlu0 %2183
        %v2185 = vmax.f32 %v2181, 1e-30
        %v2186 = vmax.f32 %v2184, 1e-30
        %v2187 = vrcp.pop %v2185
        %v2188 = vrcp.pop %v2186
        %v2189 = vmul.f32 %v2177, %v2187
        %v2190 = vmul.f32 %v2178, %v2188
        %v2192 = vlaneseq
        %v2193 = vshrl.u32 %v2192, 7
        %v2194 = vsub.s32 0, %v2193
        %v2195 = vrot.slane %v2136, %v2194
        %v2198 = vsel %vm804, %v2189, 0
        %v2201 = vsel %vm804, %v2190, 0
        %2203 = vmatprep.subr.mxu0 0.0
        %2204 = vmatpush1.msra.mxu0 %v2094
        %2205 = vmatprep.subr.mxu0 0.0
        %2206 = vmatpush1.msra.mxu0 %v2100
        %2207 = vmatprep.subr.mxu0 0.0
        %2208 = vmatpush1.msra.mxu0 0.0
        %2209 = vmatprep.subr.mxu0 0.0
        %2210 = vmatpush1.msra.mxu0 0.0
        %2211 = vmatprep.subr.mxu0 0.0
        %2212 = vmatpush1.msra.mxu0 0.0
        %2213 = vmatprep.subr.mxu0 0.0
        %2214 = vmatpush1.msra.mxu0 0.0
        %2215 = vmatprep.subr.mxu0 0.0
        %2216 = vmatpush1.msra.mxu0 0.0
        %2217 = vmatprep.subr.mxu0 0.0
        %2218 = vmatpush1.msra.mxu0 0.0
        %2219 = vmatprep.subr.mxu0 0.0
        %2220 = vmatpush1.msra.mxu0 0.0
        %2221 = vmatprep.subr.mxu0 0.0
        %2222 = vmatpush1.msra.mxu0 0.0
        %2223 = vmatprep.subr.mxu0 0.0
        %2224 = vmatpush1.msra.mxu0 0.0
        %2225 = vmatprep.subr.mxu0 0.0
        %2226 = vmatpush1.msra.mxu0 0.0
        %2227 = vmatprep.subr.mxu0 0.0
        %2228 = vmatpush1.msra.mxu0 0.0
        %2229 = vmatprep.subr.mxu0 0.0
        %2230 = vmatpush1.msra.mxu0 0.0
        %2231 = vmatprep.subr.mxu0 0.0
        %2232 = vmatpush1.msra.mxu0 0.0
        %2233 = vmatprep.subr.mxu0 0.0
        %2234 = vmatpush1.msra.mxu0 0.0
        %2235 = vmatprep.subr.mxu0 0.0
        %2236 = vmatpush1.msra.mxu0 0.0
        %2237 = vmatprep.subr.mxu0 0.0
        %2238 = vmatpush1.msra.mxu0 0.0
        %2239 = vmatprep.subr.mxu0 0.0
        %2240 = vmatpush1.msra.mxu0 0.0
        %2241 = vmatprep.subr.mxu0 0.0
        %2242 = vmatpush1.msra.mxu0 0.0
        %2243 = vmatprep.subr.mxu0 0.0
        %2244 = vmatpush1.msra.mxu0 0.0
        %2245 = vmatprep.subr.mxu0 0.0
        %2246 = vmatpush1.msra.mxu0 0.0
        %2247 = vmatprep.subr.mxu0 0.0
        %2248 = vmatpush1.msra.mxu0 0.0
        %2249 = vmatprep.subr.mxu0 0.0
        %2250 = vmatpush1.msra.mxu0 0.0
        %2251 = vmatprep.subr.mxu0 0.0
        %2252 = vmatpush1.msra.mxu0 0.0
        %2253 = vmatprep.subr.mxu0 0.0
        %2254 = vmatpush1.msra.mxu0 0.0
        %2255 = vmatprep.subr.mxu0 0.0
        %2256 = vmatpush1.msra.mxu0 0.0
        %2257 = vmatprep.subr.mxu0 0.0
        %2258 = vmatpush1.msra.mxu0 0.0
        %2259 = vmatprep.subr.mxu0 0.0
        %2260 = vmatpush1.msra.mxu0 0.0
        %2261 = vmatprep.subr.mxu0 0.0
        %2262 = vmatpush1.msra.mxu0 0.0
        %2263 = vmatprep.subr.mxu0 0.0
        %2264 = vmatpush1.msra.mxu0 0.0
        %2265 = vmatprep.subr.mxu0 0.0
        %2266 = vmatpush1.msra.mxu0 0.0
        %2267 = vmatprep.mubr.f32.mxu0 0.0
        %2268 = vmatmul.mubr.f32.gmra.mrb[0].mxu0 %v2198
        %v2269 = vpop.f32.mrb[0].mxu0
        %v2270 = vadd.f32 %v2195, %v2269
        %v2271 = vpop.f32.mrb[0].mxu0
        %2272 = vmatprep.mubr.f32.mxu0 0.0
        %2273 = vmatmul.mubr.f32.gmra.mrb[0].mxu0 %v2201
        %v2274 = vpop.f32.mrb[0].mxu0
        %v2275 = vadd.f32 %v2195, %v2274
        %v2276 = vpop.f32.mrb[0].mxu0
        %2277 = vdwg.mxu0
        %v2278 = vmax.f32 %v2270, 0.0
        %v2279 = vmax.f32 %v2275, 0.0
        %v2280 = vadd.f32 %v2000, %v2278
        %v2281 = vadd.f32 %v2001, %v2279
        %v2282 = vlaneseq
        %v2283 = vshrl.u32 %v2282, 7
        %v2284 = vsub.s32 0, %v2283
        %v2285 = vrot.slane %v2004, %v2284
        %v2286 = vmul.f32 %v2280, %v2285
        %v2287 = vmul.f32 %v2281, %v2285
        %v2288 = vlaneseq
        %v2289 = vshrl.u32 %v2288, 7
        %v2290 = vsub.s32 1, %v2289
        %v2291 = vrot.slane %v2004, %v2290
        %v2292 = vadd.f32 %v2286, %v2291
        %v2293 = vadd.f32 %v2287, %v2291
        %s2294 = scalar_lea.vmem %s11, 2
        %v2295 = vld [vmem:[%s2294] sm:$0x3]
        %s2296 = scalar_lea.vmem [#allocation7], 128
        %v2297 = vld [vmem:[%s2296] sm:$0xff]
        %v2298 = vld [vmem:[%s2296 + $0x8] sm:$0xff]
        %v2299 = vld [vmem:[%s2296 + $0x10] sm:$0xff]
        %v2300 = vld [vmem:[%s2296 + $0x18] sm:$0xff]
        %v2301 = vld [vmem:[%s2296 + $0x20] sm:$0xff]
        %v2302 = vld [vmem:[%s2296 + $0x28] sm:$0xff]
        %v2303 = vld [vmem:[%s2296 + $0x30] sm:$0xff]
        %v2304 = vld [vmem:[%s2296 + $0x38] sm:$0xff]
        %v2305 = vld [vmem:[%s2296 + $0x40] sm:$0xff]
        %v2306 = vld [vmem:[%s2296 + $0x48] sm:$0xff]
        %v2307 = vld [vmem:[%s2296 + $0x50] sm:$0xff]
        %v2308 = vld [vmem:[%s2296 + $0x58] sm:$0xff]
        %v2309 = vld [vmem:[%s2296 + $0x60] sm:$0xff]
        %v2310 = vld [vmem:[%s2296 + $0x68] sm:$0xff]
        %v2311 = vld [vmem:[%s2296 + $0x70] sm:$0xff]
        %v2312 = vld [vmem:[%s2296 + $0x78] sm:$0xff]
        %v2314 = vsel %vm585, %v2292, 0
        %v2317 = vsel %vm585, %v2293, 0
        %2319 = vmatprep.subr.mxu0 %v2298
        %2320 = vmatpush1.msra.mxu0 %v2297
        %2321 = vmatprep.subr.mxu0 %v2300
        %2322 = vmatpush1.msra.mxu0 %v2299
        %2323 = vmatprep.subr.mxu0 %v2302
        %2324 = vmatpush1.msra.mxu0 %v2301
        %2325 = vmatprep.subr.mxu0 %v2304
        %2326 = vmatpush1.msra.mxu0 %v2303
        %2327 = vmatprep.subr.mxu0 %v2306
        %2328 = vmatpush1.msra.mxu0 %v2305
        %2329 = vmatprep.subr.mxu0 %v2308
        %2330 = vmatpush1.msra.mxu0 %v2307
        %2331 = vmatprep.subr.mxu0 %v2310
        %2332 = vmatpush1.msra.mxu0 %v2309
        %2333 = vmatprep.subr.mxu0 %v2312
        %2334 = vmatpush1.msra.mxu0 %v2311
        %2335 = vmatprep.subr.mxu0 0.0
        %2336 = vmatpush1.msra.mxu0 0.0
        %2337 = vmatprep.subr.mxu0 0.0
        %2338 = vmatpush1.msra.mxu0 0.0
        %2339 = vmatprep.subr.mxu0 0.0
        %2340 = vmatpush1.msra.mxu0 0.0
        %2341 = vmatprep.subr.mxu0 0.0
        %2342 = vmatpush1.msra.mxu0 0.0
        %2343 = vmatprep.subr.mxu0 0.0
        %2344 = vmatpush1.msra.mxu0 0.0
        %2345 = vmatprep.subr.mxu0 0.0
        %2346 = vmatpush1.msra.mxu0 0.0
        %2347 = vmatprep.subr.mxu0 0.0
        %2348 = vmatpush1.msra.mxu0 0.0
        %2349 = vmatprep.subr.mxu0 0.0
        %2350 = vmatpush1.msra.mxu0 0.0
        %2351 = vmatprep.subr.mxu0 0.0
        %2352 = vmatpush1.msra.mxu0 0.0
        %2353 = vmatprep.subr.mxu0 0.0
        %2354 = vmatpush1.msra.mxu0 0.0
        %2355 = vmatprep.subr.mxu0 0.0
        %2356 = vmatpush1.msra.mxu0 0.0
        %2357 = vmatprep.subr.mxu0 0.0
        %2358 = vmatpush1.msra.mxu0 0.0
        %2359 = vmatprep.subr.mxu0 0.0
        %2360 = vmatpush1.msra.mxu0 0.0
        %2361 = vmatprep.subr.mxu0 0.0
        %2362 = vmatpush1.msra.mxu0 0.0
        %2363 = vmatprep.subr.mxu0 0.0
        %2364 = vmatpush1.msra.mxu0 0.0
        %2365 = vmatprep.subr.mxu0 0.0
        %2366 = vmatpush1.msra.mxu0 0.0
        %2367 = vmatprep.subr.mxu0 0.0
        %2368 = vmatpush1.msra.mxu0 0.0
        %2369 = vmatprep.subr.mxu0 0.0
        %2370 = vmatpush1.msra.mxu0 0.0
        %2371 = vmatprep.subr.mxu0 0.0
        %2372 = vmatpush1.msra.mxu0 0.0
        %2373 = vmatprep.subr.mxu0 0.0
        %2374 = vmatpush1.msra.mxu0 0.0
        %2375 = vmatprep.subr.mxu0 0.0
        %2376 = vmatpush1.msra.mxu0 0.0
        %2377 = vmatprep.subr.mxu0 0.0
        %2378 = vmatpush1.msra.mxu0 0.0
        %2379 = vmatprep.subr.mxu0 0.0
        %2380 = vmatpush1.msra.mxu0 0.0
        %2381 = vmatprep.subr.mxu0 0.0
        %2382 = vmatpush1.msra.mxu0 0.0
        %2383 = vmatprep.mubr.f32.mxu0 0.0
        %2384 = vmatmul.mubr.f32.gmra.mrb[0].mxu0 %v2314
        %v2385 = vpop.f32.mrb[0].mxu0
        %v2386 = vadd.f32 0.0, %v2385
        %v2387 = vpop.f32.mrb[0].mxu0
        %v2388 = vadd.f32 0.0, %v2387
        %2389 = vmatprep.mubr.f32.mxu0 0.0
        %2390 = vmatmul.mubr.f32.gmra.mrb[0].mxu0 %v2317
        %v2391 = vpop.f32.mrb[0].mxu0
        %v2392 = vadd.f32 0.0, %v2391
        %v2393 = vpop.f32.mrb[0].mxu0
        %v2394 = vadd.f32 0.0, %v2393
        %2395 = vdwg.mxu0
        %2396 = vxpose.xlu0.b32.start [1/16] %v2388, 128
        %2397 = vxpose.xlu0.b32.cont [2/16] %v2394, 128
        %2398 = vxpose.xlu0.b32.cont [3/16] 0.0, 128
        %2399 = vxpose.xlu0.b32.cont [4/16] 0.0, 128
        %2400 = vxpose.xlu0.b32.cont [5/16] 0.0, 128
        %2401 = vxpose.xlu0.b32.cont [6/16] 0.0, 128
        %2402 = vxpose.xlu0.b32.cont [7/16] 0.0, 128
        %2403 = vxpose.xlu0.b32.cont [8/16] 0.0, 128
        %2404 = vxpose.xlu0.b32.cont [9/16] 0.0, 128
        %2405 = vxpose.xlu0.b32.cont [10/16] 0.0, 128
        %2406 = vxpose.xlu0.b32.cont [11/16] 0.0, 128
        %2407 = vxpose.xlu0.b32.cont [12/16] 0.0, 128
        %2408 = vxpose.xlu0.b32.cont [13/16] 0.0, 128
        %2409 = vxpose.xlu0.b32.cont [14/16] 0.0, 128
        %2410 = vxpose.xlu0.b32.cont [15/16] 0.0, 128
        %2411 = vxpose.xlu0.b32.end [16/16] 0.0, 128
        %v2412 = vpop.trf.xlu0
        %v2413 = vpop.trf.xlu0
        %v2414 = vpop.trf.xlu0
        %v2415 = vpop.trf.xlu0
        %v2416 = vpop.trf.xlu0
        %v2417 = vpop.trf.xlu0
        %v2418 = vpop.trf.xlu0
        %v2419 = vpop.trf.xlu0
        %v2420 = vpop.trf.xlu0
        %v2421 = vpop.trf.xlu0
        %v2422 = vpop.trf.xlu0
        %v2423 = vpop.trf.xlu0
        %v2424 = vpop.trf.xlu0
        %v2425 = vpop.trf.xlu0
        %v2426 = vpop.trf.xlu0
        %v2427 = vpop.trf.xlu0
        %s2428 = scalar_lea.vmem %s9, 1
        %v2429 = vld [vmem:[%s2428] sm:$0x1]
        %2431 = vset.pattern.permute.xlu0 64
        %2432 = vperm.xlu0 %2431, %v2386
        %v2433 = vpop.permute.xlu0 %2432
        %2436 = vset.pattern.permute.xlu0 64
        %2437 = vperm.xlu0 %2436, %v2392
        %v2438 = vpop.permute.xlu0 %2437
        %v2440 = vlaneseq
        %v2441 = vshrl.u32 %v2440, 7
        %v2442 = vsub.s32 0, %v2441
        %v2443 = vrot.slane %v2412, %v2442
        %v2444 = vadd.f32 %v2433, %v2443
        %v2445 = vadd.f32 %v2438, %v2443
        %vm2446 = vcmp.gt.f32.partialorder %v2444, 0.0
        %vm2447 = vcmp.gt.f32.partialorder %v2445, 0.0
        %v2448 = vmul.f32 %v2444, 0.2
        %v2449 = vmul.f32 %v2445, 0.2
        %v2450 = vsel %vm2446, %v2444, %v2448
        %v2451 = vsel %vm2447, %v2445, %v2449
        %v2452 = vsel %vm2159, %v2450, -1e+30
        %v2453 = vsel %vm2160, %v2451, -1e+30
        %v2454 = vsel %vm804, %v2452, -inf
        %2455 = vmax.xlane.f32.xlu0 %v2454
        %v2456 = vpop.xlane.xlu0 %2455
        %v2457 = vsel %vm804, %v2453, -inf
        %2458 = vmax.xlane.f32.xlu0 %v2457
        %v2459 = vpop.xlane.xlu0 %2458
        %v2460 = vsub.f32 %v2450, %v2456
        %v2461 = vsub.f32 %v2451, %v2459
        %v2462 = vmin.f32 %v2460, 0.0
        %v2463 = vmin.f32 %v2461, 0.0
        %v2464 = vmul.f32 %v2462, 1.442695
        %v2465 = vpow.pop %v2464
        %v2466 = vmul.f32 %v2463, 1.442695
        %v2467 = vpow.pop %v2466
        %v2468 = vmul.f32 %v2465, %v2002
        %v2469 = vmul.f32 %v2467, %v2003
        %v2470 = vsel %vm804, %v2468, 0.0
        %2471 = vadd.xlane.f32.xlu0 %v2470
        %v2472 = vpop.xlane.xlu0 %2471
        %v2473 = vsel %vm804, %v2469, 0.0
        %2474 = vadd.xlane.f32.xlu0 %v2473
        %v2475 = vpop.xlane.xlu0 %2474
        %v2476 = vmax.f32 %v2472, 1e-30
        %v2477 = vmax.f32 %v2475, 1e-30
        %v2478 = vrcp.pop %v2476
        %v2479 = vrcp.pop %v2477
        %v2480 = vmul.f32 %v2468, %v2478
        %v2481 = vmul.f32 %v2469, %v2479
        %v2483 = vlaneseq
        %v2484 = vshrl.u32 %v2483, 7
        %v2485 = vsub.s32 0, %v2484
        %v2486 = vrot.slane %v2429, %v2485
        %v2489 = vsel %vm804, %v2480, 0
        %v2492 = vsel %vm804, %v2481, 0
        %2494 = vmatprep.subr.mxu0 0.0
        %2495 = vmatpush1.msra.mxu0 %v2386
        %2496 = vmatprep.subr.mxu0 0.0
        %2497 = vmatpush1.msra.mxu0 %v2392
        %2498 = vmatprep.subr.mxu0 0.0
        %2499 = vmatpush1.msra.mxu0 0.0
        %2500 = vmatprep.subr.mxu0 0.0
        %2501 = vmatpush1.msra.mxu0 0.0
        %2502 = vmatprep.subr.mxu0 0.0
        %2503 = vmatpush1.msra.mxu0 0.0
        %2504 = vmatprep.subr.mxu0 0.0
        %2505 = vmatpush1.msra.mxu0 0.0
        %2506 = vmatprep.subr.mxu0 0.0
        %2507 = vmatpush1.msra.mxu0 0.0
        %2508 = vmatprep.subr.mxu0 0.0
        %2509 = vmatpush1.msra.mxu0 0.0
        %2510 = vmatprep.subr.mxu0 0.0
        %2511 = vmatpush1.msra.mxu0 0.0
        %2512 = vmatprep.subr.mxu0 0.0
        %2513 = vmatpush1.msra.mxu0 0.0
        %2514 = vmatprep.subr.mxu0 0.0
        %2515 = vmatpush1.msra.mxu0 0.0
        %2516 = vmatprep.subr.mxu0 0.0
        %2517 = vmatpush1.msra.mxu0 0.0
        %2518 = vmatprep.subr.mxu0 0.0
        %2519 = vmatpush1.msra.mxu0 0.0
        %2520 = vmatprep.subr.mxu0 0.0
        %2521 = vmatpush1.msra.mxu0 0.0
        %2522 = vmatprep.subr.mxu0 0.0
        %2523 = vmatpush1.msra.mxu0 0.0
        %2524 = vmatprep.subr.mxu0 0.0
        %2525 = vmatpush1.msra.mxu0 0.0
        %2526 = vmatprep.subr.mxu0 0.0
        %2527 = vmatpush1.msra.mxu0 0.0
        %2528 = vmatprep.subr.mxu0 0.0
        %2529 = vmatpush1.msra.mxu0 0.0
        %2530 = vmatprep.subr.mxu0 0.0
        %2531 = vmatpush1.msra.mxu0 0.0
        %2532 = vmatprep.subr.mxu0 0.0
        %2533 = vmatpush1.msra.mxu0 0.0
        %2534 = vmatprep.subr.mxu0 0.0
        %2535 = vmatpush1.msra.mxu0 0.0
        %2536 = vmatprep.subr.mxu0 0.0
        %2537 = vmatpush1.msra.mxu0 0.0
        %2538 = vmatprep.subr.mxu0 0.0
        %2539 = vmatpush1.msra.mxu0 0.0
        %2540 = vmatprep.subr.mxu0 0.0
        %2541 = vmatpush1.msra.mxu0 0.0
        %2542 = vmatprep.subr.mxu0 0.0
        %2543 = vmatpush1.msra.mxu0 0.0
        %2544 = vmatprep.subr.mxu0 0.0
        %2545 = vmatpush1.msra.mxu0 0.0
        %2546 = vmatprep.subr.mxu0 0.0
        %2547 = vmatpush1.msra.mxu0 0.0
        %2548 = vmatprep.subr.mxu0 0.0
        %2549 = vmatpush1.msra.mxu0 0.0
        %2550 = vmatprep.subr.mxu0 0.0
        %2551 = vmatpush1.msra.mxu0 0.0
        %2552 = vmatprep.subr.mxu0 0.0
        %2553 = vmatpush1.msra.mxu0 0.0
        %2554 = vmatprep.subr.mxu0 0.0
        %2555 = vmatpush1.msra.mxu0 0.0
        %2556 = vmatprep.subr.mxu0 0.0
        %2557 = vmatpush1.msra.mxu0 0.0
        %2558 = vmatprep.mubr.f32.mxu0 0.0
        %2559 = vmatmul.mubr.f32.gmra.mrb[0].mxu0 %v2489
        %v2560 = vpop.f32.mrb[0].mxu0
        %v2561 = vadd.f32 %v2486, %v2560
        %v2562 = vpop.f32.mrb[0].mxu0
        %2563 = vmatprep.mubr.f32.mxu0 0.0
        %2564 = vmatmul.mubr.f32.gmra.mrb[0].mxu0 %v2492
        %v2565 = vpop.f32.mrb[0].mxu0
        %v2566 = vadd.f32 %v2486, %v2565
        %v2567 = vpop.f32.mrb[0].mxu0
        %2568 = vdwg.mxu0
        %v2569 = vmax.f32 %v2561, 0.0
        %v2570 = vmax.f32 %v2566, 0.0
        %v2571 = vadd.f32 %v2292, %v2569
        %v2572 = vadd.f32 %v2293, %v2570
        %v2573 = vlaneseq
        %v2574 = vshrl.u32 %v2573, 7
        %v2575 = vsub.s32 0, %v2574
        %v2576 = vrot.slane %v2295, %v2575
        %v2577 = vmul.f32 %v2571, %v2576
        %v2578 = vmul.f32 %v2572, %v2576
        %v2579 = vlaneseq
        %v2580 = vshrl.u32 %v2579, 7
        %v2581 = vsub.s32 1, %v2580
        %v2582 = vrot.slane %v2295, %v2581
        %v2583 = vadd.f32 %v2577, %v2582
        %v2584 = vadd.f32 %v2578, %v2582
        %v2585 = vsel %vm585, %v2583, 0.0
        %v2586 = vsel %vm585, %v2584, 0.0
        %2587 = vst [vmem:[%s530] sm:$0xff] %v2585
        %2588 = vst [vmem:[%s530 + $0x8] sm:$0xff] %v2586
        %s2589 = sand.u32 %s313, 1
        %s2590 = scalar_lea.sflag [#allocation4], %s2589
        %s2591 = sand.u32 %s313, 1
        %s2592 = smul.addr %s2591, 16
        %s2593 = scalar_lea.vmem [#allocation10], %s2592
        // Predicated region
        $region85: #{hetero_dynamic_gnn_forward.1} parent=67 // pred_check
          %p2594 = pneg %p323
        $region86: #{hetero_dynamic_gnn_forward.1} parent=67 // pred_check_branch
          %2596 = sbr.rel (%p2594) target = $region88
        $region87: #{hetero_dynamic_gnn_forward.1} parent=67 // pred_region
          %s2598 = ssub.s32 256, 256
          %2599 = vsyncadd %s2590, %s2598
          %s2600 = smul.addr %s33, 2
          %s2601 = smul.addr %s2600, 128
          %s2602 = scalar_lea.hbm %s12, %s2601
          %s2603 = sshll.u32 %s2593, 4
          %s2604 = int_to_ptr.vmem [resolvable:$true] %s2603
          %2609 = dma.vmem_to_hbm [thread:$0]  %s2604, 256, %s2602, %s2590, 128, 128, 8
        $region88: #{hetero_dynamic_gnn_forward.1} parent=67 // pred_fallthru
          _
      $region68: #{hetero_dynamic_gnn_forward.1} parent=5 // pred_fallthru
        _
      %p2610 = scmp.le.s32.totalorder 2, %s28
      // Predicated region
      $region89: #{hetero_dynamic_gnn_forward.1} parent=5 // pred_check
        %p2611 = pneg %p2610
      $region90: #{hetero_dynamic_gnn_forward.1} parent=5 // pred_check_branch
        %2613 = sbr.rel (%p2611) target = $region92
      $region91: #{hetero_dynamic_gnn_forward.1} parent=5 // pred_region
        %s2614 = ssub.s32 %s28, 2
        // Predicated region
        $region93: #{hetero_dynamic_gnn_forward.1} parent=91 // pred_check
          %p2615 = pneg %p329
        $region94: #{hetero_dynamic_gnn_forward.1} parent=91 // pred_check_branch
          %2617 = sbr.rel (%p2615) target = $region96
        $region95: #{hetero_dynamic_gnn_forward.1} parent=91 // pred_region
          %s2618 = sand.u32 %s314, 1
          %s2619 = scalar_lea.sflag [#allocation4], %s2618
          %s2620 = sand.u32 %s314, 1
          %s2621 = smul.addr %s2620, 16
          %s2622 = scalar_lea.vmem [#allocation10], %s2621
          %2623 = dma.done %s2619, 256
        $region96: #{hetero_dynamic_gnn_forward.1} parent=91 // pred_fallthru
          _
      $region92: #{hetero_dynamic_gnn_forward.1} parent=5 // pred_fallthru
        _
    $region6: #{hetero_dynamic_gnn_forward.1} parent=1 // loop_footer
      %s32 = sadd.s32 1, %s28
    $region7: #{hetero_dynamic_gnn_forward.1} parent=1 // loop_footer_branch
      %27 = sbr.rel target = $region3
    $region8: #{hetero_dynamic_gnn_forward.1} parent=1 // loop_exit
      _
    %2624 = vsyncpa [#allocation3], 1
    %s2625 = scalar_lea.sflag [#allocation3], 1
    %2626 = vsyncpa %s2625, 1
    %2627 = vsyncpa [#allocation6], 1
    %s2628 = scalar_lea.sflag [#allocation6], 1
    %2629 = vsyncpa %s2628, 1
    %2630 = vsyncpa [#allocation9], 1
    %s2631 = scalar_lea.sflag [#allocation9], 1
    %2632 = vsyncpa %s2631, 1
    %2633 = vsyncpa [#allocation4], 1
    %s2634 = scalar_lea.sflag [#allocation4], 1
    %2635 = vsyncpa %s2634, 1

</llo_original>
